<compile_context>
chip_gen: v7x
topology: tpu7x:2x2x1
jax: 0.10.0
libtpu: 0.0.40
codegen_flags: <defaults>
</compile_context>

<pallas_src>
import functools

import jax
import jax.numpy as jnp
from jax.experimental import pallas as pl
from jax.experimental.pallas import tpu as pltpu

HEADS = 6
LN_EPS = 1e-5


def _round_up(x, m):
    return ((x + m - 1) // m) * m


# ----------------------------------------------------------------------------
# Pallas kernel: one batch tile (n_seq sequences), one transformer block
# ----------------------------------------------------------------------------
def encoder_block_kernel(xw_ref,
                         wq_ref, wk_ref, wv_ref, wu_ref, bu_ref,
                         g1_ref, be1_ref, w1_ref, bf1_ref, w2_ref, bf2_ref,
                         g2_ref, be2_ref, out_ref, *, e_true, n_seq, t_len, s_head):
    R, Ep = xw_ref.shape            # R = n_seq * t_len rows, Ep = 128-padded feature width
    Hp = Ep // s_head               # padded head count (zero-weight heads are exact no-ops)
    G = n_seq * Hp                  # attention batch: (sequence, head)

    xw = xw_ref[...]                # (R, Ep) f32 residual stream (padded lanes are zero)
    xb = xw.astype(jnp.bfloat16)    # MXU feed only

    feat_mask = (jax.lax.broadcasted_iota(jnp.int32, (1, Ep), 1) < e_true).astype(jnp.float32)
    inv_e = 1.0 / float(e_true)

    def layernorm(y, g, b):
        # mask first so any non-zero padded lane can never corrupt mean/var
        y = y * feat_mask
        mu = jnp.sum(y, axis=-1, keepdims=True) * inv_e
        d = (y - mu) * feat_mask
        var = jnp.sum(d * d, axis=-1, keepdims=True) * inv_e
        return d * jax.lax.rsqrt(var + LN_EPS) * g + b

    # --- lane-dense block-diagonal QKV (contraction = Ep); q/k scale folded into weights ---
    q = jnp.dot(xb, wq_ref[...], preferred_element_type=jnp.float32)   # (R, Ep)
    k = jnp.dot(xb, wk_ref[...], preferred_element_type=jnp.float32)
    v = jnp.dot(xb, wv_ref[...], preferred_element_type=jnp.float32)

    # head-major (G, s, T) views: minor-2 transpose (XLU) + tile-aligned reshapes only
    def to_heads(a):                                       # (R, Ep) -> (G, s, T)
        a = a.reshape(n_seq, t_len, Ep)                    # leading split of the row axis
        a = jnp.swapaxes(a, 1, 2)                          # (n_seq, Ep, T)
        return a.reshape(G, s_head, t_len)                 # split sublane dim Ep -> (Hp, s)

    qh = to_heads(q).astype(jnp.bfloat16)
    kh = to_heads(k).astype(jnp.bfloat16)
    vh = to_heads(v).astype(jnp.bfloat16)

    # --- per-sequence, per-head attention: no cross-sequence mask needed at all ---
    logits = jax.lax.dot_general(qh, kh, (((1,), (1,)), ((0,), (0,))),
                                 preferred_element_type=jnp.float32)    # (G, T, T)
    m = jnp.max(logits, axis=-1, keepdims=True)
    e = jnp.exp(logits - m)
    p = e * pl.reciprocal(jnp.sum(e, axis=-1, keepdims=True), approx=True)  # EUP recip
    # NOTE: approx recip adds ~1e-3 relative error; use approx=False for tighter numerics.

    oT = jax.lax.dot_general(vh, p.astype(jnp.bfloat16), (((2,), (2,)), ((0,), (0,))),
                             preferred_element_type=jnp.float32)         # (G, s, T)
    o_wide = jnp.swapaxes(oT.reshape(n_seq, Ep, t_len), 1, 2).reshape(R, Ep)

    # --- unify heads fused into ONE lane-dense contraction (head sum inside MXU accum) ---
    att = jnp.dot(o_wide.astype(jnp.bfloat16), wu_ref[...],
                  preferred_element_type=jnp.float32) + bu_ref[...]      # (R, Ep)

    # residual + LayerNorm 1
    x1 = layernorm(att + xw, g1_ref[...], be1_ref[...])

    # feed-forward: Linear(E, 4E) -> ReLU -> Linear(4E, E)  (lane-dense 128/256 matmuls)
    hdn = jnp.dot(x1.astype(jnp.bfloat16), w1_ref[...],
                  preferred_element_type=jnp.float32) + bf1_ref[...]
    hdn = jnp.maximum(hdn, 0.0)
    ff = jnp.dot(hdn.astype(jnp.bfloat16), w2_ref[...],
                 preferred_element_type=jnp.float32) + bf2_ref[...]

    # residual + LayerNorm 2 -> unmasked lane-dense store
    out_ref[...] = layernorm(ff + x1, g2_ref[...], be2_ref[...])


# ----------------------------------------------------------------------------
# Wrapper
# ----------------------------------------------------------------------------
def _pad_row(v, cols):
    out = jnp.zeros((1, cols), jnp.float32)
    return out.at[0, : v.shape[0]].set(v.astype(jnp.float32))


def encoder_forward(seq, embed_table, pos_table, params, batch_block=None):
    """seq: (B, T) int32. Returns (hidden, embedding) like data.hidden / data.embedding."""
    B, T = seq.shape
    E = embed_table.shape[1]
    assert E % HEADS == 0
    S = E // HEADS
    F = params["w1"].shape[1]
    Ep = _round_up(E, 128)
    Fp = _round_up(F, 128)
    assert Ep % S == 0, "head size must divide the padded feature width"
    bf16 = jnp.bfloat16

    if batch_block is None:
        # target ~512 rows per grid step (near HBM roofline on v6e) while keeping >= 2
        # grid steps when B >= 2 so both v7x TensorCores get work.
        bb = max(1, min(512 // T if T <= 512 else 1, B // 2 if B >= 2 else 1))
        while B % bb:
            bb -= 1
        batch_block = bb
    assert B % batch_block == 0
    R = batch_block * T
    assert R % 8 == 0 or batch_block == B, "rows per grid step must be a multiple of 8"

    # --- XLA glue: embedding lookup (padding_idx=0 row is zero in the table) + positions ---
    # TODO(synk): at production sizes do the gather + position add in-kernel (pl.Element row
    # gather via scalar prefetch) and skip the padded x_wide copy / final [:, :, :E] slice.
    embedding = embed_table[seq]                                   # (B, T, E) == data.embedding
    x = embedding + pos_table[None, :T, :]                         # (B, T, E)
    x_wide = jnp.zeros((B * T, Ep), jnp.float32).at[:, :E].set(x.reshape(B * T, E))

    # parameters: shared (s,s) head projection -> lane-dense block-diagonal (Ep,Ep) bf16;
    # former's q/k emb**-0.25 scaling folded into Wq/Wk; biases / LN params stay f32.
    scale = float(E) ** -0.25

    def block_diag(w):
        bd = jnp.zeros((Ep, Ep), jnp.float32)
        for h in range(HEADS):
            bd = bd.at[h * S:(h + 1) * S, h * S:(h + 1) * S].set(w.astype(jnp.float32))
        return bd

    wq_bd = (block_diag(params["wq"]) * scale).astype(bf16)
    wk_bd = (block_diag(params["wk"]) * scale).astype(bf16)
    wv_bd = block_diag(params["wv"]).astype(bf16)
    wu_p = jnp.zeros((Ep, Ep), bf16).at[:E, :E].set(params["wu"].astype(bf16))
    w1_p = jnp.zeros((Ep, Fp), bf16).at[:E, :F].set(params["w1"].astype(bf16))
    w2_p = jnp.zeros((Fp, Ep), bf16).at[:F, :E].set(params["w2"].astype(bf16))
    bu_p, bf1_p, bf2_p = _pad_row(params["bu"], Ep), _pad_row(params["bf1"], Fp), _pad_row(params["bf2"], Ep)
    g1_p, be1_p = _pad_row(params["g1"], Ep), _pad_row(params["be1"], Ep)
    g2_p, be2_p = _pad_row(params["g2"], Ep), _pad_row(params["be2"], Ep)

    kernel = functools.partial(encoder_block_kernel,
                               e_true=E, n_seq=batch_block, t_len=T, s_head=S)
    const2 = lambda i: (0, 0)

    out = pl.pallas_call(
        kernel,
        out_shape=jax.ShapeDtypeStruct((B * T, Ep), jnp.float32),
        grid_spec=pltpu.PrefetchScalarGridSpec(
            num_scalar_prefetch=0,
            grid=(B // batch_block,),                      # >= 2 steps; batch tiles independent
            in_specs=[
                pl.BlockSpec((R, Ep), lambda i: (i, 0)),   # activations (only per-step varying input)
                pl.BlockSpec((Ep, Ep), const2),            # Wq block-diag (scale folded)
                pl.BlockSpec((Ep, Ep), const2),            # Wk block-diag (scale folded)
                pl.BlockSpec((Ep, Ep), const2),            # Wv block-diag
                pl.BlockSpec((Ep, Ep), const2),            # unify-heads weight
                pl.BlockSpec((1, Ep), const2),             # unify bias
                pl.BlockSpec((1, Ep), const2),             # LN1 gamma
                pl.BlockSpec((1, Ep), const2),             # LN1 beta
                pl.BlockSpec((Ep, Fp), const2),            # FF W1
                pl.BlockSpec((1, Fp), const2),             # FF b1
                pl.BlockSpec((Fp, Ep), const2),            # FF W2
                pl.BlockSpec((1, Ep), const2),             # FF b2
                pl.BlockSpec((1, Ep), const2),             # LN2 gamma
                pl.BlockSpec((1, Ep), const2),             # LN2 beta
            ],
            out_specs=pl.BlockSpec((R, Ep), lambda i: (i, 0)),
        ),
        compiler_params=pltpu.CompilerParams(
            dimension_semantics=("parallel",),
            vmem_limit_bytes=32 * 1024 * 1024),            # raise per-generation for bigger tiles
    )(x_wide, wq_bd, wk_bd, wv_bd, wu_p, bu_p,
      g1_p, be1_p, w1_p, bf1_p, w2_p, bf2_p, g2_p, be2_p)

    hidden = out.reshape(B, T, Ep)[:, :, :E]
    return hidden, embedding


# ----------------------------------------------------------------------------
# Pure-JAX reference (mirrors the torch/former forward) for a correctness check
# ----------------------------------------------------------------------------
def reference_forward(seq, embed_table, pos_table, params):
    emb = embed_table[seq]                                          # (B,T,E)
    x = emb + pos_table[None]
    B, T, E = x.shape
    h, s = HEADS, E // HEADS

    xh = x.reshape(B, T, h, s)
    q = xh @ params["wq"]                                           # shared (s,s) per head
    k = xh @ params["wk"]
    v = xh @ params["wv"]
    logits = jnp.einsum("bthd,buhd->bhtu", q, k) / jnp.sqrt(jnp.float32(E))
    p = jax.nn.softmax(logits, axis=-1)
    att = jnp.einsum("bhtu,buhd->bthd", p, v).reshape(B, T, E)
    att = att @ params["wu"] + params["bu"]

    def ln(y, g, b):
        mu = jnp.mean(y, axis=-1, keepdims=True)
        var = jnp.mean((y - mu) ** 2, axis=-1, keepdims=True)
        return (y - mu) * jax.lax.rsqrt(var + LN_EPS) * g + b

    x1 = ln(att + x, params["g1"], params["be1"])
    ff = jnp.maximum(x1 @ params["w1"] + params["bf1"], 0.0) @ params["w2"] + params["bf2"]
    return ln(ff + x1, params["g2"], params["be2"]), emb


# ----------------------------------------------------------------------------
# Deterministic parameter construction
# ----------------------------------------------------------------------------
def make_params(key, vocab_size, embed_size, seq_len):
    E = embed_size
    s = E // HEADS
    F = 4 * E                                                       # ff_hidden_mult = 4
    ks = jax.random.split(key, 12)

    embed_table = jax.random.normal(ks[0], (vocab_size, E), jnp.float32) * 0.5
    embed_table = embed_table.at[0].set(0.0)                        # padding_idx=0
    pos_table = jax.random.normal(ks[1], (seq_len, E), jnp.float32) * 0.5

    params = dict(
        wq=jax.random.normal(ks[2], (s, s), jnp.float32) * 0.3,     # shared across heads (narrow attn)
        wk=jax.random.normal(ks[3], (s, s), jnp.float32) * 0.3,
        wv=jax.random.normal(ks[4], (s, s), jnp.float32) * 0.3,
        wu=jax.random.normal(ks[5], (E, E), jnp.float32) * 0.1,
        bu=jax.random.normal(ks[6], (E,), jnp.float32) * 0.05,
        g1=jnp.ones((E,), jnp.float32),
        be1=jnp.zeros((E,), jnp.float32),
        w1=jax.random.normal(ks[7], (E, F), jnp.float32) * 0.1,
        bf1=jax.random.normal(ks[8], (F,), jnp.float32) * 0.05,
        w2=jax.random.normal(ks[9], (F, E), jnp.float32) * 0.1,
        bf2=jax.random.normal(ks[10], (E,), jnp.float32) * 0.05,
        g2=jnp.ones((E,), jnp.float32),
        be2=jnp.zeros((E,), jnp.float32),
    )
    return embed_table, pos_table, params


if __name__ == "__main__":
    B, T = 2, 8
    VOCAB, EMBED, HIDDEN = 20, 48, 32      # embed_size divisible by heads=6

    key = jax.random.PRNGKey(0)
    k_tok, k_par = jax.random.split(key)

    seq = jax.random.randint(k_tok, (B, T), 0, VOCAB, dtype=jnp.int32)
    seq = seq.at[:, -1].set(0)             # exercise padding_idx=0

    embed_table, pos_table, params = make_params(k_par, VOCAB, EMBED, T)

    hidden, embedding = encoder_forward(seq, embed_table, pos_table, params)
    hidden = jax.block_until_ready(hidden)
    embedding = jax.block_until_ready(embedding)

    ref_hidden, ref_emb = reference_forward(seq, embed_table, pos_table, params)
    assert hidden.shape == (B, T, EMBED) and embedding.shape == (B, T, EMBED)
    # kernel feeds the MXU bf16 operands (f32 accumulation) -> compare at bf16-level tolerance
    assert jnp.allclose(hidden, ref_hidden, rtol=3e-2, atol=3e-2), "mismatch vs reference"
    assert jnp.allclose(embedding, ref_emb), "embedding mismatch"

    print("KERNEL_OK")
</pallas_src>

<mosaic_0001>
module attributes {stable_mosaic.version = 11 : i64} {
  func.func @encoder_block_kernel(%arg0: i32, %arg1: memref<8x128xf32, #tpu.memory_space<vmem>>, %arg2: memref<128x128xbf16, #tpu.memory_space<vmem>>, %arg3: memref<128x128xbf16, #tpu.memory_space<vmem>>, %arg4: memref<128x128xbf16, #tpu.memory_space<vmem>>, %arg5: memref<128x128xbf16, #tpu.memory_space<vmem>>, %arg6: memref<1x128xf32, #tpu.memory_space<vmem>>, %arg7: memref<1x128xf32, #tpu.memory_space<vmem>>, %arg8: memref<1x128xf32, #tpu.memory_space<vmem>>, %arg9: memref<128x256xbf16, #tpu.memory_space<vmem>>, %arg10: memref<1x256xf32, #tpu.memory_space<vmem>>, %arg11: memref<256x128xbf16, #tpu.memory_space<vmem>>, %arg12: memref<1x128xf32, #tpu.memory_space<vmem>>, %arg13: memref<1x128xf32, #tpu.memory_space<vmem>>, %arg14: memref<1x128xf32, #tpu.memory_space<vmem>>, %arg15: memref<8x128xf32, #tpu.memory_space<vmem>>) attributes {dimension_semantics = [#tpu.dimension_semantics<parallel>], iteration_bounds = array<i64: 2>, scalar_prefetch = 0 : i64, scratch_operands = 0 : i64, tpu.core_type = #tpu.core_type<tc>, window_params = [{transform_indices = @transform_0, window_bounds = array<i64: 8, 128>}, {pipeline_mode = #tpu.pipeline_mode<synchronous>, transform_indices = @transform_1, window_bounds = array<i64: 128, 128>}, {pipeline_mode = #tpu.pipeline_mode<synchronous>, transform_indices = @transform_2, window_bounds = array<i64: 128, 128>}, {pipeline_mode = #tpu.pipeline_mode<synchronous>, transform_indices = @transform_3, window_bounds = array<i64: 128, 128>}, {pipeline_mode = #tpu.pipeline_mode<synchronous>, transform_indices = @transform_4, window_bounds = array<i64: 128, 128>}, {pipeline_mode = #tpu.pipeline_mode<synchronous>, transform_indices = @transform_5, window_bounds = array<i64: 1, 128>}, {pipeline_mode = #tpu.pipeline_mode<synchronous>, transform_indices = @transform_6, window_bounds = array<i64: 1, 128>}, {pipeline_mode = #tpu.pipeline_mode<synchronous>, transform_indices = @transform_7, window_bounds = array<i64: 1, 128>}, {pipeline_mode = #tpu.pipeline_mode<synchronous>, transform_indices = @transform_8, window_bounds = array<i64: 128, 256>}, {pipeline_mode = #tpu.pipeline_mode<synchronous>, transform_indices = @transform_9, window_bounds = array<i64: 1, 256>}, {pipeline_mode = #tpu.pipeline_mode<synchronous>, transform_indices = @transform_10, window_bounds = array<i64: 256, 128>}, {pipeline_mode = #tpu.pipeline_mode<synchronous>, transform_indices = @transform_11, window_bounds = array<i64: 1, 128>}, {pipeline_mode = #tpu.pipeline_mode<synchronous>, transform_indices = @transform_12, window_bounds = array<i64: 1, 128>}, {pipeline_mode = #tpu.pipeline_mode<synchronous>, transform_indices = @transform_13, window_bounds = array<i64: 1, 128>}, {transform_indices = @transform_14, window_bounds = array<i64: 8, 128>}]} {
    %c0 = arith.constant 0 : index
    %c0_0 = arith.constant 0 : index
    %0 = vector.load %arg1[%c0, %c0_0] : memref<8x128xf32, #tpu.memory_space<vmem>>, vector<8x128xf32>
    %1 = arith.truncf %0 : vector<8x128xf32> to vector<8x128xbf16>
    %2 = tpu.iota {dimensions = array<i32: 1>} : vector<1x128xi32>
    %c48_i32 = arith.constant 48 : i32
    %3 = vector.broadcast %c48_i32 : i32 to vector<1x128xi32>
    %4 = arith.cmpi slt, %2, %3 : vector<1x128xi32>
    %5 = arith.extui %4 : vector<1x128xi1> to vector<1x128xi32>
    %6 = arith.sitofp %5 : vector<1x128xi32> to vector<1x128xf32>
    %c0_1 = arith.constant 0 : index
    %c0_2 = arith.constant 0 : index
    %7 = vector.load %arg2[%c0_1, %c0_2] : memref<128x128xbf16, #tpu.memory_space<vmem>>, vector<128x128xbf16>
    %cst = arith.constant dense<0.000000e+00> : vector<8x128xf32>
    %8 = tpu.matmul %1, %7, %cst {dimension_numbers = #tpu.dot_dimension_numbers<[1], [0], [0], [1], [0, 0, 1, 1], [], []>} : vector<8x128xbf16>, vector<128x128xbf16>, vector<8x128xf32> -> vector<8x128xf32>
    %c0_3 = arith.constant 0 : index
    %c0_4 = arith.constant 0 : index
    %9 = vector.load %arg3[%c0_3, %c0_4] : memref<128x128xbf16, #tpu.memory_space<vmem>>, vector<128x128xbf16>
    %cst_5 = arith.constant dense<0.000000e+00> : vector<8x128xf32>
    %10 = tpu.matmul %1, %9, %cst_5 {dimension_numbers = #tpu.dot_dimension_numbers<[1], [0], [0], [1], [0, 0, 1, 1], [], []>} : vector<8x128xbf16>, vector<128x128xbf16>, vector<8x128xf32> -> vector<8x128xf32>
    %c0_6 = arith.constant 0 : index
    %c0_7 = arith.constant 0 : index
    %11 = vector.load %arg4[%c0_6, %c0_7] : memref<128x128xbf16, #tpu.memory_space<vmem>>, vector<128x128xbf16>
    %cst_8 = arith.constant dense<0.000000e+00> : vector<8x128xf32>
    %12 = tpu.matmul %1, %11, %cst_8 {dimension_numbers = #tpu.dot_dimension_numbers<[1], [0], [0], [1], [0, 0, 1, 1], [], []>} : vector<8x128xbf16>, vector<128x128xbf16>, vector<8x128xf32> -> vector<8x128xf32>
    %13 = vector.shape_cast %8 : vector<8x128xf32> to vector<1x8x128xf32>
    %14 = tpu.transpose %13, [0, 2, 1] : vector<1x8x128xf32> -> vector<1x128x8xf32>
    %15 = vector.shape_cast %14 : vector<1x128x8xf32> to vector<16x8x8xf32>
    %16 = arith.truncf %15 : vector<16x8x8xf32> to vector<16x8x8xbf16>
    %17 = vector.shape_cast %10 : vector<8x128xf32> to vector<1x8x128xf32>
    %18 = tpu.transpose %17, [0, 2, 1] : vector<1x8x128xf32> -> vector<1x128x8xf32>
    %19 = vector.shape_cast %18 : vector<1x128x8xf32> to vector<16x8x8xf32>
    %20 = arith.truncf %19 : vector<16x8x8xf32> to vector<16x8x8xbf16>
    %21 = vector.shape_cast %12 : vector<8x128xf32> to vector<1x8x128xf32>
    %22 = tpu.transpose %21, [0, 2, 1] : vector<1x8x128xf32> -> vector<1x128x8xf32>
    %23 = vector.shape_cast %22 : vector<1x128x8xf32> to vector<16x8x8xf32>
    %24 = arith.truncf %23 : vector<16x8x8xf32> to vector<16x8x8xbf16>
    %cst_9 = arith.constant dense<0.000000e+00> : vector<16x8x8xf32>
    %25 = tpu.matmul %16, %20, %cst_9 {dimension_numbers = #tpu.dot_dimension_numbers<[1], [1], [2], [2], [0, 0, 0, 2, 1, 2], [0], [0]>} : vector<16x8x8xbf16>, vector<16x8x8xbf16>, vector<16x8x8xf32> -> vector<16x8x8xf32>
    %cst_10 = arith.constant dense<0xFF800000> : vector<16x8xf32>
    %26 = vector.multi_reduction <maximumf>, %25, %cst_10 [2] : vector<16x8x8xf32> to vector<16x8xf32>
    %27 = vector.shape_cast %26 : vector<16x8xf32> to vector<16x8x1xf32>
    %28 = vector.broadcast %27 : vector<16x8x1xf32> to vector<16x8x8xf32>
    %29 = arith.subf %25, %28 : vector<16x8x8xf32>
    %30 = math.exp %29 : vector<16x8x8xf32>
    %cst_11 = arith.constant dense<0.000000e+00> : vector<16x8xf32>
    %31 = vector.multi_reduction <add>, %30, %cst_11 [2] : vector<16x8x8xf32> to vector<16x8xf32>
    %32 = vector.shape_cast %31 : vector<16x8xf32> to vector<16x8x1xf32>
    %33 = tpu.reciprocal %32 {approx = true} : vector<16x8x1xf32> -> vector<16x8x1xf32>
    %34 = vector.broadcast %33 : vector<16x8x1xf32> to vector<16x8x8xf32>
    %35 = arith.mulf %30, %34 : vector<16x8x8xf32>
    %36 = arith.truncf %35 : vector<16x8x8xf32> to vector<16x8x8xbf16>
    %cst_12 = arith.constant dense<0.000000e+00> : vector<16x8x8xf32>
    %37 = tpu.matmul %24, %36, %cst_12 {dimension_numbers = #tpu.dot_dimension_numbers<[2], [2], [1], [1], [0, 0, 0, 1, 1, 1], [0], [0]>} : vector<16x8x8xbf16>, vector<16x8x8xbf16>, vector<16x8x8xf32> -> vector<16x8x8xf32>
    %38 = vector.shape_cast %37 : vector<16x8x8xf32> to vector<1x128x8xf32>
    %39 = tpu.transpose %38, [0, 2, 1] : vector<1x128x8xf32> -> vector<1x8x128xf32>
    %40 = vector.shape_cast %39 : vector<1x8x128xf32> to vector<8x128xf32>
    %41 = arith.truncf %40 : vector<8x128xf32> to vector<8x128xbf16>
    %c0_13 = arith.constant 0 : index
    %c0_14 = arith.constant 0 : index
    %42 = vector.load %arg5[%c0_13, %c0_14] : memref<128x128xbf16, #tpu.memory_space<vmem>>, vector<128x128xbf16>
    %cst_15 = arith.constant dense<0.000000e+00> : vector<8x128xf32>
    %43 = tpu.matmul %41, %42, %cst_15 {dimension_numbers = #tpu.dot_dimension_numbers<[1], [0], [0], [1], [0, 0, 1, 1], [], []>} : vector<8x128xbf16>, vector<128x128xbf16>, vector<8x128xf32> -> vector<8x128xf32>
    %c0_16 = arith.constant 0 : index
    %c0_17 = arith.constant 0 : index
    %44 = vector.load %arg6[%c0_16, %c0_17] : memref<1x128xf32, #tpu.memory_space<vmem>>, vector<1x128xf32>
    %45 = vector.broadcast %44 : vector<1x128xf32> to vector<8x128xf32>
    %46 = arith.addf %43, %45 : vector<8x128xf32>
    %47 = arith.addf %46, %0 : vector<8x128xf32>
    %c0_18 = arith.constant 0 : index
    %c0_19 = arith.constant 0 : index
    %48 = vector.load %arg7[%c0_18, %c0_19] : memref<1x128xf32, #tpu.memory_space<vmem>>, vector<1x128xf32>
    %c0_20 = arith.constant 0 : index
    %c0_21 = arith.constant 0 : index
    %49 = vector.load %arg8[%c0_20, %c0_21] : memref<1x128xf32, #tpu.memory_space<vmem>>, vector<1x128xf32>
    %50 = vector.broadcast %6 : vector<1x128xf32> to vector<8x128xf32>
    %51 = arith.mulf %47, %50 : vector<8x128xf32>
    %cst_22 = arith.constant dense<0.000000e+00> : vector<8xf32>
    %52 = vector.multi_reduction <add>, %51, %cst_22 [1] : vector<8x128xf32> to vector<8xf32>
    %53 = vector.shape_cast %52 : vector<8xf32> to vector<8x1xf32>
    %cst_23 = arith.constant 0.020833334 : f32
    %54 = vector.broadcast %cst_23 : f32 to vector<8x1xf32>
    %55 = arith.mulf %53, %54 : vector<8x1xf32>
    %56 = vector.broadcast %55 : vector<8x1xf32> to vector<8x128xf32>
    %57 = arith.subf %51, %56 : vector<8x128xf32>
    %58 = vector.broadcast %6 : vector<1x128xf32> to vector<8x128xf32>
    %59 = arith.mulf %57, %58 : vector<8x128xf32>
    %60 = arith.mulf %59, %59 : vector<8x128xf32>
    %cst_24 = arith.constant dense<0.000000e+00> : vector<8xf32>
    %61 = vector.multi_reduction <add>, %60, %cst_24 [1] : vector<8x128xf32> to vector<8xf32>
    %62 = vector.shape_cast %61 : vector<8xf32> to vector<8x1xf32>
    %cst_25 = arith.constant 0.020833334 : f32
    %63 = vector.broadcast %cst_25 : f32 to vector<8x1xf32>
    %64 = arith.mulf %62, %63 : vector<8x1xf32>
    %cst_26 = arith.constant 9.99999974E-6 : f32
    %65 = vector.broadcast %cst_26 : f32 to vector<8x1xf32>
    %66 = arith.addf %64, %65 : vector<8x1xf32>
    %67 = math.rsqrt %66 : vector<8x1xf32>
    %68 = vector.broadcast %67 : vector<8x1xf32> to vector<8x128xf32>
    %69 = arith.mulf %59, %68 : vector<8x128xf32>
    %70 = vector.broadcast %48 : vector<1x128xf32> to vector<8x128xf32>
    %71 = arith.mulf %69, %70 : vector<8x128xf32>
    %72 = vector.broadcast %49 : vector<1x128xf32> to vector<8x128xf32>
    %73 = arith.addf %71, %72 : vector<8x128xf32>
    %74 = arith.truncf %73 : vector<8x128xf32> to vector<8x128xbf16>
    %c0_27 = arith.constant 0 : index
    %c0_28 = arith.constant 0 : index
    %75 = vector.load %arg9[%c0_27, %c0_28] : memref<128x256xbf16, #tpu.memory_space<vmem>>, vector<128x256xbf16>
    %cst_29 = arith.constant dense<0.000000e+00> : vector<8x256xf32>
    %76 = tpu.matmul %74, %75, %cst_29 {dimension_numbers = #tpu.dot_dimension_numbers<[1], [0], [0], [1], [0, 0, 1, 1], [], []>} : vector<8x128xbf16>, vector<128x256xbf16>, vector<8x256xf32> -> vector<8x256xf32>
    %c0_30 = arith.constant 0 : index
    %c0_31 = arith.constant 0 : index
    %77 = vector.load %arg10[%c0_30, %c0_31] : memref<1x256xf32, #tpu.memory_space<vmem>>, vector<1x256xf32>
    %78 = vector.broadcast %77 : vector<1x256xf32> to vector<8x256xf32>
    %79 = arith.addf %76, %78 : vector<8x256xf32>
    %cst_32 = arith.constant 0.000000e+00 : f32
    %80 = vector.broadcast %cst_32 : f32 to vector<8x256xf32>
    %81 = arith.maximumf %79, %80 : vector<8x256xf32>
    %82 = arith.truncf %81 : vector<8x256xf32> to vector<8x256xbf16>
    %c0_33 = arith.constant 0 : index
    %c0_34 = arith.constant 0 : index
    %83 = vector.load %arg11[%c0_33, %c0_34] : memref<256x128xbf16, #tpu.memory_space<vmem>>, vector<256x128xbf16>
    %cst_35 = arith.constant dense<0.000000e+00> : vector<8x128xf32>
    %84 = tpu.matmul %82, %83, %cst_35 {dimension_numbers = #tpu.dot_dimension_numbers<[1], [0], [0], [1], [0, 0, 1, 1], [], []>} : vector<8x256xbf16>, vector<256x128xbf16>, vector<8x128xf32> -> vector<8x128xf32>
    %c0_36 = arith.constant 0 : index
    %c0_37 = arith.constant 0 : index
    %85 = vector.load %arg12[%c0_36, %c0_37] : memref<1x128xf32, #tpu.memory_space<vmem>>, vector<1x128xf32>
    %86 = vector.broadcast %85 : vector<1x128xf32> to vector<8x128xf32>
    %87 = arith.addf %84, %86 : vector<8x128xf32>
    %88 = arith.addf %87, %73 : vector<8x128xf32>
    %c0_38 = arith.constant 0 : index
    %c0_39 = arith.constant 0 : index
    %89 = vector.load %arg13[%c0_38, %c0_39] : memref<1x128xf32, #tpu.memory_space<vmem>>, vector<1x128xf32>
    %c0_40 = arith.constant 0 : index
    %c0_41 = arith.constant 0 : index
    %90 = vector.load %arg14[%c0_40, %c0_41] : memref<1x128xf32, #tpu.memory_space<vmem>>, vector<1x128xf32>
    %91 = vector.broadcast %6 : vector<1x128xf32> to vector<8x128xf32>
    %92 = arith.mulf %88, %91 : vector<8x128xf32>
    %cst_42 = arith.constant dense<0.000000e+00> : vector<8xf32>
    %93 = vector.multi_reduction <add>, %92, %cst_42 [1] : vector<8x128xf32> to vector<8xf32>
    %94 = vector.shape_cast %93 : vector<8xf32> to vector<8x1xf32>
    %cst_43 = arith.constant 0.020833334 : f32
    %95 = vector.broadcast %cst_43 : f32 to vector<8x1xf32>
    %96 = arith.mulf %94, %95 : vector<8x1xf32>
    %97 = vector.broadcast %96 : vector<8x1xf32> to vector<8x128xf32>
    %98 = arith.subf %92, %97 : vector<8x128xf32>
    %99 = vector.broadcast %6 : vector<1x128xf32> to vector<8x128xf32>
    %100 = arith.mulf %98, %99 : vector<8x128xf32>
    %101 = arith.mulf %100, %100 : vector<8x128xf32>
    %cst_44 = arith.constant dense<0.000000e+00> : vector<8xf32>
    %102 = vector.multi_reduction <add>, %101, %cst_44 [1] : vector<8x128xf32> to vector<8xf32>
    %103 = vector.shape_cast %102 : vector<8xf32> to vector<8x1xf32>
    %cst_45 = arith.constant 0.020833334 : f32
    %104 = vector.broadcast %cst_45 : f32 to vector<8x1xf32>
    %105 = arith.mulf %103, %104 : vector<8x1xf32>
    %cst_46 = arith.constant 9.99999974E-6 : f32
    %106 = vector.broadcast %cst_46 : f32 to vector<8x1xf32>
    %107 = arith.addf %105, %106 : vector<8x1xf32>
    %108 = math.rsqrt %107 : vector<8x1xf32>
    %109 = vector.broadcast %108 : vector<8x1xf32> to vector<8x128xf32>
    %110 = arith.mulf %100, %109 : vector<8x128xf32>
    %111 = vector.broadcast %89 : vector<1x128xf32> to vector<8x128xf32>
    %112 = arith.mulf %110, %111 : vector<8x128xf32>
    %113 = vector.broadcast %90 : vector<1x128xf32> to vector<8x128xf32>
    %114 = arith.addf %112, %113 : vector<8x128xf32>
    %c0_47 = arith.constant 0 : index
    %c0_48 = arith.constant 0 : index
    %115 = vector.load %arg15[%c0_47, %c0_48] : memref<8x128xf32, #tpu.memory_space<vmem>>, vector<8x128xf32>
    tpu.vector_store %arg15[%c0_47, %c0_48], %114 {strides = array<i32>} : memref<8x128xf32, #tpu.memory_space<vmem>>, vector<8x128xf32>,
    return
  }
  func.func @transform_0(%arg0: i32) -> (i32, i32) {
    %c0_i32 = arith.constant 0 : i32
    %c0_i32_0 = arith.constant 0 : i32
    return %arg0, %c0_i32 : i32, i32
  }
  func.func @transform_1(%arg0: i32) -> (i32, i32) {
    %c0_i32 = arith.constant 0 : i32
    %c0_i32_0 = arith.constant 0 : i32
    %c0_i32_1 = arith.constant 0 : i32
    return %c0_i32, %c0_i32_0 : i32, i32
  }
  func.func @transform_2(%arg0: i32) -> (i32, i32) {
    %c0_i32 = arith.constant 0 : i32
    %c0_i32_0 = arith.constant 0 : i32
    %c0_i32_1 = arith.constant 0 : i32
    return %c0_i32, %c0_i32_0 : i32, i32
  }
  func.func @transform_3(%arg0: i32) -> (i32, i32) {
    %c0_i32 = arith.constant 0 : i32
    %c0_i32_0 = arith.constant 0 : i32
    %c0_i32_1 = arith.constant 0 : i32
    return %c0_i32, %c0_i32_0 : i32, i32
  }
  func.func @transform_4(%arg0: i32) -> (i32, i32) {
    %c0_i32 = arith.constant 0 : i32
    %c0_i32_0 = arith.constant 0 : i32
    %c0_i32_1 = arith.constant 0 : i32
    return %c0_i32, %c0_i32_0 : i32, i32
  }
  func.func @transform_5(%arg0: i32) -> (i32, i32) {
    %c0_i32 = arith.constant 0 : i32
    %c0_i32_0 = arith.constant 0 : i32
    %c0_i32_1 = arith.constant 0 : i32
    return %c0_i32, %c0_i32_0 : i32, i32
  }
  func.func @transform_6(%arg0: i32) -> (i32, i32) {
    %c0_i32 = arith.constant 0 : i32
    %c0_i32_0 = arith.constant 0 : i32
    %c0_i32_1 = arith.constant 0 : i32
    return %c0_i32, %c0_i32_0 : i32, i32
  }
  func.func @transform_7(%arg0: i32) -> (i32, i32) {
    %c0_i32 = arith.constant 0 : i32
    %c0_i32_0 = arith.constant 0 : i32
    %c0_i32_1 = arith.constant 0 : i32
    return %c0_i32, %c0_i32_0 : i32, i32
  }
  func.func @transform_8(%arg0: i32) -> (i32, i32) {
    %c0_i32 = arith.constant 0 : i32
    %c0_i32_0 = arith.constant 0 : i32
    %c0_i32_1 = arith.constant 0 : i32
    return %c0_i32, %c0_i32_0 : i32, i32
  }
  func.func @transform_9(%arg0: i32) -> (i32, i32) {
    %c0_i32 = arith.constant 0 : i32
    %c0_i32_0 = arith.constant 0 : i32
    %c0_i32_1 = arith.constant 0 : i32
    return %c0_i32, %c0_i32_0 : i32, i32
  }
  func.func @transform_10(%arg0: i32) -> (i32, i32) {
    %c0_i32 = arith.constant 0 : i32
    %c0_i32_0 = arith.constant 0 : i32
    %c0_i32_1 = arith.constant 0 : i32
    return %c0_i32, %c0_i32_0 : i32, i32
  }
  func.func @transform_11(%arg0: i32) -> (i32, i32) {
    %c0_i32 = arith.constant 0 : i32
    %c0_i32_0 = arith.constant 0 : i32
    %c0_i32_1 = arith.constant 0 : i32
    return %c0_i32, %c0_i32_0 : i32, i32
  }
  func.func @transform_12(%arg0: i32) -> (i32, i32) {
    %c0_i32 = arith.constant 0 : i32
    %c0_i32_0 = arith.constant 0 : i32
    %c0_i32_1 = arith.constant 0 : i32
    return %c0_i32, %c0_i32_0 : i32, i32
  }
  func.func @transform_13(%arg0: i32) -> (i32, i32) {
    %c0_i32 = arith.constant 0 : i32
    %c0_i32_0 = arith.constant 0 : i32
    %c0_i32_1 = arith.constant 0 : i32
    return %c0_i32, %c0_i32_0 : i32, i32
  }
  func.func @transform_14(%arg0: i32) -> (i32, i32) {
    %c0_i32 = arith.constant 0 : i32
    %c0_i32_0 = arith.constant 0 : i32
    return %arg0, %c0_i32 : i32, i32
  }
}

</mosaic_0001>

<llo_original>
// kernel: tpu_custom_call.1
$region0: #{tpu_custom_call.1}
  #allocation0 [shape = 'u32[]', space=smem, size = 0x4, offset = 0x4, fixed_abs, tag = 'smem constant byte address 0x4 - core index']
  #allocation1 [shape = 'u32[144,128]{1,0:T(1,128)}', space=vmem, size = 0x12000, scoped, tag = 'internal scratch']
  %s0 = inlined_call_operand.hbm [shape: f32[16,128], index: 0, kind: input, shape index: {}]
  %s1 = inlined_call_operand.hbm [shape: bf16[128,128], index: 1, kind: input, shape index: {}]
  %s2 = inlined_call_operand.hbm [shape: bf16[128,128], index: 2, kind: input, shape index: {}]
  %s3 = inlined_call_operand.hbm [shape: bf16[128,128], index: 3, kind: input, shape index: {}]
  %s4 = inlined_call_operand.hbm [shape: bf16[128,128], index: 4, kind: input, shape index: {}]
  %s5 = inlined_call_operand.vmem [shape: f32[1,128], index: 5, kind: input, shape index: {}]
  %s6 = inlined_call_operand.vmem [shape: f32[1,128], index: 6, kind: input, shape index: {}]
  %s7 = inlined_call_operand.vmem [shape: f32[1,128], index: 7, kind: input, shape index: {}]
  %s8 = inlined_call_operand.hbm [shape: bf16[128,256], index: 8, kind: input, shape index: {}]
  %s9 = inlined_call_operand.vmem [shape: f32[1,256], index: 9, kind: input, shape index: {}]
  %s10 = inlined_call_operand.hbm [shape: bf16[256,128], index: 10, kind: input, shape index: {}]
  %s11 = inlined_call_operand.vmem [shape: f32[1,128], index: 11, kind: input, shape index: {}]
  %s12 = inlined_call_operand.vmem [shape: f32[1,128], index: 12, kind: input, shape index: {}]
  %s13 = inlined_call_operand.vmem [shape: f32[1,128], index: 13, kind: input, shape index: {}]
  %s14 = inlined_call_operand.hbm [shape: f32[16,128], index: 14, kind: output, shape index: {}]
  %s15 = sld [smem:[#allocation0]]
  $region117: #{tpu_custom_call.1} parent=0
    _
  %s17 = ssub.s32 1, %s15
  %s18 = scalar_select 0, %s17, %s15
  $region1: #{tpu_custom_call.1} parent=0
    #allocation2 [shape = 'u8[8192]{0}', space=vmem, size = 0x2000, scoped, tag = 'input window, operand 0']
    #allocation3 [shape = 's32[2]{0}', space=sflag, size = 0x8, scoped, tag = 'scoped memory for tpu_custom_call.1']
    #allocation4 [shape = 's32[2]{0}', space=sflag, size = 0x8, scoped, tag = 'scoped memory for tpu_custom_call.1']
    #allocation5 [shape = 'u8[32768]{0}', space=vmem, size = 0x8000, scoped, tag = 'input window, operand 1, single buffered']
    #allocation6 [shape = 's32[1]{0}', space=sflag, size = 0x4, scoped, tag = 'scoped memory for tpu_custom_call.1']
    #allocation7 [shape = 'u8[32768]{0}', space=vmem, size = 0x8000, scoped, tag = 'input window, operand 2, single buffered']
    #allocation8 [shape = 'u8[32768]{0}', space=vmem, size = 0x8000, scoped, tag = 'input window, operand 3, single buffered']
    #allocation9 [shape = 's32[1]{0}', space=sflag, size = 0x4, scoped, tag = 'scoped memory for tpu_custom_call.1']
    #allocation10 [shape = 'u8[32768]{0}', space=vmem, size = 0x8000, scoped, tag = 'input window, operand 4, single buffered']
    #allocation11 [shape = 'u8[65536]{0}', space=vmem, size = 0x10000, scoped, tag = 'input window, operand 8, single buffered']
    #allocation12 [shape = 's32[1]{0}', space=sflag, size = 0x4, scoped, tag = 'scoped memory for tpu_custom_call.1']
    #allocation13 [shape = 'u8[65536]{0}', space=vmem, size = 0x10000, scoped, tag = 'input window, operand 10, single buffered']
    #allocation14 [shape = 'u8[8192]{0}', space=vmem, size = 0x2000, scoped, tag = 'output window, operand 0']
    %19 = vsyncpa [#allocation3], 0
    %s20 = scalar_lea.sflag [#allocation3], 1
    %21 = vsyncpa %s20, 0
    %22 = vsyncpa [#allocation6], 0
    %23 = vsyncpa [#allocation9], 0
    %24 = vsyncpa [#allocation12], 0
    %25 = vsyncpa [#allocation4], 0
    %s26 = scalar_lea.sflag [#allocation4], 1
    %27 = vsyncpa %s26, 0
    loop: start=0, step=1, limit=4
    $region2: #{tpu_custom_call.1} parent=1 // loop_pre_header
      _
    $region3: #{tpu_custom_call.1} parent=1 // loop_header
      %s29 = sphi 0, %s33
      %p30 = scmp.ge.s32.totalorder %s29, 4
      %s39 = sphi 0, %s41
      %s42 = sphi 0, %s39
      %s43 = sphi 0, %s42
      %s59 = sphi 0, %s43
      %s63 = sphi 0, %s63
      %s65 = sphi 0, %s63
      %s66 = sphi 0, %s65
      %s80 = sphi 0, %s66
      %s84 = sphi 0, %s84
      %s86 = sphi 0, %s84
      %s87 = sphi 0, %s86
      %s101 = sphi 0, %s87
      %s105 = sphi 0, %s105
      %s107 = sphi 0, %s105
      %s108 = sphi 0, %s107
      %s122 = sphi 0, %s108
      %s126 = sphi 0, %s126
      %s128 = sphi 0, %s126
      %s129 = sphi 0, %s128
      %s143 = sphi 0, %s129
      %s147 = sphi 0, %s147
      %s149 = sphi 0, %s147
      %s150 = sphi 0, %s149
      %s164 = sphi 0, %s150
      %s168 = sphi 0, %s168
      %s170 = sphi 0, %s168
      %s171 = sphi 0, %s170
      %s185 = sphi 0, %s171
      %s189 = sphi 0, %s189
      %s191 = sphi 0, %s189
      %s192 = sphi 0, %s191
      %s206 = sphi 0, %s192
      %s210 = sphi 0, %s210
      %s212 = sphi 0, %s210
      %s213 = sphi 0, %s212
      %s227 = sphi 0, %s213
      %s231 = sphi 0, %s231
      %s233 = sphi 0, %s231
      %s234 = sphi 0, %s233
      %s248 = sphi 0, %s234
      %s252 = sphi 0, %s252
      %s254 = sphi 0, %s252
      %s255 = sphi 0, %s254
      %s269 = sphi 0, %s255
      %s273 = sphi 0, %s273
      %s275 = sphi 0, %s273
      %s276 = sphi 0, %s275
      %s290 = sphi 0, %s276
      %s294 = sphi 0, %s294
      %s296 = sphi 0, %s294
      %s297 = sphi 0, %s296
      %s311 = sphi 0, %s297
      %s315 = sphi 0, %s315
      %s317 = sphi 0, %s315
      %s318 = sphi 0, %s317
      %s332 = sphi 0, %s318
      %s338 = sphi 0, %s340
      %s341 = sphi 0, %s338
      %s342 = sphi 0, %s341
      %s358 = sphi 0, %s342
    $region4: #{tpu_custom_call.1} parent=1 // loop_header_branch
      %32 = sbr.rel (%p30) target = $region8
    $region5: #{tpu_custom_call.1} parent=1 // loop_body
      %s34 = ssub.s32 %s29, 1
      %s35 = ssub.s32 %s29, 2
      %s36 = sadd.s32 %s29, 1
      %s37 = ssub.s32 %s29, %s36
      %p38 = scmp.eq.s32.totalorder %s37, 0
      %s40 = sadd.s32 %s39, 1
      %s41 = scalar_select %p38, %s39, %s40
      %p44 = pneg %p38
      %p45 = scmp.eq.s32.totalorder %s29, 1
      %p46 = por %p44, %p45
      %p47 = scmp.ne.s32.totalorder %s39, %s42
      %p48 = scmp.eq.s32.totalorder %s29, 0
      %p49 = por %p47, %p48
      %p50 = scmp.ne.s32.totalorder %s39, %s42
      %p51 = scmp.eq.s32.totalorder %s34, 1
      %p52 = por %p50, %p51
      %p53 = scmp.ne.s32.totalorder %s42, %s43
      %p54 = scmp.eq.s32.totalorder %s34, 0
      %p55 = por %p53, %p54
      %p56 = scmp.ne.s32.totalorder %s42, %s43
      %p57 = scmp.eq.s32.totalorder %s35, 1
      %p58 = por %p56, %p57
      %p60 = scmp.ne.s32.totalorder %s43, %s59
      %p61 = scmp.eq.s32.totalorder %s35, 0
      %p62 = por %p60, %p61
      %s64 = sadd.s32 %s63, 1
      %p67 = scmp.eq.s32.totalorder %s29, 1
      %p68 = scmp.ne.s32.totalorder %s63, %s65
      %p69 = scmp.eq.s32.totalorder %s29, 0
      %p70 = por %p68, %p69
      %p71 = scmp.ne.s32.totalorder %s63, %s65
      %p72 = scmp.eq.s32.totalorder %s34, 1
      %p73 = por %p71, %p72
      %p74 = scmp.ne.s32.totalorder %s65, %s66
      %p75 = scmp.eq.s32.totalorder %s34, 0
      %p76 = por %p74, %p75
      %p77 = scmp.ne.s32.totalorder %s65, %s66
      %p78 = scmp.eq.s32.totalorder %s35, 1
      %p79 = por %p77, %p78
      %p81 = scmp.ne.s32.totalorder %s66, %s80
      %p82 = scmp.eq.s32.totalorder %s35, 0
      %p83 = por %p81, %p82
      %s85 = sadd.s32 %s84, 1
      %p88 = scmp.eq.s32.totalorder %s29, 1
      %p89 = scmp.ne.s32.totalorder %s84, %s86
      %p90 = scmp.eq.s32.totalorder %s29, 0
      %p91 = por %p89, %p90
      %p92 = scmp.ne.s32.totalorder %s84, %s86
      %p93 = scmp.eq.s32.totalorder %s34, 1
      %p94 = por %p92, %p93
      %p95 = scmp.ne.s32.totalorder %s86, %s87
      %p96 = scmp.eq.s32.totalorder %s34, 0
      %p97 = por %p95, %p96
      %p98 = scmp.ne.s32.totalorder %s86, %s87
      %p99 = scmp.eq.s32.totalorder %s35, 1
      %p100 = por %p98, %p99
      %p102 = scmp.ne.s32.totalorder %s87, %s101
      %p103 = scmp.eq.s32.totalorder %s35, 0
      %p104 = por %p102, %p103
      %s106 = sadd.s32 %s105, 1
      %p109 = scmp.eq.s32.totalorder %s29, 1
      %p110 = scmp.ne.s32.totalorder %s105, %s107
      %p111 = scmp.eq.s32.totalorder %s29, 0
      %p112 = por %p110, %p111
      %p113 = scmp.ne.s32.totalorder %s105, %s107
      %p114 = scmp.eq.s32.totalorder %s34, 1
      %p115 = por %p113, %p114
      %p116 = scmp.ne.s32.totalorder %s107, %s108
      %p117 = scmp.eq.s32.totalorder %s34, 0
      %p118 = por %p116, %p117
      %p119 = scmp.ne.s32.totalorder %s107, %s108
      %p120 = scmp.eq.s32.totalorder %s35, 1
      %p121 = por %p119, %p120
      %p123 = scmp.ne.s32.totalorder %s108, %s122
      %p124 = scmp.eq.s32.totalorder %s35, 0
      %p125 = por %p123, %p124
      %s127 = sadd.s32 %s126, 1
      %p130 = scmp.eq.s32.totalorder %s29, 1
      %p131 = scmp.ne.s32.totalorder %s126, %s128
      %p132 = scmp.eq.s32.totalorder %s29, 0
      %p133 = por %p131, %p132
      %p134 = scmp.ne.s32.totalorder %s126, %s128
      %p135 = scmp.eq.s32.totalorder %s34, 1
      %p136 = por %p134, %p135
      %p137 = scmp.ne.s32.totalorder %s128, %s129
      %p138 = scmp.eq.s32.totalorder %s34, 0
      %p139 = por %p137, %p138
      %p140 = scmp.ne.s32.totalorder %s128, %s129
      %p141 = scmp.eq.s32.totalorder %s35, 1
      %p142 = por %p140, %p141
      %p144 = scmp.ne.s32.totalorder %s129, %s143
      %p145 = scmp.eq.s32.totalorder %s35, 0
      %p146 = por %p144, %p145
      %s148 = sadd.s32 %s147, 1
      %p151 = scmp.eq.s32.totalorder %s29, 1
      %p152 = scmp.ne.s32.totalorder %s147, %s149
      %p153 = scmp.eq.s32.totalorder %s29, 0
      %p154 = por %p152, %p153
      %p155 = scmp.ne.s32.totalorder %s147, %s149
      %p156 = scmp.eq.s32.totalorder %s34, 1
      %p157 = por %p155, %p156
      %p158 = scmp.ne.s32.totalorder %s149, %s150
      %p159 = scmp.eq.s32.totalorder %s34, 0
      %p160 = por %p158, %p159
      %p161 = scmp.ne.s32.totalorder %s149, %s150
      %p162 = scmp.eq.s32.totalorder %s35, 1
      %p163 = por %p161, %p162
      %p165 = scmp.ne.s32.totalorder %s150, %s164
      %p166 = scmp.eq.s32.totalorder %s35, 0
      %p167 = por %p165, %p166
      %s169 = sadd.s32 %s168, 1
      %p172 = scmp.eq.s32.totalorder %s29, 1
      %p173 = scmp.ne.s32.totalorder %s168, %s170
      %p174 = scmp.eq.s32.totalorder %s29, 0
      %p175 = por %p173, %p174
      %p176 = scmp.ne.s32.totalorder %s168, %s170
      %p177 = scmp.eq.s32.totalorder %s34, 1
      %p178 = por %p176, %p177
      %p179 = scmp.ne.s32.totalorder %s170, %s171
      %p180 = scmp.eq.s32.totalorder %s34, 0
      %p181 = por %p179, %p180
      %p182 = scmp.ne.s32.totalorder %s170, %s171
      %p183 = scmp.eq.s32.totalorder %s35, 1
      %p184 = por %p182, %p183
      %p186 = scmp.ne.s32.totalorder %s171, %s185
      %p187 = scmp.eq.s32.totalorder %s35, 0
      %p188 = por %p186, %p187
      %s190 = sadd.s32 %s189, 1
      %p193 = scmp.eq.s32.totalorder %s29, 1
      %p194 = scmp.ne.s32.totalorder %s189, %s191
      %p195 = scmp.eq.s32.totalorder %s29, 0
      %p196 = por %p194, %p195
      %p197 = scmp.ne.s32.totalorder %s189, %s191
      %p198 = scmp.eq.s32.totalorder %s34, 1
      %p199 = por %p197, %p198
      %p200 = scmp.ne.s32.totalorder %s191, %s192
      %p201 = scmp.eq.s32.totalorder %s34, 0
      %p202 = por %p200, %p201
      %p203 = scmp.ne.s32.totalorder %s191, %s192
      %p204 = scmp.eq.s32.totalorder %s35, 1
      %p205 = por %p203, %p204
      %p207 = scmp.ne.s32.totalorder %s192, %s206
      %p208 = scmp.eq.s32.totalorder %s35, 0
      %p209 = por %p207, %p208
      %s211 = sadd.s32 %s210, 1
      %p214 = scmp.eq.s32.totalorder %s29, 1
      %p215 = scmp.ne.s32.totalorder %s210, %s212
      %p216 = scmp.eq.s32.totalorder %s29, 0
      %p217 = por %p215, %p216
      %p218 = scmp.ne.s32.totalorder %s210, %s212
      %p219 = scmp.eq.s32.totalorder %s34, 1
      %p220 = por %p218, %p219
      %p221 = scmp.ne.s32.totalorder %s212, %s213
      %p222 = scmp.eq.s32.totalorder %s34, 0
      %p223 = por %p221, %p222
      %p224 = scmp.ne.s32.totalorder %s212, %s213
      %p225 = scmp.eq.s32.totalorder %s35, 1
      %p226 = por %p224, %p225
      %p228 = scmp.ne.s32.totalorder %s213, %s227
      %p229 = scmp.eq.s32.totalorder %s35, 0
      %p230 = por %p228, %p229
      %s232 = sadd.s32 %s231, 1
      %p235 = scmp.eq.s32.totalorder %s29, 1
      %p236 = scmp.ne.s32.totalorder %s231, %s233
      %p237 = scmp.eq.s32.totalorder %s29, 0
      %p238 = por %p236, %p237
      %p239 = scmp.ne.s32.totalorder %s231, %s233
      %p240 = scmp.eq.s32.totalorder %s34, 1
      %p241 = por %p239, %p240
      %p242 = scmp.ne.s32.totalorder %s233, %s234
      %p243 = scmp.eq.s32.totalorder %s34, 0
      %p244 = por %p242, %p243
      %p245 = scmp.ne.s32.totalorder %s233, %s234
      %p246 = scmp.eq.s32.totalorder %s35, 1
      %p247 = por %p245, %p246
      %p249 = scmp.ne.s32.totalorder %s234, %s248
      %p250 = scmp.eq.s32.totalorder %s35, 0
      %p251 = por %p249, %p250
      %s253 = sadd.s32 %s252, 1
      %p256 = scmp.eq.s32.totalorder %s29, 1
      %p257 = scmp.ne.s32.totalorder %s252, %s254
      %p258 = scmp.eq.s32.totalorder %s29, 0
      %p259 = por %p257, %p258
      %p260 = scmp.ne.s32.totalorder %s252, %s254
      %p261 = scmp.eq.s32.totalorder %s34, 1
      %p262 = por %p260, %p261
      %p263 = scmp.ne.s32.totalorder %s254, %s255
      %p264 = scmp.eq.s32.totalorder %s34, 0
      %p265 = por %p263, %p264
      %p266 = scmp.ne.s32.totalorder %s254, %s255
      %p267 = scmp.eq.s32.totalorder %s35, 1
      %p268 = por %p266, %p267
      %p270 = scmp.ne.s32.totalorder %s255, %s269
      %p271 = scmp.eq.s32.totalorder %s35, 0
      %p272 = por %p270, %p271
      %s274 = sadd.s32 %s273, 1
      %p277 = scmp.eq.s32.totalorder %s29, 1
      %p278 = scmp.ne.s32.totalorder %s273, %s275
      %p279 = scmp.eq.s32.totalorder %s29, 0
      %p280 = por %p278, %p279
      %p281 = scmp.ne.s32.totalorder %s273, %s275
      %p282 = scmp.eq.s32.totalorder %s34, 1
      %p283 = por %p281, %p282
      %p284 = scmp.ne.s32.totalorder %s275, %s276
      %p285 = scmp.eq.s32.totalorder %s34, 0
      %p286 = por %p284, %p285
      %p287 = scmp.ne.s32.totalorder %s275, %s276
      %p288 = scmp.eq.s32.totalorder %s35, 1
      %p289 = por %p287, %p288
      %p291 = scmp.ne.s32.totalorder %s276, %s290
      %p292 = scmp.eq.s32.totalorder %s35, 0
      %p293 = por %p291, %p292
      %s295 = sadd.s32 %s294, 1
      %p298 = scmp.eq.s32.totalorder %s29, 1
      %p299 = scmp.ne.s32.totalorder %s294, %s296
      %p300 = scmp.eq.s32.totalorder %s29, 0
      %p301 = por %p299, %p300
      %p302 = scmp.ne.s32.totalorder %s294, %s296
      %p303 = scmp.eq.s32.totalorder %s34, 1
      %p304 = por %p302, %p303
      %p305 = scmp.ne.s32.totalorder %s296, %s297
      %p306 = scmp.eq.s32.totalorder %s34, 0
      %p307 = por %p305, %p306
      %p308 = scmp.ne.s32.totalorder %s296, %s297
      %p309 = scmp.eq.s32.totalorder %s35, 1
      %p310 = por %p308, %p309
      %p312 = scmp.ne.s32.totalorder %s297, %s311
      %p313 = scmp.eq.s32.totalorder %s35, 0
      %p314 = por %p312, %p313
      %s316 = sadd.s32 %s315, 1
      %p319 = scmp.eq.s32.totalorder %s29, 1
      %p320 = scmp.ne.s32.totalorder %s315, %s317
      %p321 = scmp.eq.s32.totalorder %s29, 0
      %p322 = por %p320, %p321
      %p323 = scmp.ne.s32.totalorder %s315, %s317
      %p324 = scmp.eq.s32.totalorder %s34, 1
      %p325 = por %p323, %p324
      %p326 = scmp.ne.s32.totalorder %s317, %s318
      %p327 = scmp.eq.s32.totalorder %s34, 0
      %p328 = por %p326, %p327
      %p329 = scmp.ne.s32.totalorder %s317, %s318
      %p330 = scmp.eq.s32.totalorder %s35, 1
      %p331 = por %p329, %p330
      %p333 = scmp.ne.s32.totalorder %s318, %s332
      %p334 = scmp.eq.s32.totalorder %s35, 0
      %p335 = por %p333, %p334
      %s336 = ssub.s32 %s29, %s36
      %p337 = scmp.eq.s32.totalorder %s336, 0
      %s339 = sadd.s32 %s338, 1
      %s340 = scalar_select %p337, %s338, %s339
      %p343 = pneg %p337
      %p344 = scmp.eq.s32.totalorder %s29, 1
      %p345 = por %p343, %p344
      %p346 = scmp.ne.s32.totalorder %s338, %s341
      %p347 = scmp.eq.s32.totalorder %s29, 0
      %p348 = por %p346, %p347
      %p349 = scmp.ne.s32.totalorder %s338, %s341
      %p350 = scmp.eq.s32.totalorder %s34, 1
      %p351 = por %p349, %p350
      %p352 = scmp.ne.s32.totalorder %s341, %s342
      %p353 = scmp.eq.s32.totalorder %s34, 0
      %p354 = por %p352, %p353
      %p355 = scmp.ne.s32.totalorder %s341, %s342
      %p356 = scmp.eq.s32.totalorder %s35, 1
      %p357 = por %p355, %p356
      %p359 = scmp.ne.s32.totalorder %s342, %s358
      %p360 = scmp.eq.s32.totalorder %s35, 0
      %p361 = por %p359, %p360
      %p362 = scmp.le.s32.totalorder 1, %s29
      %p363 = scmp.lt.s32.totalorder %s29, 3
      %p364 = pnand %p362, %p363
      %p365 = pneg %p364
      // Predicated region
      $region9: #{tpu_custom_call.1} parent=5 // pred_check
        _
      $region10: #{tpu_custom_call.1} parent=5 // pred_check_branch
        %367 = sbr.rel (%p364) target = $region12
      $region11: #{tpu_custom_call.1} parent=5 // pred_region
        %s368 = ssub.s32 %s29, 1
        // Predicated region
        $region13: #{tpu_custom_call.1} parent=11 // pred_check
          %p369 = pneg %p76
        $region14: #{tpu_custom_call.1} parent=11 // pred_check_branch
          %371 = sbr.rel (%p369) target = $region16
        $region15: #{tpu_custom_call.1} parent=11 // pred_region
          %s373 = ssub.s32 1024, 1024
          %374 = vsyncadd [#allocation6], %s373
          %s375 = sshll.u32 [#allocation5], 4
          %s376 = int_to_ptr.vmem [resolvable:$true] %s375
          %381 = dma.hbm_to_vmem [thread:$0]  %s1, 1024, %s376, [#allocation6], 64, 64, 4
        $region16: #{tpu_custom_call.1} parent=11 // pred_fallthru
          _
        // Predicated region
        $region17: #{tpu_custom_call.1} parent=11 // pred_check
          %p382 = pneg %p97
        $region18: #{tpu_custom_call.1} parent=11 // pred_check_branch
          %384 = sbr.rel (%p382) target = $region20
        $region19: #{tpu_custom_call.1} parent=11 // pred_region
          %s386 = ssub.s32 1024, 1024
          %387 = vsyncadd [#allocation6], %s386
          %s388 = sshll.u32 [#allocation7], 4
          %s389 = int_to_ptr.vmem [resolvable:$true] %s388
          %394 = dma.hbm_to_vmem [thread:$0]  %s2, 1024, %s389, [#allocation6], 64, 64, 4
        $region20: #{tpu_custom_call.1} parent=11 // pred_fallthru
          _
        // Predicated region
        $region21: #{tpu_custom_call.1} parent=11 // pred_check
          %p395 = pneg %p118
        $region22: #{tpu_custom_call.1} parent=11 // pred_check_branch
          %397 = sbr.rel (%p395) target = $region24
        $region23: #{tpu_custom_call.1} parent=11 // pred_region
          %s399 = ssub.s32 1024, 1024
          %400 = vsyncadd [#allocation9], %s399
          %s401 = sshll.u32 [#allocation8], 4
          %s402 = int_to_ptr.vmem [resolvable:$true] %s401
          %407 = dma.hbm_to_vmem [thread:$0]  %s3, 1024, %s402, [#allocation9], 64, 64, 4
        $region24: #{tpu_custom_call.1} parent=11 // pred_fallthru
          _
        // Predicated region
        $region25: #{tpu_custom_call.1} parent=11 // pred_check
          %p408 = pneg %p139
        $region26: #{tpu_custom_call.1} parent=11 // pred_check_branch
          %410 = sbr.rel (%p408) target = $region28
        $region27: #{tpu_custom_call.1} parent=11 // pred_region
          %s412 = ssub.s32 1024, 1024
          %413 = vsyncadd [#allocation9], %s412
          %s414 = sshll.u32 [#allocation10], 4
          %s415 = int_to_ptr.vmem [resolvable:$true] %s414
          %420 = dma.hbm_to_vmem [thread:$0]  %s4, 1024, %s415, [#allocation9], 64, 64, 4
        $region28: #{tpu_custom_call.1} parent=11 // pred_fallthru
          _
        // Predicated region
        $region29: #{tpu_custom_call.1} parent=11 // pred_check
          %p421 = pneg %p160
        $region30: #{tpu_custom_call.1} parent=11 // pred_check_branch
          %423 = sbr.rel (%p421) target = $region32
        $region31: #{tpu_custom_call.1} parent=11 // pred_region
          _
        $region32: #{tpu_custom_call.1} parent=11 // pred_fallthru
          _
        // Predicated region
        $region33: #{tpu_custom_call.1} parent=11 // pred_check
          %p424 = pneg %p181
        $region34: #{tpu_custom_call.1} parent=11 // pred_check_branch
          %426 = sbr.rel (%p424) target = $region36
        $region35: #{tpu_custom_call.1} parent=11 // pred_region
          _
        $region36: #{tpu_custom_call.1} parent=11 // pred_fallthru
          _
        // Predicated region
        $region37: #{tpu_custom_call.1} parent=11 // pred_check
          %p427 = pneg %p202
        $region38: #{tpu_custom_call.1} parent=11 // pred_check_branch
          %429 = sbr.rel (%p427) target = $region40
        $region39: #{tpu_custom_call.1} parent=11 // pred_region
          _
        $region40: #{tpu_custom_call.1} parent=11 // pred_fallthru
          _
        // Predicated region
        $region41: #{tpu_custom_call.1} parent=11 // pred_check
          %p430 = pneg %p223
        $region42: #{tpu_custom_call.1} parent=11 // pred_check_branch
          %432 = sbr.rel (%p430) target = $region44
        $region43: #{tpu_custom_call.1} parent=11 // pred_region
          %s434 = ssub.s32 2048, 2048
          %435 = vsyncadd [#allocation12], %s434
          %s436 = sshll.u32 [#allocation11], 4
          %s437 = int_to_ptr.vmem [resolvable:$true] %s436
          %442 = dma.hbm_to_vmem [thread:$0]  %s8, 2048, %s437, [#allocation12], 128, 128, 8
        $region44: #{tpu_custom_call.1} parent=11 // pred_fallthru
          _
        // Predicated region
        $region45: #{tpu_custom_call.1} parent=11 // pred_check
          %p443 = pneg %p244
        $region46: #{tpu_custom_call.1} parent=11 // pred_check_branch
          %445 = sbr.rel (%p443) target = $region48
        $region47: #{tpu_custom_call.1} parent=11 // pred_region
          _
        $region48: #{tpu_custom_call.1} parent=11 // pred_fallthru
          _
        // Predicated region
        $region49: #{tpu_custom_call.1} parent=11 // pred_check
          %p446 = pneg %p265
        $region50: #{tpu_custom_call.1} parent=11 // pred_check_branch
          %448 = sbr.rel (%p446) target = $region52
        $region51: #{tpu_custom_call.1} parent=11 // pred_region
          %s450 = ssub.s32 2048, 2048
          %451 = vsyncadd [#allocation12], %s450
          %s452 = sshll.u32 [#allocation13], 4
          %s453 = int_to_ptr.vmem [resolvable:$true] %s452
          %458 = dma.hbm_to_vmem [thread:$0]  %s10, 2048, %s453, [#allocation12], 64, 64, 4
        $region52: #{tpu_custom_call.1} parent=11 // pred_fallthru
          _
        // Predicated region
        $region53: #{tpu_custom_call.1} parent=11 // pred_check
          %p459 = pneg %p286
        $region54: #{tpu_custom_call.1} parent=11 // pred_check_branch
          %461 = sbr.rel (%p459) target = $region56
        $region55: #{tpu_custom_call.1} parent=11 // pred_region
          _
        $region56: #{tpu_custom_call.1} parent=11 // pred_fallthru
          _
        // Predicated region
        $region57: #{tpu_custom_call.1} parent=11 // pred_check
          %p462 = pneg %p307
        $region58: #{tpu_custom_call.1} parent=11 // pred_check_branch
          %464 = sbr.rel (%p462) target = $region60
        $region59: #{tpu_custom_call.1} parent=11 // pred_region
          _
        $region60: #{tpu_custom_call.1} parent=11 // pred_fallthru
          _
        // Predicated region
        $region61: #{tpu_custom_call.1} parent=11 // pred_check
          %p465 = pneg %p328
        $region62: #{tpu_custom_call.1} parent=11 // pred_check_branch
          %467 = sbr.rel (%p465) target = $region64
        $region63: #{tpu_custom_call.1} parent=11 // pred_region
          _
        $region64: #{tpu_custom_call.1} parent=11 // pred_fallthru
          _
      $region12: #{tpu_custom_call.1} parent=5 // pred_fallthru
        _
      %p468 = scmp.lt.s32.totalorder %s29, 2
      // Predicated region
      $region65: #{tpu_custom_call.1} parent=5 // pred_check
        %p469 = pneg %p468
      $region66: #{tpu_custom_call.1} parent=5 // pred_check_branch
        %471 = sbr.rel (%p469) target = $region68
      $region67: #{tpu_custom_call.1} parent=5 // pred_region
        // Predicated region
        $region69: #{tpu_custom_call.1} parent=67 // pred_check
          %p472 = pneg %p49
        $region70: #{tpu_custom_call.1} parent=67 // pred_check_branch
          %474 = sbr.rel (%p472) target = $region72
        $region71: #{tpu_custom_call.1} parent=67 // pred_region
          %s475 = sand.u32 %s39, 1
          %s476 = scalar_lea.sflag [#allocation3], %s475
          %s477 = sand.u32 %s39, 1
          %s478 = smul.addr %s477, 8
          %s479 = scalar_lea.vmem [#allocation2], %s478
          %s481 = ssub.s32 128, 128
          %482 = vsyncadd %s476, %s481
          %s483 = smul.addr %s29, 128
          %s484 = scalar_lea.hbm %s0, %s483
          %s486 = sshll.u32 %s479, 4
          %s487 = int_to_ptr.vmem [resolvable:$true] %s486
          %489 = dma.hbm_to_vmem [thread:$0]  %s484, 128, %s487, %s476
        $region72: #{tpu_custom_call.1} parent=67 // pred_fallthru
          _
      $region68: #{tpu_custom_call.1} parent=5 // pred_fallthru
        _
      %p490 = scmp.le.s32.totalorder 1, %s29
      %p491 = scmp.lt.s32.totalorder %s29, 3
      %p492 = pnand %p490, %p491
      %p493 = pneg %p492
      // Predicated region
      $region73: #{tpu_custom_call.1} parent=5 // pred_check
        _
      $region74: #{tpu_custom_call.1} parent=5 // pred_check_branch
        %495 = sbr.rel (%p492) target = $region76
      $region75: #{tpu_custom_call.1} parent=5 // pred_region
        %s496 = ssub.s32 %s29, 1
        %s497 = sand.u32 %s42, 1
        %s498 = scalar_lea.sflag [#allocation3], %s497
        %s499 = sand.u32 %s42, 1
        %s500 = smul.addr %s499, 8
        %s501 = scalar_lea.vmem [#allocation2], %s500
        // Predicated region
        $region77: #{tpu_custom_call.1} parent=75 // pred_check
          %p502 = pneg %p55
        $region78: #{tpu_custom_call.1} parent=75 // pred_check_branch
          %504 = sbr.rel (%p502) target = $region80
        $region79: #{tpu_custom_call.1} parent=75 // pred_region
          %505 = dma.done %s498, 128
        $region80: #{tpu_custom_call.1} parent=75 // pred_fallthru
          _
        // Predicated region
        $region81: #{tpu_custom_call.1} parent=75 // pred_check
          %p506 = pneg %p76
        $region82: #{tpu_custom_call.1} parent=75 // pred_check_branch
          %508 = sbr.rel (%p506) target = $region84
        $region83: #{tpu_custom_call.1} parent=75 // pred_region
          %509 = dma.done [#allocation6], 1024
        $region84: #{tpu_custom_call.1} parent=75 // pred_fallthru
          _
        // Predicated region
        $region85: #{tpu_custom_call.1} parent=75 // pred_check
          %p510 = pneg %p97
        $region86: #{tpu_custom_call.1} parent=75 // pred_check_branch
          %512 = sbr.rel (%p510) target = $region88
        $region87: #{tpu_custom_call.1} parent=75 // pred_region
          %513 = dma.done [#allocation6], 1024
        $region88: #{tpu_custom_call.1} parent=75 // pred_fallthru
          _
        // Predicated region
        $region89: #{tpu_custom_call.1} parent=75 // pred_check
          %p514 = pneg %p118
        $region90: #{tpu_custom_call.1} parent=75 // pred_check_branch
          %516 = sbr.rel (%p514) target = $region92
        $region91: #{tpu_custom_call.1} parent=75 // pred_region
          %517 = dma.done [#allocation9], 1024
        $region92: #{tpu_custom_call.1} parent=75 // pred_fallthru
          _
        // Predicated region
        $region93: #{tpu_custom_call.1} parent=75 // pred_check
          %p518 = pneg %p139
        $region94: #{tpu_custom_call.1} parent=75 // pred_check_branch
          %520 = sbr.rel (%p518) target = $region96
        $region95: #{tpu_custom_call.1} parent=75 // pred_region
          %521 = dma.done [#allocation9], 1024
        $region96: #{tpu_custom_call.1} parent=75 // pred_fallthru
          _
        // Predicated region
        $region97: #{tpu_custom_call.1} parent=75 // pred_check
          %p522 = pneg %p223
        $region98: #{tpu_custom_call.1} parent=75 // pred_check_branch
          %524 = sbr.rel (%p522) target = $region100
        $region99: #{tpu_custom_call.1} parent=75 // pred_region
          %525 = dma.done [#allocation12], 2048
        $region100: #{tpu_custom_call.1} parent=75 // pred_fallthru
          _
        // Predicated region
        $region101: #{tpu_custom_call.1} parent=75 // pred_check
          %p526 = pneg %p265
        $region102: #{tpu_custom_call.1} parent=75 // pred_check_branch
          %528 = sbr.rel (%p526) target = $region104
        $region103: #{tpu_custom_call.1} parent=75 // pred_region
          %529 = dma.done [#allocation12], 2048
        $region104: #{tpu_custom_call.1} parent=75 // pred_fallthru
          _
        %s530 = sand.u32 %s42, 1
        %s531 = scalar_lea.sflag [#allocation3], %s530
        %s532 = sand.u32 %s42, 1
        %s533 = smul.addr %s532, 8
        %s534 = scalar_lea.vmem [#allocation2], %s533
        %p535 = pneg %p55
        %p536 = pneg %p52
        %p537 = pneg %p76
        %p538 = pneg %p73
        %p539 = pneg %p97
        %p540 = pneg %p94
        %p541 = pneg %p118
        %p542 = pneg %p115
        %p543 = pneg %p139
        %p544 = pneg %p136
        %p545 = pneg %p160
        %p546 = pneg %p157
        %p547 = pneg %p181
        %p548 = pneg %p178
        %p549 = pneg %p202
        %p550 = pneg %p199
        %p551 = pneg %p223
        %p552 = pneg %p220
        %p553 = pneg %p244
        %p554 = pneg %p241
        %p555 = pneg %p265
        %p556 = pneg %p262
        %p557 = pneg %p286
        %p558 = pneg %p283
        %p559 = pneg %p307
        %p560 = pneg %p304
        %p561 = pneg %p328
        %p562 = pneg %p325
        %p563 = pneg %p354
        %p564 = pneg %p351
        %s565 = sand.u32 %s341, 1
        %s566 = scalar_lea.sflag [#allocation4], %s565
        %s567 = sand.u32 %s341, 1
        %s568 = smul.addr %s567, 8
        %s569 = scalar_lea.vmem [#allocation14], %s568
        %v571 = vld [vmem:[%s501] sm:$0xff]
        %v572 = vpack.c.bf16 %v571, %v571
        %v573 = vlaneseq
        %v574 = vand.u32 %v573, 127
        %vm575 = vcmp.lt.s32.totalorder %v574, 48
        %v576 = vsel %vm575, 1, 0
        %v577 = vcvt.s32.f32 %v576
        %v578 = vld [vmem:[#allocation5] sm:$0xf]
        %v579 = vld [vmem:[#allocation5 + $0x4] sm:$0xf]
        %v580 = vld [vmem:[#allocation5 + $0x8] sm:$0xf]
        %v581 = vld [vmem:[#allocation5 + $0xc] sm:$0xf]
        %v582 = vld [vmem:[#allocation5 + $0x10] sm:$0xf]
        %v583 = vld [vmem:[#allocation5 + $0x14] sm:$0xf]
        %v584 = vld [vmem:[#allocation5 + $0x18] sm:$0xf]
        %v585 = vld [vmem:[#allocation5 + $0x1c] sm:$0xf]
        %v586 = vld [vmem:[#allocation5 + $0x20] sm:$0xf]
        %v587 = vld [vmem:[#allocation5 + $0x24] sm:$0xf]
        %v588 = vld [vmem:[#allocation5 + $0x28] sm:$0xf]
        %v589 = vld [vmem:[#allocation5 + $0x2c] sm:$0xf]
        %v590 = vld [vmem:[#allocation5 + $0x30] sm:$0xf]
        %v591 = vld [vmem:[#allocation5 + $0x34] sm:$0xf]
        %v592 = vld [vmem:[#allocation5 + $0x38] sm:$0xf]
        %v593 = vld [vmem:[#allocation5 + $0x3c] sm:$0xf]
        %v610 = vunpack.c.l.b16 %v578
        %v611 = vunpack.c.l.b16 %v579
        %v612 = vunpack.c.l.b16 %v580
        %v613 = vunpack.c.l.b16 %v581
        %v614 = vunpack.c.l.b16 %v582
        %v615 = vunpack.c.l.b16 %v583
        %v616 = vunpack.c.l.b16 %v584
        %v617 = vunpack.c.l.b16 %v585
        %v618 = vunpack.c.l.b16 %v586
        %v619 = vunpack.c.l.b16 %v587
        %v620 = vunpack.c.l.b16 %v588
        %v621 = vunpack.c.l.b16 %v589
        %v622 = vunpack.c.l.b16 %v590
        %v623 = vunpack.c.l.b16 %v591
        %v624 = vunpack.c.l.b16 %v592
        %v625 = vunpack.c.l.b16 %v593
        %v626 = vpack.c.b16 %v611, %v610
        %v627 = vpack.c.b16 %v613, %v612
        %v628 = vpack.c.b16 %v615, %v614
        %v629 = vpack.c.b16 %v617, %v616
        %v630 = vpack.c.b16 %v619, %v618
        %v631 = vpack.c.b16 %v621, %v620
        %v632 = vpack.c.b16 %v623, %v622
        %v633 = vpack.c.b16 %v625, %v624
        %642 = vmatprep.subr.bf16.mxu0 0
        %643 = vmatpush1.bf16.msra.mxu0 %v626
        %644 = vmatprep.subr.bf16.mxu0 0
        %645 = vmatpush1.bf16.msra.mxu0 %v627
        %646 = vmatprep.subr.bf16.mxu0 0
        %647 = vmatpush1.bf16.msra.mxu0 %v628
        %648 = vmatprep.subr.bf16.mxu0 0
        %649 = vmatpush1.bf16.msra.mxu0 %v629
        %650 = vmatprep.subr.bf16.mxu0 0
        %651 = vmatpush1.bf16.msra.mxu0 %v630
        %652 = vmatprep.subr.bf16.mxu0 0
        %653 = vmatpush1.bf16.msra.mxu0 %v631
        %654 = vmatprep.subr.bf16.mxu0 0
        %655 = vmatpush1.bf16.msra.mxu0 %v632
        %656 = vmatprep.subr.bf16.mxu0 0
        %657 = vmatpush1.bf16.msra.mxu0 %v633
        %658 = vmatprep.subr.bf16.mxu0 0
        %659 = vmatpush1.bf16.msra.mxu0 0
        %660 = vmatprep.subr.bf16.mxu0 0
        %661 = vmatpush1.bf16.msra.mxu0 0
        %662 = vmatprep.subr.bf16.mxu0 0
        %663 = vmatpush1.bf16.msra.mxu0 0
        %664 = vmatprep.subr.bf16.mxu0 0
        %665 = vmatpush1.bf16.msra.mxu0 0
        %666 = vmatprep.subr.bf16.mxu0 0
        %667 = vmatpush1.bf16.msra.mxu0 0
        %668 = vmatprep.subr.bf16.mxu0 0
        %669 = vmatpush1.bf16.msra.mxu0 0
        %670 = vmatprep.subr.bf16.mxu0 0
        %671 = vmatpush1.bf16.msra.mxu0 0
        %672 = vmatprep.subr.bf16.mxu0 0
        %673 = vmatpush1.bf16.msra.mxu0 0
        %674 = vmatprep.mubr.bf16.mxu0 0
        %675 = vmatmul.mubr.bf16.gmra.mrb[0].mxu0 %v572
        %v676 = vpop.f32.mrb[0].mxu0
        %v677 = vadd.f32 0.0, %v676
        %v678 = vpop.f32.mrb[0].mxu0
        %v679 = vpop.f32.mrb[0].mxu0
        %v680 = vpop.f32.mrb[0].mxu0
        %681 = vdwg.mxu0
        %v682 = vld [vmem:[#allocation7] sm:$0xf]
        %v683 = vld [vmem:[#allocation7 + $0x4] sm:$0xf]
        %v684 = vld [vmem:[#allocation7 + $0x8] sm:$0xf]
        %v685 = vld [vmem:[#allocation7 + $0xc] sm:$0xf]
        %v686 = vld [vmem:[#allocation7 + $0x10] sm:$0xf]
        %v687 = vld [vmem:[#allocation7 + $0x14] sm:$0xf]
        %v688 = vld [vmem:[#allocation7 + $0x18] sm:$0xf]
        %v689 = vld [vmem:[#allocation7 + $0x1c] sm:$0xf]
        %v690 = vld [vmem:[#allocation7 + $0x20] sm:$0xf]
        %v691 = vld [vmem:[#allocation7 + $0x24] sm:$0xf]
        %v692 = vld [vmem:[#allocation7 + $0x28] sm:$0xf]
        %v693 = vld [vmem:[#allocation7 + $0x2c] sm:$0xf]
        %v694 = vld [vmem:[#allocation7 + $0x30] sm:$0xf]
        %v695 = vld [vmem:[#allocation7 + $0x34] sm:$0xf]
        %v696 = vld [vmem:[#allocation7 + $0x38] sm:$0xf]
        %v697 = vld [vmem:[#allocation7 + $0x3c] sm:$0xf]
        %v714 = vunpack.c.l.b16 %v682
        %v715 = vunpack.c.l.b16 %v683
        %v716 = vunpack.c.l.b16 %v684
        %v717 = vunpack.c.l.b16 %v685
        %v718 = vunpack.c.l.b16 %v686
        %v719 = vunpack.c.l.b16 %v687
        %v720 = vunpack.c.l.b16 %v688
        %v721 = vunpack.c.l.b16 %v689
        %v722 = vunpack.c.l.b16 %v690
        %v723 = vunpack.c.l.b16 %v691
        %v724 = vunpack.c.l.b16 %v692
        %v725 = vunpack.c.l.b16 %v693
        %v726 = vunpack.c.l.b16 %v694
        %v727 = vunpack.c.l.b16 %v695
        %v728 = vunpack.c.l.b16 %v696
        %v729 = vunpack.c.l.b16 %v697
        %v730 = vpack.c.b16 %v715, %v714
        %v731 = vpack.c.b16 %v717, %v716
        %v732 = vpack.c.b16 %v719, %v718
        %v733 = vpack.c.b16 %v721, %v720
        %v734 = vpack.c.b16 %v723, %v722
        %v735 = vpack.c.b16 %v725, %v724
        %v736 = vpack.c.b16 %v727, %v726
        %v737 = vpack.c.b16 %v729, %v728
        %746 = vmatprep.subr.bf16.mxu0 0
        %747 = vmatpush1.bf16.msra.mxu0 %v730
        %748 = vmatprep.subr.bf16.mxu0 0
        %749 = vmatpush1.bf16.msra.mxu0 %v731
        %750 = vmatprep.subr.bf16.mxu0 0
        %751 = vmatpush1.bf16.msra.mxu0 %v732
        %752 = vmatprep.subr.bf16.mxu0 0
        %753 = vmatpush1.bf16.msra.mxu0 %v733
        %754 = vmatprep.subr.bf16.mxu0 0
        %755 = vmatpush1.bf16.msra.mxu0 %v734
        %756 = vmatprep.subr.bf16.mxu0 0
        %757 = vmatpush1.bf16.msra.mxu0 %v735
        %758 = vmatprep.subr.bf16.mxu0 0
        %759 = vmatpush1.bf16.msra.mxu0 %v736
        %760 = vmatprep.subr.bf16.mxu0 0
        %761 = vmatpush1.bf16.msra.mxu0 %v737
        %762 = vmatprep.subr.bf16.mxu0 0
        %763 = vmatpush1.bf16.msra.mxu0 0
        %764 = vmatprep.subr.bf16.mxu0 0
        %765 = vmatpush1.bf16.msra.mxu0 0
        %766 = vmatprep.subr.bf16.mxu0 0
        %767 = vmatpush1.bf16.msra.mxu0 0
        %768 = vmatprep.subr.bf16.mxu0 0
        %769 = vmatpush1.bf16.msra.mxu0 0
        %770 = vmatprep.subr.bf16.mxu0 0
        %771 = vmatpush1.bf16.msra.mxu0 0
        %772 = vmatprep.subr.bf16.mxu0 0
        %773 = vmatpush1.bf16.msra.mxu0 0
        %774 = vmatprep.subr.bf16.mxu0 0
        %775 = vmatpush1.bf16.msra.mxu0 0
        %776 = vmatprep.subr.bf16.mxu0 0
        %777 = vmatpush1.bf16.msra.mxu0 0
        %778 = vmatprep.mubr.bf16.mxu0 0
        %779 = vmatmul.mubr.bf16.gmra.mrb[0].mxu0 %v572
        %v780 = vpop.f32.mrb[0].mxu0
        %v781 = vadd.f32 0.0, %v780
        %v782 = vpop.f32.mrb[0].mxu0
        %v783 = vpop.f32.mrb[0].mxu0
        %v784 = vpop.f32.mrb[0].mxu0
        %785 = vdwg.mxu0
        %v786 = vld [vmem:[#allocation8] sm:$0xf]
        %v787 = vld [vmem:[#allocation8 + $0x4] sm:$0xf]
        %v788 = vld [vmem:[#allocation8 + $0x8] sm:$0xf]
        %v789 = vld [vmem:[#allocation8 + $0xc] sm:$0xf]
        %v790 = vld [vmem:[#allocation8 + $0x10] sm:$0xf]
        %v791 = vld [vmem:[#allocation8 + $0x14] sm:$0xf]
        %v792 = vld [vmem:[#allocation8 + $0x18] sm:$0xf]
        %v793 = vld [vmem:[#allocation8 + $0x1c] sm:$0xf]
        %v794 = vld [vmem:[#allocation8 + $0x20] sm:$0xf]
        %v795 = vld [vmem:[#allocation8 + $0x24] sm:$0xf]
        %v796 = vld [vmem:[#allocation8 + $0x28] sm:$0xf]
        %v797 = vld [vmem:[#allocation8 + $0x2c] sm:$0xf]
        %v798 = vld [vmem:[#allocation8 + $0x30] sm:$0xf]
        %v799 = vld [vmem:[#allocation8 + $0x34] sm:$0xf]
        %v800 = vld [vmem:[#allocation8 + $0x38] sm:$0xf]
        %v801 = vld [vmem:[#allocation8 + $0x3c] sm:$0xf]
        %v818 = vunpack.c.l.b16 %v786
        %v819 = vunpack.c.l.b16 %v787
        %v820 = vunpack.c.l.b16 %v788
        %v821 = vunpack.c.l.b16 %v789
        %v822 = vunpack.c.l.b16 %v790
        %v823 = vunpack.c.l.b16 %v791
        %v824 = vunpack.c.l.b16 %v792
        %v825 = vunpack.c.l.b16 %v793
        %v826 = vunpack.c.l.b16 %v794
        %v827 = vunpack.c.l.b16 %v795
        %v828 = vunpack.c.l.b16 %v796
        %v829 = vunpack.c.l.b16 %v797
        %v830 = vunpack.c.l.b16 %v798
        %v831 = vunpack.c.l.b16 %v799
        %v832 = vunpack.c.l.b16 %v800
        %v833 = vunpack.c.l.b16 %v801
        %v834 = vpack.c.b16 %v819, %v818
        %v835 = vpack.c.b16 %v821, %v820
        %v836 = vpack.c.b16 %v823, %v822
        %v837 = vpack.c.b16 %v825, %v824
        %v838 = vpack.c.b16 %v827, %v826
        %v839 = vpack.c.b16 %v829, %v828
        %v840 = vpack.c.b16 %v831, %v830
        %v841 = vpack.c.b16 %v833, %v832
        %850 = vmatprep.subr.bf16.mxu0 0
        %851 = vmatpush1.bf16.msra.mxu0 %v834
        %852 = vmatprep.subr.bf16.mxu0 0
        %853 = vmatpush1.bf16.msra.mxu0 %v835
        %854 = vmatprep.subr.bf16.mxu0 0
        %855 = vmatpush1.bf16.msra.mxu0 %v836
        %856 = vmatprep.subr.bf16.mxu0 0
        %857 = vmatpush1.bf16.msra.mxu0 %v837
        %858 = vmatprep.subr.bf16.mxu0 0
        %859 = vmatpush1.bf16.msra.mxu0 %v838
        %860 = vmatprep.subr.bf16.mxu0 0
        %861 = vmatpush1.bf16.msra.mxu0 %v839
        %862 = vmatprep.subr.bf16.mxu0 0
        %863 = vmatpush1.bf16.msra.mxu0 %v840
        %864 = vmatprep.subr.bf16.mxu0 0
        %865 = vmatpush1.bf16.msra.mxu0 %v841
        %866 = vmatprep.subr.bf16.mxu0 0
        %867 = vmatpush1.bf16.msra.mxu0 0
        %868 = vmatprep.subr.bf16.mxu0 0
        %869 = vmatpush1.bf16.msra.mxu0 0
        %870 = vmatprep.subr.bf16.mxu0 0
        %871 = vmatpush1.bf16.msra.mxu0 0
        %872 = vmatprep.subr.bf16.mxu0 0
        %873 = vmatpush1.bf16.msra.mxu0 0
        %874 = vmatprep.subr.bf16.mxu0 0
        %875 = vmatpush1.bf16.msra.mxu0 0
        %876 = vmatprep.subr.bf16.mxu0 0
        %877 = vmatpush1.bf16.msra.mxu0 0
        %878 = vmatprep.subr.bf16.mxu0 0
        %879 = vmatpush1.bf16.msra.mxu0 0
        %880 = vmatprep.subr.bf16.mxu0 0
        %881 = vmatpush1.bf16.msra.mxu0 0
        %882 = vmatprep.mubr.bf16.mxu0 0
        %883 = vmatmul.mubr.bf16.gmra.mrb[0].mxu0 %v572
        %v884 = vpop.f32.mrb[0].mxu0
        %v885 = vadd.f32 0.0, %v884
        %v886 = vpop.f32.mrb[0].mxu0
        %v887 = vpop.f32.mrb[0].mxu0
        %v888 = vpop.f32.mrb[0].mxu0
        %889 = vdwg.mxu0
        %890 = vxpose.xlu0.b32.start [1/16] %v677, 128
        %891 = vxpose.xlu0.b32.cont [2/16] 0.0, 128
        %892 = vxpose.xlu0.b32.cont [3/16] 0.0, 128
        %893 = vxpose.xlu0.b32.cont [4/16] 0.0, 128
        %894 = vxpose.xlu0.b32.cont [5/16] 0.0, 128
        %895 = vxpose.xlu0.b32.cont [6/16] 0.0, 128
        %896 = vxpose.xlu0.b32.cont [7/16] 0.0, 128
        %897 = vxpose.xlu0.b32.cont [8/16] 0.0, 128
        %898 = vxpose.xlu0.b32.cont [9/16] 0.0, 128
        %899 = vxpose.xlu0.b32.cont [10/16] 0.0, 128
        %900 = vxpose.xlu0.b32.cont [11/16] 0.0, 128
        %901 = vxpose.xlu0.b32.cont [12/16] 0.0, 128
        %902 = vxpose.xlu0.b32.cont [13/16] 0.0, 128
        %903 = vxpose.xlu0.b32.cont [14/16] 0.0, 128
        %904 = vxpose.xlu0.b32.cont [15/16] 0.0, 128
        %905 = vxpose.xlu0.b32.end [16/16] 0.0, 128
        %v906 = vpop.trf.xlu0
        %v907 = vpop.trf.xlu0
        %v908 = vpop.trf.xlu0
        %v909 = vpop.trf.xlu0
        %v910 = vpop.trf.xlu0
        %v911 = vpop.trf.xlu0
        %v912 = vpop.trf.xlu0
        %v913 = vpop.trf.xlu0
        %v914 = vpop.trf.xlu0
        %v915 = vpop.trf.xlu0
        %v916 = vpop.trf.xlu0
        %v917 = vpop.trf.xlu0
        %v918 = vpop.trf.xlu0
        %v919 = vpop.trf.xlu0
        %v920 = vpop.trf.xlu0
        %v921 = vpop.trf.xlu0
        %v922 = vpack.c.bf16 %v906, %v906
        %v923 = vpack.c.bf16 %v907, %v907
        %v924 = vpack.c.bf16 %v908, %v908
        %v925 = vpack.c.bf16 %v909, %v909
        %v926 = vpack.c.bf16 %v910, %v910
        %v927 = vpack.c.bf16 %v911, %v911
        %v928 = vpack.c.bf16 %v912, %v912
        %v929 = vpack.c.bf16 %v913, %v913
        %v930 = vpack.c.bf16 %v914, %v914
        %v931 = vpack.c.bf16 %v915, %v915
        %v932 = vpack.c.bf16 %v916, %v916
        %v933 = vpack.c.bf16 %v917, %v917
        %v934 = vpack.c.bf16 %v918, %v918
        %v935 = vpack.c.bf16 %v919, %v919
        %v936 = vpack.c.bf16 %v920, %v920
        %v937 = vpack.c.bf16 %v921, %v921
        %938 = vxpose.xlu0.b32.start [1/16] %v781, 128
        %939 = vxpose.xlu0.b32.cont [2/16] 0.0, 128
        %940 = vxpose.xlu0.b32.cont [3/16] 0.0, 128
        %941 = vxpose.xlu0.b32.cont [4/16] 0.0, 128
        %942 = vxpose.xlu0.b32.cont [5/16] 0.0, 128
        %943 = vxpose.xlu0.b32.cont [6/16] 0.0, 128
        %944 = vxpose.xlu0.b32.cont [7/16] 0.0, 128
        %945 = vxpose.xlu0.b32.cont [8/16] 0.0, 128
        %946 = vxpose.xlu0.b32.cont [9/16] 0.0, 128
        %947 = vxpose.xlu0.b32.cont [10/16] 0.0, 128
        %948 = vxpose.xlu0.b32.cont [11/16] 0.0, 128
        %949 = vxpose.xlu0.b32.cont [12/16] 0.0, 128
        %950 = vxpose.xlu0.b32.cont [13/16] 0.0, 128
        %951 = vxpose.xlu0.b32.cont [14/16] 0.0, 128
        %952 = vxpose.xlu0.b32.cont [15/16] 0.0, 128
        %953 = vxpose.xlu0.b32.end [16/16] 0.0, 128
        %v954 = vpop.trf.xlu0
        %v955 = vpop.trf.xlu0
        %v956 = vpop.trf.xlu0
        %v957 = vpop.trf.xlu0
        %v958 = vpop.trf.xlu0
        %v959 = vpop.trf.xlu0
        %v960 = vpop.trf.xlu0
        %v961 = vpop.trf.xlu0
        %v962 = vpop.trf.xlu0
        %v963 = vpop.trf.xlu0
        %v964 = vpop.trf.xlu0
        %v965 = vpop.trf.xlu0
        %v966 = vpop.trf.xlu0
        %v967 = vpop.trf.xlu0
        %v968 = vpop.trf.xlu0
        %v969 = vpop.trf.xlu0
        %v970 = vpack.c.bf16 %v954, %v954
        %v971 = vpack.c.bf16 %v955, %v955
        %v972 = vpack.c.bf16 %v956, %v956
        %v973 = vpack.c.bf16 %v957, %v957
        %v974 = vpack.c.bf16 %v958, %v958
        %v975 = vpack.c.bf16 %v959, %v959
        %v976 = vpack.c.bf16 %v960, %v960
        %v977 = vpack.c.bf16 %v961, %v961
        %v978 = vpack.c.bf16 %v962, %v962
        %v979 = vpack.c.bf16 %v963, %v963
        %v980 = vpack.c.bf16 %v964, %v964
        %v981 = vpack.c.bf16 %v965, %v965
        %v982 = vpack.c.bf16 %v966, %v966
        %v983 = vpack.c.bf16 %v967, %v967
        %v984 = vpack.c.bf16 %v968, %v968
        %v985 = vpack.c.bf16 %v969, %v969
        %986 = vxpose.xlu0.b32.start [1/16] %v885, 128
        %987 = vxpose.xlu0.b32.cont [2/16] 0.0, 128
        %988 = vxpose.xlu0.b32.cont [3/16] 0.0, 128
        %989 = vxpose.xlu0.b32.cont [4/16] 0.0, 128
        %990 = vxpose.xlu0.b32.cont [5/16] 0.0, 128
        %991 = vxpose.xlu0.b32.cont [6/16] 0.0, 128
        %992 = vxpose.xlu0.b32.cont [7/16] 0.0, 128
        %993 = vxpose.xlu0.b32.cont [8/16] 0.0, 128
        %994 = vxpose.xlu0.b32.cont [9/16] 0.0, 128
        %995 = vxpose.xlu0.b32.cont [10/16] 0.0, 128
        %996 = vxpose.xlu0.b32.cont [11/16] 0.0, 128
        %997 = vxpose.xlu0.b32.cont [12/16] 0.0, 128
        %998 = vxpose.xlu0.b32.cont [13/16] 0.0, 128
        %999 = vxpose.xlu0.b32.cont [14/16] 0.0, 128
        %1000 = vxpose.xlu0.b32.cont [15/16] 0.0, 128
        %1001 = vxpose.xlu0.b32.end [16/16] 0.0, 128
        %v1002 = vpop.trf.xlu0
        %v1003 = vpop.trf.xlu0
        %v1004 = vpop.trf.xlu0
        %v1005 = vpop.trf.xlu0
        %v1006 = vpop.trf.xlu0
        %v1007 = vpop.trf.xlu0
        %v1008 = vpop.trf.xlu0
        %v1009 = vpop.trf.xlu0
        %v1010 = vpop.trf.xlu0
        %v1011 = vpop.trf.xlu0
        %v1012 = vpop.trf.xlu0
        %v1013 = vpop.trf.xlu0
        %v1014 = vpop.trf.xlu0
        %v1015 = vpop.trf.xlu0
        %v1016 = vpop.trf.xlu0
        %v1017 = vpop.trf.xlu0
        %v1018 = vpack.c.bf16 %v1002, %v1002
        %v1019 = vpack.c.bf16 %v1003, %v1003
        %v1020 = vpack.c.bf16 %v1004, %v1004
        %v1021 = vpack.c.bf16 %v1005, %v1005
        %v1022 = vpack.c.bf16 %v1006, %v1006
        %v1023 = vpack.c.bf16 %v1007, %v1007
        %v1024 = vpack.c.bf16 %v1008, %v1008
        %v1025 = vpack.c.bf16 %v1009, %v1009
        %v1026 = vpack.c.bf16 %v1010, %v1010
        %v1027 = vpack.c.bf16 %v1011, %v1011
        %v1028 = vpack.c.bf16 %v1012, %v1012
        %v1029 = vpack.c.bf16 %v1013, %v1013
        %v1030 = vpack.c.bf16 %v1014, %v1014
        %v1031 = vpack.c.bf16 %v1015, %v1015
        %v1032 = vpack.c.bf16 %v1016, %v1016
        %v1033 = vpack.c.bf16 %v1017, %v1017
        %1034 = vxpose.xlu0.c.b16.start [1/8] %v922, 128
        %1035 = vxpose.xlu0.c.b16.cont [2/8] 0, 128
        %1036 = vxpose.xlu0.c.b16.cont [3/8] 0, 128
        %1037 = vxpose.xlu0.c.b16.cont [4/8] 0, 128
        %1038 = vxpose.xlu0.c.b16.cont [5/8] 0, 128
        %1039 = vxpose.xlu0.c.b16.cont [6/8] 0, 128
        %1040 = vxpose.xlu0.c.b16.cont [7/8] 0, 128
        %1041 = vxpose.xlu0.c.b16.end [8/8] 0, 128
        %v1042 = vpop.trf.xlu0
        %v1043 = vpop.trf.xlu0
        %v1044 = vpop.trf.xlu0
        %v1045 = vpop.trf.xlu0
        %v1046 = vpop.trf.xlu0
        %v1047 = vpop.trf.xlu0
        %v1048 = vpop.trf.xlu0
        %v1049 = vpop.trf.xlu0
        %vm1050 = vcmask 64512
        %v1052 = vsel %vm1050, %v1042, 0
        %vm1054 = vcmask 1043456
        %v1056 = vsel %vm1054, %v970, 0
        %1058 = vmatprep.subr.bf16.mxu0 0
        %1059 = vmatpush1.bf16.msra.mxu0 %v1056
        %1060 = vmatprep.subr.bf16.mxu0 0
        %1061 = vmatpush1.bf16.msra.mxu0 0
        %1062 = vmatprep.subr.bf16.mxu0 0
        %1063 = vmatpush1.bf16.msra.mxu0 0
        %1064 = vmatprep.subr.bf16.mxu0 0
        %1065 = vmatpush1.bf16.msra.mxu0 0
        %1066 = vmatprep.subr.bf16.mxu0 0
        %1067 = vmatpush1.bf16.msra.mxu0 0
        %1068 = vmatprep.subr.bf16.mxu0 0
        %1069 = vmatpush1.bf16.msra.mxu0 0
        %1070 = vmatprep.subr.bf16.mxu0 0
        %1071 = vmatpush1.bf16.msra.mxu0 0
        %1072 = vmatprep.subr.bf16.mxu0 0
        %1073 = vmatpush1.bf16.msra.mxu0 0
        %1074 = vmatprep.subr.bf16.mxu0 0
        %1075 = vmatpush1.bf16.msra.mxu0 0
        %1076 = vmatprep.subr.bf16.mxu0 0
        %1077 = vmatpush1.bf16.msra.mxu0 0
        %1078 = vmatprep.subr.bf16.mxu0 0
        %1079 = vmatpush1.bf16.msra.mxu0 0
        %1080 = vmatprep.subr.bf16.mxu0 0
        %1081 = vmatpush1.bf16.msra.mxu0 0
        %1082 = vmatprep.subr.bf16.mxu0 0
        %1083 = vmatpush1.bf16.msra.mxu0 0
        %1084 = vmatprep.subr.bf16.mxu0 0
        %1085 = vmatpush1.bf16.msra.mxu0 0
        %1086 = vmatprep.subr.bf16.mxu0 0
        %1087 = vmatpush1.bf16.msra.mxu0 0
        %1088 = vmatprep.subr.bf16.mxu0 0
        %1089 = vmatpush1.bf16.msra.mxu0 0
        %1090 = vmatprep.mubr.bf16.mxu0 0
        %1091 = vmatmul.mubr.bf16.gmra.mrb[0].mxu0 %v1052
        %v1092 = vpop.f32.mrb[0].mxu0
        %v1093 = vadd.f32 0.0, %v1092
        %v1094 = vpop.f32.mrb[0].mxu0
        %v1095 = vpop.f32.mrb[0].mxu0
        %v1096 = vpop.f32.mrb[0].mxu0
        %1097 = vdwg.mxu0
        %1098 = vxpose.xlu0.c.b16.start [1/8] %v923, 128
        %1099 = vxpose.xlu0.c.b16.cont [2/8] 0, 128
        %1100 = vxpose.xlu0.c.b16.cont [3/8] 0, 128
        %1101 = vxpose.xlu0.c.b16.cont [4/8] 0, 128
        %1102 = vxpose.xlu0.c.b16.cont [5/8] 0, 128
        %1103 = vxpose.xlu0.c.b16.cont [6/8] 0, 128
        %1104 = vxpose.xlu0.c.b16.cont [7/8] 0, 128
        %1105 = vxpose.xlu0.c.b16.end [8/8] 0, 128
        %v1106 = vpop.trf.xlu0
        %v1107 = vpop.trf.xlu0
        %v1108 = vpop.trf.xlu0
        %v1109 = vpop.trf.xlu0
        %v1110 = vpop.trf.xlu0
        %v1111 = vpop.trf.xlu0
        %v1112 = vpop.trf.xlu0
        %v1113 = vpop.trf.xlu0
        %v1115 = vsel %vm1050, %v1106, 0
        %v1118 = vsel %vm1054, %v971, 0
        %1120 = vmatprep.subr.bf16.mxu0 0
        %1121 = vmatpush1.bf16.msra.mxu0 %v1118
        %1122 = vmatprep.subr.bf16.mxu0 0
        %1123 = vmatpush1.bf16.msra.mxu0 0
        %1124 = vmatprep.subr.bf16.mxu0 0
        %1125 = vmatpush1.bf16.msra.mxu0 0
        %1126 = vmatprep.subr.bf16.mxu0 0
        %1127 = vmatpush1.bf16.msra.mxu0 0
        %1128 = vmatprep.subr.bf16.mxu0 0
        %1129 = vmatpush1.bf16.msra.mxu0 0
        %1130 = vmatprep.subr.bf16.mxu0 0
        %1131 = vmatpush1.bf16.msra.mxu0 0
        %1132 = vmatprep.subr.bf16.mxu0 0
        %1133 = vmatpush1.bf16.msra.mxu0 0
        %1134 = vmatprep.subr.bf16.mxu0 0
        %1135 = vmatpush1.bf16.msra.mxu0 0
        %1136 = vmatprep.subr.bf16.mxu0 0
        %1137 = vmatpush1.bf16.msra.mxu0 0
        %1138 = vmatprep.subr.bf16.mxu0 0
        %1139 = vmatpush1.bf16.msra.mxu0 0
        %1140 = vmatprep.subr.bf16.mxu0 0
        %1141 = vmatpush1.bf16.msra.mxu0 0
        %1142 = vmatprep.subr.bf16.mxu0 0
        %1143 = vmatpush1.bf16.msra.mxu0 0
        %1144 = vmatprep.subr.bf16.mxu0 0
        %1145 = vmatpush1.bf16.msra.mxu0 0
        %1146 = vmatprep.subr.bf16.mxu0 0
        %1147 = vmatpush1.bf16.msra.mxu0 0
        %1148 = vmatprep.subr.bf16.mxu0 0
        %1149 = vmatpush1.bf16.msra.mxu0 0
        %1150 = vmatprep.subr.bf16.mxu0 0
        %1151 = vmatpush1.bf16.msra.mxu0 0
        %1152 = vmatprep.mubr.bf16.mxu0 0
        %1153 = vmatmul.mubr.bf16.gmra.mrb[0].mxu0 %v1115
        %v1154 = vpop.f32.mrb[0].mxu0
        %v1155 = vadd.f32 0.0, %v1154
        %v1156 = vpop.f32.mrb[0].mxu0
        %v1157 = vpop.f32.mrb[0].mxu0
        %v1158 = vpop.f32.mrb[0].mxu0
        %1159 = vdwg.mxu0
        %1160 = vxpose.xlu0.c.b16.start [1/8] %v924, 128
        %1161 = vxpose.xlu0.c.b16.cont [2/8] 0, 128
        %1162 = vxpose.xlu0.c.b16.cont [3/8] 0, 128
        %1163 = vxpose.xlu0.c.b16.cont [4/8] 0, 128
        %1164 = vxpose.xlu0.c.b16.cont [5/8] 0, 128
        %1165 = vxpose.xlu0.c.b16.cont [6/8] 0, 128
        %1166 = vxpose.xlu0.c.b16.cont [7/8] 0, 128
        %1167 = vxpose.xlu0.c.b16.end [8/8] 0, 128
        %v1168 = vpop.trf.xlu0
        %v1169 = vpop.trf.xlu0
        %v1170 = vpop.trf.xlu0
        %v1171 = vpop.trf.xlu0
        %v1172 = vpop.trf.xlu0
        %v1173 = vpop.trf.xlu0
        %v1174 = vpop.trf.xlu0
        %v1175 = vpop.trf.xlu0
        %v1177 = vsel %vm1050, %v1168, 0
        %v1180 = vsel %vm1054, %v972, 0
        %1182 = vmatprep.subr.bf16.mxu0 0
        %1183 = vmatpush1.bf16.msra.mxu0 %v1180
        %1184 = vmatprep.subr.bf16.mxu0 0
        %1185 = vmatpush1.bf16.msra.mxu0 0
        %1186 = vmatprep.subr.bf16.mxu0 0
        %1187 = vmatpush1.bf16.msra.mxu0 0
        %1188 = vmatprep.subr.bf16.mxu0 0
        %1189 = vmatpush1.bf16.msra.mxu0 0
        %1190 = vmatprep.subr.bf16.mxu0 0
        %1191 = vmatpush1.bf16.msra.mxu0 0
        %1192 = vmatprep.subr.bf16.mxu0 0
        %1193 = vmatpush1.bf16.msra.mxu0 0
        %1194 = vmatprep.subr.bf16.mxu0 0
        %1195 = vmatpush1.bf16.msra.mxu0 0
        %1196 = vmatprep.subr.bf16.mxu0 0
        %1197 = vmatpush1.bf16.msra.mxu0 0
        %1198 = vmatprep.subr.bf16.mxu0 0
        %1199 = vmatpush1.bf16.msra.mxu0 0
        %1200 = vmatprep.subr.bf16.mxu0 0
        %1201 = vmatpush1.bf16.msra.mxu0 0
        %1202 = vmatprep.subr.bf16.mxu0 0
        %1203 = vmatpush1.bf16.msra.mxu0 0
        %1204 = vmatprep.subr.bf16.mxu0 0
        %1205 = vmatpush1.bf16.msra.mxu0 0
        %1206 = vmatprep.subr.bf16.mxu0 0
        %1207 = vmatpush1.bf16.msra.mxu0 0
        %1208 = vmatprep.subr.bf16.mxu0 0
        %1209 = vmatpush1.bf16.msra.mxu0 0
        %1210 = vmatprep.subr.bf16.mxu0 0
        %1211 = vmatpush1.bf16.msra.mxu0 0
        %1212 = vmatprep.subr.bf16.mxu0 0
        %1213 = vmatpush1.bf16.msra.mxu0 0
        %1214 = vmatprep.mubr.bf16.mxu0 0
        %1215 = vmatmul.mubr.bf16.gmra.mrb[0].mxu0 %v1177
        %v1216 = vpop.f32.mrb[0].mxu0
        %v1217 = vadd.f32 0.0, %v1216
        %v1218 = vpop.f32.mrb[0].mxu0
        %v1219 = vpop.f32.mrb[0].mxu0
        %v1220 = vpop.f32.mrb[0].mxu0
        %1221 = vdwg.mxu0
        %1222 = vxpose.xlu0.c.b16.start [1/8] %v925, 128
        %1223 = vxpose.xlu0.c.b16.cont [2/8] 0, 128
        %1224 = vxpose.xlu0.c.b16.cont [3/8] 0, 128
        %1225 = vxpose.xlu0.c.b16.cont [4/8] 0, 128
        %1226 = vxpose.xlu0.c.b16.cont [5/8] 0, 128
        %1227 = vxpose.xlu0.c.b16.cont [6/8] 0, 128
        %1228 = vxpose.xlu0.c.b16.cont [7/8] 0, 128
        %1229 = vxpose.xlu0.c.b16.end [8/8] 0, 128
        %v1230 = vpop.trf.xlu0
        %v1231 = vpop.trf.xlu0
        %v1232 = vpop.trf.xlu0
        %v1233 = vpop.trf.xlu0
        %v1234 = vpop.trf.xlu0
        %v1235 = vpop.trf.xlu0
        %v1236 = vpop.trf.xlu0
        %v1237 = vpop.trf.xlu0
        %v1239 = vsel %vm1050, %v1230, 0
        %v1242 = vsel %vm1054, %v973, 0
        %1244 = vmatprep.subr.bf16.mxu0 0
        %1245 = vmatpush1.bf16.msra.mxu0 %v1242
        %1246 = vmatprep.subr.bf16.mxu0 0
        %1247 = vmatpush1.bf16.msra.mxu0 0
        %1248 = vmatprep.subr.bf16.mxu0 0
        %1249 = vmatpush1.bf16.msra.mxu0 0
        %1250 = vmatprep.subr.bf16.mxu0 0
        %1251 = vmatpush1.bf16.msra.mxu0 0
        %1252 = vmatprep.subr.bf16.mxu0 0
        %1253 = vmatpush1.bf16.msra.mxu0 0
        %1254 = vmatprep.subr.bf16.mxu0 0
        %1255 = vmatpush1.bf16.msra.mxu0 0
        %1256 = vmatprep.subr.bf16.mxu0 0
        %1257 = vmatpush1.bf16.msra.mxu0 0
        %1258 = vmatprep.subr.bf16.mxu0 0
        %1259 = vmatpush1.bf16.msra.mxu0 0
        %1260 = vmatprep.subr.bf16.mxu0 0
        %1261 = vmatpush1.bf16.msra.mxu0 0
        %1262 = vmatprep.subr.bf16.mxu0 0
        %1263 = vmatpush1.bf16.msra.mxu0 0
        %1264 = vmatprep.subr.bf16.mxu0 0
        %1265 = vmatpush1.bf16.msra.mxu0 0
        %1266 = vmatprep.subr.bf16.mxu0 0
        %1267 = vmatpush1.bf16.msra.mxu0 0
        %1268 = vmatprep.subr.bf16.mxu0 0
        %1269 = vmatpush1.bf16.msra.mxu0 0
        %1270 = vmatprep.subr.bf16.mxu0 0
        %1271 = vmatpush1.bf16.msra.mxu0 0
        %1272 = vmatprep.subr.bf16.mxu0 0
        %1273 = vmatpush1.bf16.msra.mxu0 0
        %1274 = vmatprep.subr.bf16.mxu0 0
        %1275 = vmatpush1.bf16.msra.mxu0 0
        %1276 = vmatprep.mubr.bf16.mxu0 0
        %1277 = vmatmul.mubr.bf16.gmra.mrb[0].mxu0 %v1239
        %v1278 = vpop.f32.mrb[0].mxu0
        %v1279 = vadd.f32 0.0, %v1278
        %v1280 = vpop.f32.mrb[0].mxu0
        %v1281 = vpop.f32.mrb[0].mxu0
        %v1282 = vpop.f32.mrb[0].mxu0
        %1283 = vdwg.mxu0
        %1284 = vxpose.xlu0.c.b16.start [1/8] %v926, 128
        %1285 = vxpose.xlu0.c.b16.cont [2/8] 0, 128
        %1286 = vxpose.xlu0.c.b16.cont [3/8] 0, 128
        %1287 = vxpose.xlu0.c.b16.cont [4/8] 0, 128
        %1288 = vxpose.xlu0.c.b16.cont [5/8] 0, 128
        %1289 = vxpose.xlu0.c.b16.cont [6/8] 0, 128
        %1290 = vxpose.xlu0.c.b16.cont [7/8] 0, 128
        %1291 = vxpose.xlu0.c.b16.end [8/8] 0, 128
        %v1292 = vpop.trf.xlu0
        %v1293 = vpop.trf.xlu0
        %v1294 = vpop.trf.xlu0
        %v1295 = vpop.trf.xlu0
        %v1296 = vpop.trf.xlu0
        %v1297 = vpop.trf.xlu0
        %v1298 = vpop.trf.xlu0
        %v1299 = vpop.trf.xlu0
        %v1301 = vsel %vm1050, %v1292, 0
        %v1304 = vsel %vm1054, %v974, 0
        %1306 = vmatprep.subr.bf16.mxu0 0
        %1307 = vmatpush1.bf16.msra.mxu0 %v1304
        %1308 = vmatprep.subr.bf16.mxu0 0
        %1309 = vmatpush1.bf16.msra.mxu0 0
        %1310 = vmatprep.subr.bf16.mxu0 0
        %1311 = vmatpush1.bf16.msra.mxu0 0
        %1312 = vmatprep.subr.bf16.mxu0 0
        %1313 = vmatpush1.bf16.msra.mxu0 0
        %1314 = vmatprep.subr.bf16.mxu0 0
        %1315 = vmatpush1.bf16.msra.mxu0 0
        %1316 = vmatprep.subr.bf16.mxu0 0
        %1317 = vmatpush1.bf16.msra.mxu0 0
        %1318 = vmatprep.subr.bf16.mxu0 0
        %1319 = vmatpush1.bf16.msra.mxu0 0
        %1320 = vmatprep.subr.bf16.mxu0 0
        %1321 = vmatpush1.bf16.msra.mxu0 0
        %1322 = vmatprep.subr.bf16.mxu0 0
        %1323 = vmatpush1.bf16.msra.mxu0 0
        %1324 = vmatprep.subr.bf16.mxu0 0
        %1325 = vmatpush1.bf16.msra.mxu0 0
        %1326 = vmatprep.subr.bf16.mxu0 0
        %1327 = vmatpush1.bf16.msra.mxu0 0
        %1328 = vmatprep.subr.bf16.mxu0 0
        %1329 = vmatpush1.bf16.msra.mxu0 0
        %1330 = vmatprep.subr.bf16.mxu0 0
        %1331 = vmatpush1.bf16.msra.mxu0 0
        %1332 = vmatprep.subr.bf16.mxu0 0
        %1333 = vmatpush1.bf16.msra.mxu0 0
        %1334 = vmatprep.subr.bf16.mxu0 0
        %1335 = vmatpush1.bf16.msra.mxu0 0
        %1336 = vmatprep.subr.bf16.mxu0 0
        %1337 = vmatpush1.bf16.msra.mxu0 0
        %1338 = vmatprep.mubr.bf16.mxu0 0
        %1339 = vmatmul.mubr.bf16.gmra.mrb[0].mxu0 %v1301
        %v1340 = vpop.f32.mrb[0].mxu0
        %v1341 = vadd.f32 0.0, %v1340
        %v1342 = vpop.f32.mrb[0].mxu0
        %v1343 = vpop.f32.mrb[0].mxu0
        %v1344 = vpop.f32.mrb[0].mxu0
        %1345 = vdwg.mxu0
        %1346 = vxpose.xlu0.c.b16.start [1/8] %v927, 128
        %1347 = vxpose.xlu0.c.b16.cont [2/8] 0, 128
        %1348 = vxpose.xlu0.c.b16.cont [3/8] 0, 128
        %1349 = vxpose.xlu0.c.b16.cont [4/8] 0, 128
        %1350 = vxpose.xlu0.c.b16.cont [5/8] 0, 128
        %1351 = vxpose.xlu0.c.b16.cont [6/8] 0, 128
        %1352 = vxpose.xlu0.c.b16.cont [7/8] 0, 128
        %1353 = vxpose.xlu0.c.b16.end [8/8] 0, 128
        %v1354 = vpop.trf.xlu0
        %v1355 = vpop.trf.xlu0
        %v1356 = vpop.trf.xlu0
        %v1357 = vpop.trf.xlu0
        %v1358 = vpop.trf.xlu0
        %v1359 = vpop.trf.xlu0
        %v1360 = vpop.trf.xlu0
        %v1361 = vpop.trf.xlu0
        %v1363 = vsel %vm1050, %v1354, 0
        %v1366 = vsel %vm1054, %v975, 0
        %1368 = vmatprep.subr.bf16.mxu0 0
        %1369 = vmatpush1.bf16.msra.mxu0 %v1366
        %1370 = vmatprep.subr.bf16.mxu0 0
        %1371 = vmatpush1.bf16.msra.mxu0 0
        %1372 = vmatprep.subr.bf16.mxu0 0
        %1373 = vmatpush1.bf16.msra.mxu0 0
        %1374 = vmatprep.subr.bf16.mxu0 0
        %1375 = vmatpush1.bf16.msra.mxu0 0
        %1376 = vmatprep.subr.bf16.mxu0 0
        %1377 = vmatpush1.bf16.msra.mxu0 0
        %1378 = vmatprep.subr.bf16.mxu0 0
        %1379 = vmatpush1.bf16.msra.mxu0 0
        %1380 = vmatprep.subr.bf16.mxu0 0
        %1381 = vmatpush1.bf16.msra.mxu0 0
        %1382 = vmatprep.subr.bf16.mxu0 0
        %1383 = vmatpush1.bf16.msra.mxu0 0
        %1384 = vmatprep.subr.bf16.mxu0 0
        %1385 = vmatpush1.bf16.msra.mxu0 0
        %1386 = vmatprep.subr.bf16.mxu0 0
        %1387 = vmatpush1.bf16.msra.mxu0 0
        %1388 = vmatprep.subr.bf16.mxu0 0
        %1389 = vmatpush1.bf16.msra.mxu0 0
        %1390 = vmatprep.subr.bf16.mxu0 0
        %1391 = vmatpush1.bf16.msra.mxu0 0
        %1392 = vmatprep.subr.bf16.mxu0 0
        %1393 = vmatpush1.bf16.msra.mxu0 0
        %1394 = vmatprep.subr.bf16.mxu0 0
        %1395 = vmatpush1.bf16.msra.mxu0 0
        %1396 = vmatprep.subr.bf16.mxu0 0
        %1397 = vmatpush1.bf16.msra.mxu0 0
        %1398 = vmatprep.subr.bf16.mxu0 0
        %1399 = vmatpush1.bf16.msra.mxu0 0
        %1400 = vmatprep.mubr.bf16.mxu0 0
        %1401 = vmatmul.mubr.bf16.gmra.mrb[0].mxu0 %v1363
        %v1402 = vpop.f32.mrb[0].mxu0
        %v1403 = vadd.f32 0.0, %v1402
        %v1404 = vpop.f32.mrb[0].mxu0
        %v1405 = vpop.f32.mrb[0].mxu0
        %v1406 = vpop.f32.mrb[0].mxu0
        %1407 = vdwg.mxu0
        %1408 = vxpose.xlu0.c.b16.start [1/8] %v928, 128
        %1409 = vxpose.xlu0.c.b16.cont [2/8] 0, 128
        %1410 = vxpose.xlu0.c.b16.cont [3/8] 0, 128
        %1411 = vxpose.xlu0.c.b16.cont [4/8] 0, 128
        %1412 = vxpose.xlu0.c.b16.cont [5/8] 0, 128
        %1413 = vxpose.xlu0.c.b16.cont [6/8] 0, 128
        %1414 = vxpose.xlu0.c.b16.cont [7/8] 0, 128
        %1415 = vxpose.xlu0.c.b16.end [8/8] 0, 128
        %v1416 = vpop.trf.xlu0
        %v1417 = vpop.trf.xlu0
        %v1418 = vpop.trf.xlu0
        %v1419 = vpop.trf.xlu0
        %v1420 = vpop.trf.xlu0
        %v1421 = vpop.trf.xlu0
        %v1422 = vpop.trf.xlu0
        %v1423 = vpop.trf.xlu0
        %v1425 = vsel %vm1050, %v1416, 0
        %v1428 = vsel %vm1054, %v976, 0
        %1430 = vmatprep.subr.bf16.mxu0 0
        %1431 = vmatpush1.bf16.msra.mxu0 %v1428
        %1432 = vmatprep.subr.bf16.mxu0 0
        %1433 = vmatpush1.bf16.msra.mxu0 0
        %1434 = vmatprep.subr.bf16.mxu0 0
        %1435 = vmatpush1.bf16.msra.mxu0 0
        %1436 = vmatprep.subr.bf16.mxu0 0
        %1437 = vmatpush1.bf16.msra.mxu0 0
        %1438 = vmatprep.subr.bf16.mxu0 0
        %1439 = vmatpush1.bf16.msra.mxu0 0
        %1440 = vmatprep.subr.bf16.mxu0 0
        %1441 = vmatpush1.bf16.msra.mxu0 0
        %1442 = vmatprep.subr.bf16.mxu0 0
        %1443 = vmatpush1.bf16.msra.mxu0 0
        %1444 = vmatprep.subr.bf16.mxu0 0
        %1445 = vmatpush1.bf16.msra.mxu0 0
        %1446 = vmatprep.subr.bf16.mxu0 0
        %1447 = vmatpush1.bf16.msra.mxu0 0
        %1448 = vmatprep.subr.bf16.mxu0 0
        %1449 = vmatpush1.bf16.msra.mxu0 0
        %1450 = vmatprep.subr.bf16.mxu0 0
        %1451 = vmatpush1.bf16.msra.mxu0 0
        %1452 = vmatprep.subr.bf16.mxu0 0
        %1453 = vmatpush1.bf16.msra.mxu0 0
        %1454 = vmatprep.subr.bf16.mxu0 0
        %1455 = vmatpush1.bf16.msra.mxu0 0
        %1456 = vmatprep.subr.bf16.mxu0 0
        %1457 = vmatpush1.bf16.msra.mxu0 0
        %1458 = vmatprep.subr.bf16.mxu0 0
        %1459 = vmatpush1.bf16.msra.mxu0 0
        %1460 = vmatprep.subr.bf16.mxu0 0
        %1461 = vmatpush1.bf16.msra.mxu0 0
        %1462 = vmatprep.mubr.bf16.mxu0 0
        %1463 = vmatmul.mubr.bf16.gmra.mrb[0].mxu0 %v1425
        %v1464 = vpop.f32.mrb[0].mxu0
        %v1465 = vadd.f32 0.0, %v1464
        %v1466 = vpop.f32.mrb[0].mxu0
        %v1467 = vpop.f32.mrb[0].mxu0
        %v1468 = vpop.f32.mrb[0].mxu0
        %1469 = vdwg.mxu0
        %1470 = vxpose.xlu0.c.b16.start [1/8] %v929, 128
        %1471 = vxpose.xlu0.c.b16.cont [2/8] 0, 128
        %1472 = vxpose.xlu0.c.b16.cont [3/8] 0, 128
        %1473 = vxpose.xlu0.c.b16.cont [4/8] 0, 128
        %1474 = vxpose.xlu0.c.b16.cont [5/8] 0, 128
        %1475 = vxpose.xlu0.c.b16.cont [6/8] 0, 128
        %1476 = vxpose.xlu0.c.b16.cont [7/8] 0, 128
        %1477 = vxpose.xlu0.c.b16.end [8/8] 0, 128
        %v1478 = vpop.trf.xlu0
        %v1479 = vpop.trf.xlu0
        %v1480 = vpop.trf.xlu0
        %v1481 = vpop.trf.xlu0
        %v1482 = vpop.trf.xlu0
        %v1483 = vpop.trf.xlu0
        %v1484 = vpop.trf.xlu0
        %v1485 = vpop.trf.xlu0
        %v1487 = vsel %vm1050, %v1478, 0
        %v1490 = vsel %vm1054, %v977, 0
        %1492 = vmatprep.subr.bf16.mxu0 0
        %1493 = vmatpush1.bf16.msra.mxu0 %v1490
        %1494 = vmatprep.subr.bf16.mxu0 0
        %1495 = vmatpush1.bf16.msra.mxu0 0
        %1496 = vmatprep.subr.bf16.mxu0 0
        %1497 = vmatpush1.bf16.msra.mxu0 0
        %1498 = vmatprep.subr.bf16.mxu0 0
        %1499 = vmatpush1.bf16.msra.mxu0 0
        %1500 = vmatprep.subr.bf16.mxu0 0
        %1501 = vmatpush1.bf16.msra.mxu0 0
        %1502 = vmatprep.subr.bf16.mxu0 0
        %1503 = vmatpush1.bf16.msra.mxu0 0
        %1504 = vmatprep.subr.bf16.mxu0 0
        %1505 = vmatpush1.bf16.msra.mxu0 0
        %1506 = vmatprep.subr.bf16.mxu0 0
        %1507 = vmatpush1.bf16.msra.mxu0 0
        %1508 = vmatprep.subr.bf16.mxu0 0
        %1509 = vmatpush1.bf16.msra.mxu0 0
        %1510 = vmatprep.subr.bf16.mxu0 0
        %1511 = vmatpush1.bf16.msra.mxu0 0
        %1512 = vmatprep.subr.bf16.mxu0 0
        %1513 = vmatpush1.bf16.msra.mxu0 0
        %1514 = vmatprep.subr.bf16.mxu0 0
        %1515 = vmatpush1.bf16.msra.mxu0 0
        %1516 = vmatprep.subr.bf16.mxu0 0
        %1517 = vmatpush1.bf16.msra.mxu0 0
        %1518 = vmatprep.subr.bf16.mxu0 0
        %1519 = vmatpush1.bf16.msra.mxu0 0
        %1520 = vmatprep.subr.bf16.mxu0 0
        %1521 = vmatpush1.bf16.msra.mxu0 0
        %1522 = vmatprep.subr.bf16.mxu0 0
        %1523 = vmatpush1.bf16.msra.mxu0 0
        %1524 = vmatprep.mubr.bf16.mxu0 0
        %1525 = vmatmul.mubr.bf16.gmra.mrb[0].mxu0 %v1487
        %v1526 = vpop.f32.mrb[0].mxu0
        %v1527 = vadd.f32 0.0, %v1526
        %v1528 = vpop.f32.mrb[0].mxu0
        %v1529 = vpop.f32.mrb[0].mxu0
        %v1530 = vpop.f32.mrb[0].mxu0
        %1531 = vdwg.mxu0
        %1532 = vxpose.xlu0.c.b16.start [1/8] %v930, 128
        %1533 = vxpose.xlu0.c.b16.cont [2/8] 0, 128
        %1534 = vxpose.xlu0.c.b16.cont [3/8] 0, 128
        %1535 = vxpose.xlu0.c.b16.cont [4/8] 0, 128
        %1536 = vxpose.xlu0.c.b16.cont [5/8] 0, 128
        %1537 = vxpose.xlu0.c.b16.cont [6/8] 0, 128
        %1538 = vxpose.xlu0.c.b16.cont [7/8] 0, 128
        %1539 = vxpose.xlu0.c.b16.end [8/8] 0, 128
        %v1540 = vpop.trf.xlu0
        %v1541 = vpop.trf.xlu0
        %v1542 = vpop.trf.xlu0
        %v1543 = vpop.trf.xlu0
        %v1544 = vpop.trf.xlu0
        %v1545 = vpop.trf.xlu0
        %v1546 = vpop.trf.xlu0
        %v1547 = vpop.trf.xlu0
        %v1549 = vsel %vm1050, %v1540, 0
        %v1552 = vsel %vm1054, %v978, 0
        %1554 = vmatprep.subr.bf16.mxu0 0
        %1555 = vmatpush1.bf16.msra.mxu0 %v1552
        %1556 = vmatprep.subr.bf16.mxu0 0
        %1557 = vmatpush1.bf16.msra.mxu0 0
        %1558 = vmatprep.subr.bf16.mxu0 0
        %1559 = vmatpush1.bf16.msra.mxu0 0
        %1560 = vmatprep.subr.bf16.mxu0 0
        %1561 = vmatpush1.bf16.msra.mxu0 0
        %1562 = vmatprep.subr.bf16.mxu0 0
        %1563 = vmatpush1.bf16.msra.mxu0 0
        %1564 = vmatprep.subr.bf16.mxu0 0
        %1565 = vmatpush1.bf16.msra.mxu0 0
        %1566 = vmatprep.subr.bf16.mxu0 0
        %1567 = vmatpush1.bf16.msra.mxu0 0
        %1568 = vmatprep.subr.bf16.mxu0 0
        %1569 = vmatpush1.bf16.msra.mxu0 0
        %1570 = vmatprep.subr.bf16.mxu0 0
        %1571 = vmatpush1.bf16.msra.mxu0 0
        %1572 = vmatprep.subr.bf16.mxu0 0
        %1573 = vmatpush1.bf16.msra.mxu0 0
        %1574 = vmatprep.subr.bf16.mxu0 0
        %1575 = vmatpush1.bf16.msra.mxu0 0
        %1576 = vmatprep.subr.bf16.mxu0 0
        %1577 = vmatpush1.bf16.msra.mxu0 0
        %1578 = vmatprep.subr.bf16.mxu0 0
        %1579 = vmatpush1.bf16.msra.mxu0 0
        %1580 = vmatprep.subr.bf16.mxu0 0
        %1581 = vmatpush1.bf16.msra.mxu0 0
        %1582 = vmatprep.subr.bf16.mxu0 0
        %1583 = vmatpush1.bf16.msra.mxu0 0
        %1584 = vmatprep.subr.bf16.mxu0 0
        %1585 = vmatpush1.bf16.msra.mxu0 0
        %1586 = vmatprep.mubr.bf16.mxu0 0
        %1587 = vmatmul.mubr.bf16.gmra.mrb[0].mxu0 %v1549
        %v1588 = vpop.f32.mrb[0].mxu0
        %v1589 = vadd.f32 0.0, %v1588
        %v1590 = vpop.f32.mrb[0].mxu0
        %v1591 = vpop.f32.mrb[0].mxu0
        %v1592 = vpop.f32.mrb[0].mxu0
        %1593 = vdwg.mxu0
        %1594 = vxpose.xlu0.c.b16.start [1/8] %v931, 128
        %1595 = vxpose.xlu0.c.b16.cont [2/8] 0, 128
        %1596 = vxpose.xlu0.c.b16.cont [3/8] 0, 128
        %1597 = vxpose.xlu0.c.b16.cont [4/8] 0, 128
        %1598 = vxpose.xlu0.c.b16.cont [5/8] 0, 128
        %1599 = vxpose.xlu0.c.b16.cont [6/8] 0, 128
        %1600 = vxpose.xlu0.c.b16.cont [7/8] 0, 128
        %1601 = vxpose.xlu0.c.b16.end [8/8] 0, 128
        %v1602 = vpop.trf.xlu0
        %v1603 = vpop.trf.xlu0
        %v1604 = vpop.trf.xlu0
        %v1605 = vpop.trf.xlu0
        %v1606 = vpop.trf.xlu0
        %v1607 = vpop.trf.xlu0
        %v1608 = vpop.trf.xlu0
        %v1609 = vpop.trf.xlu0
        %v1611 = vsel %vm1050, %v1602, 0
        %v1614 = vsel %vm1054, %v979, 0
        %1616 = vmatprep.subr.bf16.mxu0 0
        %1617 = vmatpush1.bf16.msra.mxu0 %v1614
        %1618 = vmatprep.subr.bf16.mxu0 0
        %1619 = vmatpush1.bf16.msra.mxu0 0
        %1620 = vmatprep.subr.bf16.mxu0 0
        %1621 = vmatpush1.bf16.msra.mxu0 0
        %1622 = vmatprep.subr.bf16.mxu0 0
        %1623 = vmatpush1.bf16.msra.mxu0 0
        %1624 = vmatprep.subr.bf16.mxu0 0
        %1625 = vmatpush1.bf16.msra.mxu0 0
        %1626 = vmatprep.subr.bf16.mxu0 0
        %1627 = vmatpush1.bf16.msra.mxu0 0
        %1628 = vmatprep.subr.bf16.mxu0 0
        %1629 = vmatpush1.bf16.msra.mxu0 0
        %1630 = vmatprep.subr.bf16.mxu0 0
        %1631 = vmatpush1.bf16.msra.mxu0 0
        %1632 = vmatprep.subr.bf16.mxu0 0
        %1633 = vmatpush1.bf16.msra.mxu0 0
        %1634 = vmatprep.subr.bf16.mxu0 0
        %1635 = vmatpush1.bf16.msra.mxu0 0
        %1636 = vmatprep.subr.bf16.mxu0 0
        %1637 = vmatpush1.bf16.msra.mxu0 0
        %1638 = vmatprep.subr.bf16.mxu0 0
        %1639 = vmatpush1.bf16.msra.mxu0 0
        %1640 = vmatprep.subr.bf16.mxu0 0
        %1641 = vmatpush1.bf16.msra.mxu0 0
        %1642 = vmatprep.subr.bf16.mxu0 0
        %1643 = vmatpush1.bf16.msra.mxu0 0
        %1644 = vmatprep.subr.bf16.mxu0 0
        %1645 = vmatpush1.bf16.msra.mxu0 0
        %1646 = vmatprep.subr.bf16.mxu0 0
        %1647 = vmatpush1.bf16.msra.mxu0 0
        %1648 = vmatprep.mubr.bf16.mxu0 0
        %1649 = vmatmul.mubr.bf16.gmra.mrb[0].mxu0 %v1611
        %v1650 = vpop.f32.mrb[0].mxu0
        %v1651 = vadd.f32 0.0, %v1650
        %v1652 = vpop.f32.mrb[0].mxu0
        %v1653 = vpop.f32.mrb[0].mxu0
        %v1654 = vpop.f32.mrb[0].mxu0
        %1655 = vdwg.mxu0
        %1656 = vxpose.xlu0.c.b16.start [1/8] %v932, 128
        %1657 = vxpose.xlu0.c.b16.cont [2/8] 0, 128
        %1658 = vxpose.xlu0.c.b16.cont [3/8] 0, 128
        %1659 = vxpose.xlu0.c.b16.cont [4/8] 0, 128
        %1660 = vxpose.xlu0.c.b16.cont [5/8] 0, 128
        %1661 = vxpose.xlu0.c.b16.cont [6/8] 0, 128
        %1662 = vxpose.xlu0.c.b16.cont [7/8] 0, 128
        %1663 = vxpose.xlu0.c.b16.end [8/8] 0, 128
        %v1664 = vpop.trf.xlu0
        %v1665 = vpop.trf.xlu0
        %v1666 = vpop.trf.xlu0
        %v1667 = vpop.trf.xlu0
        %v1668 = vpop.trf.xlu0
        %v1669 = vpop.trf.xlu0
        %v1670 = vpop.trf.xlu0
        %v1671 = vpop.trf.xlu0
        %v1673 = vsel %vm1050, %v1664, 0
        %v1676 = vsel %vm1054, %v980, 0
        %1678 = vmatprep.subr.bf16.mxu0 0
        %1679 = vmatpush1.bf16.msra.mxu0 %v1676
        %1680 = vmatprep.subr.bf16.mxu0 0
        %1681 = vmatpush1.bf16.msra.mxu0 0
        %1682 = vmatprep.subr.bf16.mxu0 0
        %1683 = vmatpush1.bf16.msra.mxu0 0
        %1684 = vmatprep.subr.bf16.mxu0 0
        %1685 = vmatpush1.bf16.msra.mxu0 0
        %1686 = vmatprep.subr.bf16.mxu0 0
        %1687 = vmatpush1.bf16.msra.mxu0 0
        %1688 = vmatprep.subr.bf16.mxu0 0
        %1689 = vmatpush1.bf16.msra.mxu0 0
        %1690 = vmatprep.subr.bf16.mxu0 0
        %1691 = vmatpush1.bf16.msra.mxu0 0
        %1692 = vmatprep.subr.bf16.mxu0 0
        %1693 = vmatpush1.bf16.msra.mxu0 0
        %1694 = vmatprep.subr.bf16.mxu0 0
        %1695 = vmatpush1.bf16.msra.mxu0 0
        %1696 = vmatprep.subr.bf16.mxu0 0
        %1697 = vmatpush1.bf16.msra.mxu0 0
        %1698 = vmatprep.subr.bf16.mxu0 0
        %1699 = vmatpush1.bf16.msra.mxu0 0
        %1700 = vmatprep.subr.bf16.mxu0 0
        %1701 = vmatpush1.bf16.msra.mxu0 0
        %1702 = vmatprep.subr.bf16.mxu0 0
        %1703 = vmatpush1.bf16.msra.mxu0 0
        %1704 = vmatprep.subr.bf16.mxu0 0
        %1705 = vmatpush1.bf16.msra.mxu0 0
        %1706 = vmatprep.subr.bf16.mxu0 0
        %1707 = vmatpush1.bf16.msra.mxu0 0
        %1708 = vmatprep.subr.bf16.mxu0 0
        %1709 = vmatpush1.bf16.msra.mxu0 0
        %1710 = vmatprep.mubr.bf16.mxu0 0
        %1711 = vmatmul.mubr.bf16.gmra.mrb[0].mxu0 %v1673
        %v1712 = vpop.f32.mrb[0].mxu0
        %v1713 = vadd.f32 0.0, %v1712
        %v1714 = vpop.f32.mrb[0].mxu0
        %v1715 = vpop.f32.mrb[0].mxu0
        %v1716 = vpop.f32.mrb[0].mxu0
        %1717 = vdwg.mxu0
        %1718 = vxpose.xlu0.c.b16.start [1/8] %v933, 128
        %1719 = vxpose.xlu0.c.b16.cont [2/8] 0, 128
        %1720 = vxpose.xlu0.c.b16.cont [3/8] 0, 128
        %1721 = vxpose.xlu0.c.b16.cont [4/8] 0, 128
        %1722 = vxpose.xlu0.c.b16.cont [5/8] 0, 128
        %1723 = vxpose.xlu0.c.b16.cont [6/8] 0, 128
        %1724 = vxpose.xlu0.c.b16.cont [7/8] 0, 128
        %1725 = vxpose.xlu0.c.b16.end [8/8] 0, 128
        %v1726 = vpop.trf.xlu0
        %v1727 = vpop.trf.xlu0
        %v1728 = vpop.trf.xlu0
        %v1729 = vpop.trf.xlu0
        %v1730 = vpop.trf.xlu0
        %v1731 = vpop.trf.xlu0
        %v1732 = vpop.trf.xlu0
        %v1733 = vpop.trf.xlu0
        %v1735 = vsel %vm1050, %v1726, 0
        %v1738 = vsel %vm1054, %v981, 0
        %1740 = vmatprep.subr.bf16.mxu0 0
        %1741 = vmatpush1.bf16.msra.mxu0 %v1738
        %1742 = vmatprep.subr.bf16.mxu0 0
        %1743 = vmatpush1.bf16.msra.mxu0 0
        %1744 = vmatprep.subr.bf16.mxu0 0
        %1745 = vmatpush1.bf16.msra.mxu0 0
        %1746 = vmatprep.subr.bf16.mxu0 0
        %1747 = vmatpush1.bf16.msra.mxu0 0
        %1748 = vmatprep.subr.bf16.mxu0 0
        %1749 = vmatpush1.bf16.msra.mxu0 0
        %1750 = vmatprep.subr.bf16.mxu0 0
        %1751 = vmatpush1.bf16.msra.mxu0 0
        %1752 = vmatprep.subr.bf16.mxu0 0
        %1753 = vmatpush1.bf16.msra.mxu0 0
        %1754 = vmatprep.subr.bf16.mxu0 0
        %1755 = vmatpush1.bf16.msra.mxu0 0
        %1756 = vmatprep.subr.bf16.mxu0 0
        %1757 = vmatpush1.bf16.msra.mxu0 0
        %1758 = vmatprep.subr.bf16.mxu0 0
        %1759 = vmatpush1.bf16.msra.mxu0 0
        %1760 = vmatprep.subr.bf16.mxu0 0
        %1761 = vmatpush1.bf16.msra.mxu0 0
        %1762 = vmatprep.subr.bf16.mxu0 0
        %1763 = vmatpush1.bf16.msra.mxu0 0
        %1764 = vmatprep.subr.bf16.mxu0 0
        %1765 = vmatpush1.bf16.msra.mxu0 0
        %1766 = vmatprep.subr.bf16.mxu0 0
        %1767 = vmatpush1.bf16.msra.mxu0 0
        %1768 = vmatprep.subr.bf16.mxu0 0
        %1769 = vmatpush1.bf16.msra.mxu0 0
        %1770 = vmatprep.subr.bf16.mxu0 0
        %1771 = vmatpush1.bf16.msra.mxu0 0
        %1772 = vmatprep.mubr.bf16.mxu0 0
        %1773 = vmatmul.mubr.bf16.gmra.mrb[0].mxu0 %v1735
        %v1774 = vpop.f32.mrb[0].mxu0
        %v1775 = vadd.f32 0.0, %v1774
        %v1776 = vpop.f32.mrb[0].mxu0
        %v1777 = vpop.f32.mrb[0].mxu0
        %v1778 = vpop.f32.mrb[0].mxu0
        %1779 = vdwg.mxu0
        %1780 = vxpose.xlu0.c.b16.start [1/8] %v934, 128
        %1781 = vxpose.xlu0.c.b16.cont [2/8] 0, 128
        %1782 = vxpose.xlu0.c.b16.cont [3/8] 0, 128
        %1783 = vxpose.xlu0.c.b16.cont [4/8] 0, 128
        %1784 = vxpose.xlu0.c.b16.cont [5/8] 0, 128
        %1785 = vxpose.xlu0.c.b16.cont [6/8] 0, 128
        %1786 = vxpose.xlu0.c.b16.cont [7/8] 0, 128
        %1787 = vxpose.xlu0.c.b16.end [8/8] 0, 128
        %v1788 = vpop.trf.xlu0
        %v1789 = vpop.trf.xlu0
        %v1790 = vpop.trf.xlu0
        %v1791 = vpop.trf.xlu0
        %v1792 = vpop.trf.xlu0
        %v1793 = vpop.trf.xlu0
        %v1794 = vpop.trf.xlu0
        %v1795 = vpop.trf.xlu0
        %v1797 = vsel %vm1050, %v1788, 0
        %v1800 = vsel %vm1054, %v982, 0
        %1802 = vmatprep.subr.bf16.mxu0 0
        %1803 = vmatpush1.bf16.msra.mxu0 %v1800
        %1804 = vmatprep.subr.bf16.mxu0 0
        %1805 = vmatpush1.bf16.msra.mxu0 0
        %1806 = vmatprep.subr.bf16.mxu0 0
        %1807 = vmatpush1.bf16.msra.mxu0 0
        %1808 = vmatprep.subr.bf16.mxu0 0
        %1809 = vmatpush1.bf16.msra.mxu0 0
        %1810 = vmatprep.subr.bf16.mxu0 0
        %1811 = vmatpush1.bf16.msra.mxu0 0
        %1812 = vmatprep.subr.bf16.mxu0 0
        %1813 = vmatpush1.bf16.msra.mxu0 0
        %1814 = vmatprep.subr.bf16.mxu0 0
        %1815 = vmatpush1.bf16.msra.mxu0 0
        %1816 = vmatprep.subr.bf16.mxu0 0
        %1817 = vmatpush1.bf16.msra.mxu0 0
        %1818 = vmatprep.subr.bf16.mxu0 0
        %1819 = vmatpush1.bf16.msra.mxu0 0
        %1820 = vmatprep.subr.bf16.mxu0 0
        %1821 = vmatpush1.bf16.msra.mxu0 0
        %1822 = vmatprep.subr.bf16.mxu0 0
        %1823 = vmatpush1.bf16.msra.mxu0 0
        %1824 = vmatprep.subr.bf16.mxu0 0
        %1825 = vmatpush1.bf16.msra.mxu0 0
        %1826 = vmatprep.subr.bf16.mxu0 0
        %1827 = vmatpush1.bf16.msra.mxu0 0
        %1828 = vmatprep.subr.bf16.mxu0 0
        %1829 = vmatpush1.bf16.msra.mxu0 0
        %1830 = vmatprep.subr.bf16.mxu0 0
        %1831 = vmatpush1.bf16.msra.mxu0 0
        %1832 = vmatprep.subr.bf16.mxu0 0
        %1833 = vmatpush1.bf16.msra.mxu0 0
        %1834 = vmatprep.mubr.bf16.mxu0 0
        %1835 = vmatmul.mubr.bf16.gmra.mrb[0].mxu0 %v1797
        %v1836 = vpop.f32.mrb[0].mxu0
        %v1837 = vadd.f32 0.0, %v1836
        %v1838 = vpop.f32.mrb[0].mxu0
        %v1839 = vpop.f32.mrb[0].mxu0
        %v1840 = vpop.f32.mrb[0].mxu0
        %1841 = vdwg.mxu0
        %1842 = vxpose.xlu0.c.b16.start [1/8] %v935, 128
        %1843 = vxpose.xlu0.c.b16.cont [2/8] 0, 128
        %1844 = vxpose.xlu0.c.b16.cont [3/8] 0, 128
        %1845 = vxpose.xlu0.c.b16.cont [4/8] 0, 128
        %1846 = vxpose.xlu0.c.b16.cont [5/8] 0, 128
        %1847 = vxpose.xlu0.c.b16.cont [6/8] 0, 128
        %1848 = vxpose.xlu0.c.b16.cont [7/8] 0, 128
        %1849 = vxpose.xlu0.c.b16.end [8/8] 0, 128
        %v1850 = vpop.trf.xlu0
        %v1851 = vpop.trf.xlu0
        %v1852 = vpop.trf.xlu0
        %v1853 = vpop.trf.xlu0
        %v1854 = vpop.trf.xlu0
        %v1855 = vpop.trf.xlu0
        %v1856 = vpop.trf.xlu0
        %v1857 = vpop.trf.xlu0
        %v1859 = vsel %vm1050, %v1850, 0
        %v1862 = vsel %vm1054, %v983, 0
        %1864 = vmatprep.subr.bf16.mxu0 0
        %1865 = vmatpush1.bf16.msra.mxu0 %v1862
        %1866 = vmatprep.subr.bf16.mxu0 0
        %1867 = vmatpush1.bf16.msra.mxu0 0
        %1868 = vmatprep.subr.bf16.mxu0 0
        %1869 = vmatpush1.bf16.msra.mxu0 0
        %1870 = vmatprep.subr.bf16.mxu0 0
        %1871 = vmatpush1.bf16.msra.mxu0 0
        %1872 = vmatprep.subr.bf16.mxu0 0
        %1873 = vmatpush1.bf16.msra.mxu0 0
        %1874 = vmatprep.subr.bf16.mxu0 0
        %1875 = vmatpush1.bf16.msra.mxu0 0
        %1876 = vmatprep.subr.bf16.mxu0 0
        %1877 = vmatpush1.bf16.msra.mxu0 0
        %1878 = vmatprep.subr.bf16.mxu0 0
        %1879 = vmatpush1.bf16.msra.mxu0 0
        %1880 = vmatprep.subr.bf16.mxu0 0
        %1881 = vmatpush1.bf16.msra.mxu0 0
        %1882 = vmatprep.subr.bf16.mxu0 0
        %1883 = vmatpush1.bf16.msra.mxu0 0
        %1884 = vmatprep.subr.bf16.mxu0 0
        %1885 = vmatpush1.bf16.msra.mxu0 0
        %1886 = vmatprep.subr.bf16.mxu0 0
        %1887 = vmatpush1.bf16.msra.mxu0 0
        %1888 = vmatprep.subr.bf16.mxu0 0
        %1889 = vmatpush1.bf16.msra.mxu0 0
        %1890 = vmatprep.subr.bf16.mxu0 0
        %1891 = vmatpush1.bf16.msra.mxu0 0
        %1892 = vmatprep.subr.bf16.mxu0 0
        %1893 = vmatpush1.bf16.msra.mxu0 0
        %1894 = vmatprep.subr.bf16.mxu0 0
        %1895 = vmatpush1.bf16.msra.mxu0 0
        %1896 = vmatprep.mubr.bf16.mxu0 0
        %1897 = vmatmul.mubr.bf16.gmra.mrb[0].mxu0 %v1859
        %v1898 = vpop.f32.mrb[0].mxu0
        %v1899 = vadd.f32 0.0, %v1898
        %v1900 = vpop.f32.mrb[0].mxu0
        %v1901 = vpop.f32.mrb[0].mxu0
        %v1902 = vpop.f32.mrb[0].mxu0
        %1903 = vdwg.mxu0
        %1904 = vxpose.xlu0.c.b16.start [1/8] %v936, 128
        %1905 = vxpose.xlu0.c.b16.cont [2/8] 0, 128
        %1906 = vxpose.xlu0.c.b16.cont [3/8] 0, 128
        %1907 = vxpose.xlu0.c.b16.cont [4/8] 0, 128
        %1908 = vxpose.xlu0.c.b16.cont [5/8] 0, 128
        %1909 = vxpose.xlu0.c.b16.cont [6/8] 0, 128
        %1910 = vxpose.xlu0.c.b16.cont [7/8] 0, 128
        %1911 = vxpose.xlu0.c.b16.end [8/8] 0, 128
        %v1912 = vpop.trf.xlu0
        %v1913 = vpop.trf.xlu0
        %v1914 = vpop.trf.xlu0
        %v1915 = vpop.trf.xlu0
        %v1916 = vpop.trf.xlu0
        %v1917 = vpop.trf.xlu0
        %v1918 = vpop.trf.xlu0
        %v1919 = vpop.trf.xlu0
        %v1921 = vsel %vm1050, %v1912, 0
        %v1924 = vsel %vm1054, %v984, 0
        %1926 = vmatprep.subr.bf16.mxu0 0
        %1927 = vmatpush1.bf16.msra.mxu0 %v1924
        %1928 = vmatprep.subr.bf16.mxu0 0
        %1929 = vmatpush1.bf16.msra.mxu0 0
        %1930 = vmatprep.subr.bf16.mxu0 0
        %1931 = vmatpush1.bf16.msra.mxu0 0
        %1932 = vmatprep.subr.bf16.mxu0 0
        %1933 = vmatpush1.bf16.msra.mxu0 0
        %1934 = vmatprep.subr.bf16.mxu0 0
        %1935 = vmatpush1.bf16.msra.mxu0 0
        %1936 = vmatprep.subr.bf16.mxu0 0
        %1937 = vmatpush1.bf16.msra.mxu0 0
        %1938 = vmatprep.subr.bf16.mxu0 0
        %1939 = vmatpush1.bf16.msra.mxu0 0
        %1940 = vmatprep.subr.bf16.mxu0 0
        %1941 = vmatpush1.bf16.msra.mxu0 0
        %1942 = vmatprep.subr.bf16.mxu0 0
        %1943 = vmatpush1.bf16.msra.mxu0 0
        %1944 = vmatprep.subr.bf16.mxu0 0
        %1945 = vmatpush1.bf16.msra.mxu0 0
        %1946 = vmatprep.subr.bf16.mxu0 0
        %1947 = vmatpush1.bf16.msra.mxu0 0
        %1948 = vmatprep.subr.bf16.mxu0 0
        %1949 = vmatpush1.bf16.msra.mxu0 0
        %1950 = vmatprep.subr.bf16.mxu0 0
        %1951 = vmatpush1.bf16.msra.mxu0 0
        %1952 = vmatprep.subr.bf16.mxu0 0
        %1953 = vmatpush1.bf16.msra.mxu0 0
        %1954 = vmatprep.subr.bf16.mxu0 0
        %1955 = vmatpush1.bf16.msra.mxu0 0
        %1956 = vmatprep.subr.bf16.mxu0 0
        %1957 = vmatpush1.bf16.msra.mxu0 0
        %1958 = vmatprep.mubr.bf16.mxu0 0
        %1959 = vmatmul.mubr.bf16.gmra.mrb[0].mxu0 %v1921
        %v1960 = vpop.f32.mrb[0].mxu0
        %v1961 = vadd.f32 0.0, %v1960
        %v1962 = vpop.f32.mrb[0].mxu0
        %v1963 = vpop.f32.mrb[0].mxu0
        %v1964 = vpop.f32.mrb[0].mxu0
        %1965 = vdwg.mxu0
        %1966 = vxpose.xlu0.c.b16.start [1/8] %v937, 128
        %1967 = vxpose.xlu0.c.b16.cont [2/8] 0, 128
        %1968 = vxpose.xlu0.c.b16.cont [3/8] 0, 128
        %1969 = vxpose.xlu0.c.b16.cont [4/8] 0, 128
        %1970 = vxpose.xlu0.c.b16.cont [5/8] 0, 128
        %1971 = vxpose.xlu0.c.b16.cont [6/8] 0, 128
        %1972 = vxpose.xlu0.c.b16.cont [7/8] 0, 128
        %1973 = vxpose.xlu0.c.b16.end [8/8] 0, 128
        %v1974 = vpop.trf.xlu0
        %v1975 = vpop.trf.xlu0
        %v1976 = vpop.trf.xlu0
        %v1977 = vpop.trf.xlu0
        %v1978 = vpop.trf.xlu0
        %v1979 = vpop.trf.xlu0
        %v1980 = vpop.trf.xlu0
        %v1981 = vpop.trf.xlu0
        %v1983 = vsel %vm1050, %v1974, 0
        %v1986 = vsel %vm1054, %v985, 0
        %1988 = vmatprep.subr.bf16.mxu0 0
        %1989 = vmatpush1.bf16.msra.mxu0 %v1986
        %1990 = vmatprep.subr.bf16.mxu0 0
        %1991 = vmatpush1.bf16.msra.mxu0 0
        %1992 = vmatprep.subr.bf16.mxu0 0
        %1993 = vmatpush1.bf16.msra.mxu0 0
        %1994 = vmatprep.subr.bf16.mxu0 0
        %1995 = vmatpush1.bf16.msra.mxu0 0
        %1996 = vmatprep.subr.bf16.mxu0 0
        %1997 = vmatpush1.bf16.msra.mxu0 0
        %1998 = vmatprep.subr.bf16.mxu0 0
        %1999 = vmatpush1.bf16.msra.mxu0 0
        %2000 = vmatprep.subr.bf16.mxu0 0
        %2001 = vmatpush1.bf16.msra.mxu0 0
        %2002 = vmatprep.subr.bf16.mxu0 0
        %2003 = vmatpush1.bf16.msra.mxu0 0
        %2004 = vmatprep.subr.bf16.mxu0 0
        %2005 = vmatpush1.bf16.msra.mxu0 0
        %2006 = vmatprep.subr.bf16.mxu0 0
        %2007 = vmatpush1.bf16.msra.mxu0 0
        %2008 = vmatprep.subr.bf16.mxu0 0
        %2009 = vmatpush1.bf16.msra.mxu0 0
        %2010 = vmatprep.subr.bf16.mxu0 0
        %2011 = vmatpush1.bf16.msra.mxu0 0
        %2012 = vmatprep.subr.bf16.mxu0 0
        %2013 = vmatpush1.bf16.msra.mxu0 0
        %2014 = vmatprep.subr.bf16.mxu0 0
        %2015 = vmatpush1.bf16.msra.mxu0 0
        %2016 = vmatprep.subr.bf16.mxu0 0
        %2017 = vmatpush1.bf16.msra.mxu0 0
        %2018 = vmatprep.subr.bf16.mxu0 0
        %2019 = vmatpush1.bf16.msra.mxu0 0
        %2020 = vmatprep.mubr.bf16.mxu0 0
        %2021 = vmatmul.mubr.bf16.gmra.mrb[0].mxu0 %v1983
        %v2022 = vpop.f32.mrb[0].mxu0
        %v2023 = vadd.f32 0.0, %v2022
        %v2024 = vpop.f32.mrb[0].mxu0
        %v2025 = vpop.f32.mrb[0].mxu0
        %v2026 = vpop.f32.mrb[0].mxu0
        %2027 = vdwg.mxu0
        %v2028 = vsel %vm1050, %v1093, -inf
        %2029 = vmax.xlane.f32.xlu0 %v2028
        %v2030 = vpop.xlane.xlu0 %2029
        %v2031 = vsel %vm1050, %v1155, -inf
        %2032 = vmax.xlane.f32.xlu0 %v2031
        %v2033 = vpop.xlane.xlu0 %2032
        %v2034 = vsel %vm1050, %v1217, -inf
        %2035 = vmax.xlane.f32.xlu0 %v2034
        %v2036 = vpop.xlane.xlu0 %2035
        %v2037 = vsel %vm1050, %v1279, -inf
        %2038 = vmax.xlane.f32.xlu0 %v2037
        %v2039 = vpop.xlane.xlu0 %2038
        %v2040 = vsel %vm1050, %v1341, -inf
        %2041 = vmax.xlane.f32.xlu0 %v2040
        %v2042 = vpop.xlane.xlu0 %2041
        %v2043 = vsel %vm1050, %v1403, -inf
        %2044 = vmax.xlane.f32.xlu0 %v2043
        %v2045 = vpop.xlane.xlu0 %2044
        %v2046 = vsel %vm1050, %v1465, -inf
        %2047 = vmax.xlane.f32.xlu0 %v2046
        %v2048 = vpop.xlane.xlu0 %2047
        %v2049 = vsel %vm1050, %v1527, -inf
        %2050 = vmax.xlane.f32.xlu0 %v2049
        %v2051 = vpop.xlane.xlu0 %2050
        %v2052 = vsel %vm1050, %v1589, -inf
        %2053 = vmax.xlane.f32.xlu0 %v2052
        %v2054 = vpop.xlane.xlu0 %2053
        %v2055 = vsel %vm1050, %v1651, -inf
        %2056 = vmax.xlane.f32.xlu0 %v2055
        %v2057 = vpop.xlane.xlu0 %2056
        %v2058 = vsel %vm1050, %v1713, -inf
        %2059 = vmax.xlane.f32.xlu0 %v2058
        %v2060 = vpop.xlane.xlu0 %2059
        %v2061 = vsel %vm1050, %v1775, -inf
        %2062 = vmax.xlane.f32.xlu0 %v2061
        %v2063 = vpop.xlane.xlu0 %2062
        %v2064 = vsel %vm1050, %v1837, -inf
        %2065 = vmax.xlane.f32.xlu0 %v2064
        %v2066 = vpop.xlane.xlu0 %2065
        %v2067 = vsel %vm1050, %v1899, -inf
        %2068 = vmax.xlane.f32.xlu0 %v2067
        %v2069 = vpop.xlane.xlu0 %2068
        %v2070 = vsel %vm1050, %v1961, -inf
        %2071 = vmax.xlane.f32.xlu0 %v2070
        %v2072 = vpop.xlane.xlu0 %2071
        %v2073 = vsel %vm1050, %v2023, -inf
        %2074 = vmax.xlane.f32.xlu0 %v2073
        %v2075 = vpop.xlane.xlu0 %2074
        %v2076 = vsub.f32 %v1093, %v2030
        %v2077 = vsub.f32 %v1155, %v2033
        %v2078 = vsub.f32 %v1217, %v2036
        %v2079 = vsub.f32 %v1279, %v2039
        %v2080 = vsub.f32 %v1341, %v2042
        %v2081 = vsub.f32 %v1403, %v2045
        %v2082 = vsub.f32 %v1465, %v2048
        %v2083 = vsub.f32 %v1527, %v2051
        %v2084 = vsub.f32 %v1589, %v2054
        %v2085 = vsub.f32 %v1651, %v2057
        %v2086 = vsub.f32 %v1713, %v2060
        %v2087 = vsub.f32 %v1775, %v2063
        %v2088 = vsub.f32 %v1837, %v2066
        %v2089 = vsub.f32 %v1899, %v2069
        %v2090 = vsub.f32 %v1961, %v2072
        %v2091 = vsub.f32 %v2023, %v2075
        %v2092 = vmul.f32 %v2076, 1.442695
        %v2093 = vpow.pop %v2092
        %v2094 = vmul.f32 %v2077, 1.442695
        %v2095 = vpow.pop %v2094
        %v2096 = vmul.f32 %v2078, 1.442695
        %v2097 = vpow.pop %v2096
        %v2098 = vmul.f32 %v2079, 1.442695
        %v2099 = vpow.pop %v2098
        %v2100 = vmul.f32 %v2080, 1.442695
        %v2101 = vpow.pop %v2100
        %v2102 = vmul.f32 %v2081, 1.442695
        %v2103 = vpow.pop %v2102
        %v2104 = vmul.f32 %v2082, 1.442695
        %v2105 = vpow.pop %v2104
        %v2106 = vmul.f32 %v2083, 1.442695
        %v2107 = vpow.pop %v2106
        %v2108 = vmul.f32 %v2084, 1.442695
        %v2109 = vpow.pop %v2108
        %v2110 = vmul.f32 %v2085, 1.442695
        %v2111 = vpow.pop %v2110
        %v2112 = vmul.f32 %v2086, 1.442695
        %v2113 = vpow.pop %v2112
        %v2114 = vmul.f32 %v2087, 1.442695
        %v2115 = vpow.pop %v2114
        %v2116 = vmul.f32 %v2088, 1.442695
        %v2117 = vpow.pop %v2116
        %v2118 = vmul.f32 %v2089, 1.442695
        %v2119 = vpow.pop %v2118
        %v2120 = vmul.f32 %v2090, 1.442695
        %v2121 = vpow.pop %v2120
        %v2122 = vmul.f32 %v2091, 1.442695
        %v2123 = vpow.pop %v2122
        %v2124 = vsel %vm1050, %v2093, 0.0
        %2125 = vadd.xlane.f32.xlu0 %v2124
        %v2126 = vpop.xlane.xlu0 %2125
        %v2127 = vsel %vm1050, %v2095, 0.0
        %2128 = vadd.xlane.f32.xlu0 %v2127
        %v2129 = vpop.xlane.xlu0 %2128
        %v2130 = vsel %vm1050, %v2097, 0.0
        %2131 = vadd.xlane.f32.xlu0 %v2130
        %v2132 = vpop.xlane.xlu0 %2131
        %v2133 = vsel %vm1050, %v2099, 0.0
        %2134 = vadd.xlane.f32.xlu0 %v2133
        %v2135 = vpop.xlane.xlu0 %2134
        %v2136 = vsel %vm1050, %v2101, 0.0
        %2137 = vadd.xlane.f32.xlu0 %v2136
        %v2138 = vpop.xlane.xlu0 %2137
        %v2139 = vsel %vm1050, %v2103, 0.0
        %2140 = vadd.xlane.f32.xlu0 %v2139
        %v2141 = vpop.xlane.xlu0 %2140
        %v2142 = vsel %vm1050, %v2105, 0.0
        %2143 = vadd.xlane.f32.xlu0 %v2142
        %v2144 = vpop.xlane.xlu0 %2143
        %v2145 = vsel %vm1050, %v2107, 0.0
        %2146 = vadd.xlane.f32.xlu0 %v2145
        %v2147 = vpop.xlane.xlu0 %2146
        %v2148 = vsel %vm1050, %v2109, 0.0
        %2149 = vadd.xlane.f32.xlu0 %v2148
        %v2150 = vpop.xlane.xlu0 %2149
        %v2151 = vsel %vm1050, %v2111, 0.0
        %2152 = vadd.xlane.f32.xlu0 %v2151
        %v2153 = vpop.xlane.xlu0 %2152
        %v2154 = vsel %vm1050, %v2113, 0.0
        %2155 = vadd.xlane.f32.xlu0 %v2154
        %v2156 = vpop.xlane.xlu0 %2155
        %v2157 = vsel %vm1050, %v2115, 0.0
        %2158 = vadd.xlane.f32.xlu0 %v2157
        %v2159 = vpop.xlane.xlu0 %2158
        %v2160 = vsel %vm1050, %v2117, 0.0
        %2161 = vadd.xlane.f32.xlu0 %v2160
        %v2162 = vpop.xlane.xlu0 %2161
        %v2163 = vsel %vm1050, %v2119, 0.0
        %2164 = vadd.xlane.f32.xlu0 %v2163
        %v2165 = vpop.xlane.xlu0 %2164
        %v2166 = vsel %vm1050, %v2121, 0.0
        %2167 = vadd.xlane.f32.xlu0 %v2166
        %v2168 = vpop.xlane.xlu0 %2167
        %v2169 = vsel %vm1050, %v2123, 0.0
        %2170 = vadd.xlane.f32.xlu0 %v2169
        %v2171 = vpop.xlane.xlu0 %2170
        %v2172 = vrcp.pop %v2126
        %v2173 = vrcp.pop %v2129
        %v2174 = vrcp.pop %v2132
        %v2175 = vrcp.pop %v2135
        %v2176 = vrcp.pop %v2138
        %v2177 = vrcp.pop %v2141
        %v2178 = vrcp.pop %v2144
        %v2179 = vrcp.pop %v2147
        %v2180 = vrcp.pop %v2150
        %v2181 = vrcp.pop %v2153
        %v2182 = vrcp.pop %v2156
        %v2183 = vrcp.pop %v2159
        %v2184 = vrcp.pop %v2162
        %v2185 = vrcp.pop %v2165
        %v2186 = vrcp.pop %v2168
        %v2187 = vrcp.pop %v2171
        %v2188 = vmul.f32 %v2093, %v2172
        %v2189 = vmul.f32 %v2095, %v2173
        %v2190 = vmul.f32 %v2097, %v2174
        %v2191 = vmul.f32 %v2099, %v2175
        %v2192 = vmul.f32 %v2101, %v2176
        %v2193 = vmul.f32 %v2103, %v2177
        %v2194 = vmul.f32 %v2105, %v2178
        %v2195 = vmul.f32 %v2107, %v2179
        %v2196 = vmul.f32 %v2109, %v2180
        %v2197 = vmul.f32 %v2111, %v2181
        %v2198 = vmul.f32 %v2113, %v2182
        %v2199 = vmul.f32 %v2115, %v2183
        %v2200 = vmul.f32 %v2117, %v2184
        %v2201 = vmul.f32 %v2119, %v2185
        %v2202 = vmul.f32 %v2121, %v2186
        %v2203 = vmul.f32 %v2123, %v2187
        %v2204 = vpack.c.bf16 %v2188, %v2188
        %v2205 = vpack.c.bf16 %v2189, %v2189
        %v2206 = vpack.c.bf16 %v2190, %v2190
        %v2207 = vpack.c.bf16 %v2191, %v2191
        %v2208 = vpack.c.bf16 %v2192, %v2192
        %v2209 = vpack.c.bf16 %v2193, %v2193
        %v2210 = vpack.c.bf16 %v2194, %v2194
        %v2211 = vpack.c.bf16 %v2195, %v2195
        %v2212 = vpack.c.bf16 %v2196, %v2196
        %v2213 = vpack.c.bf16 %v2197, %v2197
        %v2214 = vpack.c.bf16 %v2198, %v2198
        %v2215 = vpack.c.bf16 %v2199, %v2199
        %v2216 = vpack.c.bf16 %v2200, %v2200
        %v2217 = vpack.c.bf16 %v2201, %v2201
        %v2218 = vpack.c.bf16 %v2202, %v2202
        %v2219 = vpack.c.bf16 %v2203, %v2203
        %v2221 = vsel %vm1050, %v1018, 0
        %v2224 = vsel %vm1050, %v2204, 0
        %2226 = vmatprep.subr.bf16.mxu0 0
        %2227 = vmatpush1.bf16.xpose.msra.mxu0 %v2224
        %2228 = vmatprep.subr.bf16.mxu0 0
        %2229 = vmatpush1.bf16.xpose.msra.mxu0 0
        %2230 = vmatprep.subr.bf16.mxu0 0
        %2231 = vmatpush1.bf16.xpose.msra.mxu0 0
        %2232 = vmatprep.subr.bf16.mxu0 0
        %2233 = vmatpush1.bf16.xpose.msra.mxu0 0
        %2234 = vmatprep.subr.bf16.mxu0 0
        %2235 = vmatpush1.bf16.xpose.msra.mxu0 0
        %2236 = vmatprep.subr.bf16.mxu0 0
        %2237 = vmatpush1.bf16.xpose.msra.mxu0 0
        %2238 = vmatprep.subr.bf16.mxu0 0
        %2239 = vmatpush1.bf16.xpose.msra.mxu0 0
        %2240 = vmatprep.subr.bf16.mxu0 0
        %2241 = vmatpush1.bf16.xpose.msra.mxu0 0
        %2242 = vmatprep.subr.bf16.mxu0 0
        %2243 = vmatpush1.bf16.xpose.msra.mxu0 0
        %2244 = vmatprep.subr.bf16.mxu0 0
        %2245 = vmatpush1.bf16.xpose.msra.mxu0 0
        %2246 = vmatprep.subr.bf16.mxu0 0
        %2247 = vmatpush1.bf16.xpose.msra.mxu0 0
        %2248 = vmatprep.subr.bf16.mxu0 0
        %2249 = vmatpush1.bf16.xpose.msra.mxu0 0
        %2250 = vmatprep.subr.bf16.mxu0 0
        %2251 = vmatpush1.bf16.xpose.msra.mxu0 0
        %2252 = vmatprep.subr.bf16.mxu0 0
        %2253 = vmatpush1.bf16.xpose.msra.mxu0 0
        %2254 = vmatprep.subr.bf16.mxu0 0
        %2255 = vmatpush1.bf16.xpose.msra.mxu0 0
        %2256 = vmatprep.subr.bf16.mxu0 0
        %2257 = vmatpush1.bf16.xpose.msra.mxu0 0
        %2258 = vmatprep.mubr.bf16.mxu0 0
        %2259 = vmatmul.mubr.bf16.gmra.mrb[0].mxu0 %v2221
        %v2260 = vpop.f32.mrb[0].mxu0
        %v2261 = vadd.f32 0.0, %v2260
        %v2262 = vpop.f32.mrb[0].mxu0
        %v2263 = vpop.f32.mrb[0].mxu0
        %v2264 = vpop.f32.mrb[0].mxu0
        %2265 = vdwg.mxu0
        %v2267 = vsel %vm1050, %v1019, 0
        %v2270 = vsel %vm1050, %v2205, 0
        %2272 = vmatprep.subr.bf16.mxu0 0
        %2273 = vmatpush1.bf16.xpose.msra.mxu0 %v2270
        %2274 = vmatprep.subr.bf16.mxu0 0
        %2275 = vmatpush1.bf16.xpose.msra.mxu0 0
        %2276 = vmatprep.subr.bf16.mxu0 0
        %2277 = vmatpush1.bf16.xpose.msra.mxu0 0
        %2278 = vmatprep.subr.bf16.mxu0 0
        %2279 = vmatpush1.bf16.xpose.msra.mxu0 0
        %2280 = vmatprep.subr.bf16.mxu0 0
        %2281 = vmatpush1.bf16.xpose.msra.mxu0 0
        %2282 = vmatprep.subr.bf16.mxu0 0
        %2283 = vmatpush1.bf16.xpose.msra.mxu0 0
        %2284 = vmatprep.subr.bf16.mxu0 0
        %2285 = vmatpush1.bf16.xpose.msra.mxu0 0
        %2286 = vmatprep.subr.bf16.mxu0 0
        %2287 = vmatpush1.bf16.xpose.msra.mxu0 0
        %2288 = vmatprep.subr.bf16.mxu0 0
        %2289 = vmatpush1.bf16.xpose.msra.mxu0 0
        %2290 = vmatprep.subr.bf16.mxu0 0
        %2291 = vmatpush1.bf16.xpose.msra.mxu0 0
        %2292 = vmatprep.subr.bf16.mxu0 0
        %2293 = vmatpush1.bf16.xpose.msra.mxu0 0
        %2294 = vmatprep.subr.bf16.mxu0 0
        %2295 = vmatpush1.bf16.xpose.msra.mxu0 0
        %2296 = vmatprep.subr.bf16.mxu0 0
        %2297 = vmatpush1.bf16.xpose.msra.mxu0 0
        %2298 = vmatprep.subr.bf16.mxu0 0
        %2299 = vmatpush1.bf16.xpose.msra.mxu0 0
        %2300 = vmatprep.subr.bf16.mxu0 0
        %2301 = vmatpush1.bf16.xpose.msra.mxu0 0
        %2302 = vmatprep.subr.bf16.mxu0 0
        %2303 = vmatpush1.bf16.xpose.msra.mxu0 0
        %2304 = vmatprep.mubr.bf16.mxu0 0
        %2305 = vmatmul.mubr.bf16.gmra.mrb[0].mxu0 %v2267
        %v2306 = vpop.f32.mrb[0].mxu0
        %v2307 = vadd.f32 0.0, %v2306
        %v2308 = vpop.f32.mrb[0].mxu0
        %v2309 = vpop.f32.mrb[0].mxu0
        %v2310 = vpop.f32.mrb[0].mxu0
        %2311 = vdwg.mxu0
        %v2313 = vsel %vm1050, %v1020, 0
        %v2316 = vsel %vm1050, %v2206, 0
        %2318 = vmatprep.subr.bf16.mxu0 0
        %2319 = vmatpush1.bf16.xpose.msra.mxu0 %v2316
        %2320 = vmatprep.subr.bf16.mxu0 0
        %2321 = vmatpush1.bf16.xpose.msra.mxu0 0
        %2322 = vmatprep.subr.bf16.mxu0 0
        %2323 = vmatpush1.bf16.xpose.msra.mxu0 0
        %2324 = vmatprep.subr.bf16.mxu0 0
        %2325 = vmatpush1.bf16.xpose.msra.mxu0 0
        %2326 = vmatprep.subr.bf16.mxu0 0
        %2327 = vmatpush1.bf16.xpose.msra.mxu0 0
        %2328 = vmatprep.subr.bf16.mxu0 0
        %2329 = vmatpush1.bf16.xpose.msra.mxu0 0
        %2330 = vmatprep.subr.bf16.mxu0 0
        %2331 = vmatpush1.bf16.xpose.msra.mxu0 0
        %2332 = vmatprep.subr.bf16.mxu0 0
        %2333 = vmatpush1.bf16.xpose.msra.mxu0 0
        %2334 = vmatprep.subr.bf16.mxu0 0
        %2335 = vmatpush1.bf16.xpose.msra.mxu0 0
        %2336 = vmatprep.subr.bf16.mxu0 0
        %2337 = vmatpush1.bf16.xpose.msra.mxu0 0
        %2338 = vmatprep.subr.bf16.mxu0 0
        %2339 = vmatpush1.bf16.xpose.msra.mxu0 0
        %2340 = vmatprep.subr.bf16.mxu0 0
        %2341 = vmatpush1.bf16.xpose.msra.mxu0 0
        %2342 = vmatprep.subr.bf16.mxu0 0
        %2343 = vmatpush1.bf16.xpose.msra.mxu0 0
        %2344 = vmatprep.subr.bf16.mxu0 0
        %2345 = vmatpush1.bf16.xpose.msra.mxu0 0
        %2346 = vmatprep.subr.bf16.mxu0 0
        %2347 = vmatpush1.bf16.xpose.msra.mxu0 0
        %2348 = vmatprep.subr.bf16.mxu0 0
        %2349 = vmatpush1.bf16.xpose.msra.mxu0 0
        %2350 = vmatprep.mubr.bf16.mxu0 0
        %2351 = vmatmul.mubr.bf16.gmra.mrb[0].mxu0 %v2313
        %v2352 = vpop.f32.mrb[0].mxu0
        %v2353 = vadd.f32 0.0, %v2352
        %v2354 = vpop.f32.mrb[0].mxu0
        %v2355 = vpop.f32.mrb[0].mxu0
        %v2356 = vpop.f32.mrb[0].mxu0
        %2357 = vdwg.mxu0
        %v2359 = vsel %vm1050, %v1021, 0
        %v2362 = vsel %vm1050, %v2207, 0
        %2364 = vmatprep.subr.bf16.mxu0 0
        %2365 = vmatpush1.bf16.xpose.msra.mxu0 %v2362
        %2366 = vmatprep.subr.bf16.mxu0 0
        %2367 = vmatpush1.bf16.xpose.msra.mxu0 0
        %2368 = vmatprep.subr.bf16.mxu0 0
        %2369 = vmatpush1.bf16.xpose.msra.mxu0 0
        %2370 = vmatprep.subr.bf16.mxu0 0
        %2371 = vmatpush1.bf16.xpose.msra.mxu0 0
        %2372 = vmatprep.subr.bf16.mxu0 0
        %2373 = vmatpush1.bf16.xpose.msra.mxu0 0
        %2374 = vmatprep.subr.bf16.mxu0 0
        %2375 = vmatpush1.bf16.xpose.msra.mxu0 0
        %2376 = vmatprep.subr.bf16.mxu0 0
        %2377 = vmatpush1.bf16.xpose.msra.mxu0 0
        %2378 = vmatprep.subr.bf16.mxu0 0
        %2379 = vmatpush1.bf16.xpose.msra.mxu0 0
        %2380 = vmatprep.subr.bf16.mxu0 0
        %2381 = vmatpush1.bf16.xpose.msra.mxu0 0
        %2382 = vmatprep.subr.bf16.mxu0 0
        %2383 = vmatpush1.bf16.xpose.msra.mxu0 0
        %2384 = vmatprep.subr.bf16.mxu0 0
        %2385 = vmatpush1.bf16.xpose.msra.mxu0 0
        %2386 = vmatprep.subr.bf16.mxu0 0
        %2387 = vmatpush1.bf16.xpose.msra.mxu0 0
        %2388 = vmatprep.subr.bf16.mxu0 0
        %2389 = vmatpush1.bf16.xpose.msra.mxu0 0
        %2390 = vmatprep.subr.bf16.mxu0 0
        %2391 = vmatpush1.bf16.xpose.msra.mxu0 0
        %2392 = vmatprep.subr.bf16.mxu0 0
        %2393 = vmatpush1.bf16.xpose.msra.mxu0 0
        %2394 = vmatprep.subr.bf16.mxu0 0
        %2395 = vmatpush1.bf16.xpose.msra.mxu0 0
        %2396 = vmatprep.mubr.bf16.mxu0 0
        %2397 = vmatmul.mubr.bf16.gmra.mrb[0].mxu0 %v2359
        %v2398 = vpop.f32.mrb[0].mxu0
        %v2399 = vadd.f32 0.0, %v2398
        %v2400 = vpop.f32.mrb[0].mxu0
        %v2401 = vpop.f32.mrb[0].mxu0
        %v2402 = vpop.f32.mrb[0].mxu0
        %2403 = vdwg.mxu0
        %v2405 = vsel %vm1050, %v1022, 0
        %v2408 = vsel %vm1050, %v2208, 0
        %2410 = vmatprep.subr.bf16.mxu0 0
        %2411 = vmatpush1.bf16.xpose.msra.mxu0 %v2408
        %2412 = vmatprep.subr.bf16.mxu0 0
        %2413 = vmatpush1.bf16.xpose.msra.mxu0 0
        %2414 = vmatprep.subr.bf16.mxu0 0
        %2415 = vmatpush1.bf16.xpose.msra.mxu0 0
        %2416 = vmatprep.subr.bf16.mxu0 0
        %2417 = vmatpush1.bf16.xpose.msra.mxu0 0
        %2418 = vmatprep.subr.bf16.mxu0 0
        %2419 = vmatpush1.bf16.xpose.msra.mxu0 0
        %2420 = vmatprep.subr.bf16.mxu0 0
        %2421 = vmatpush1.bf16.xpose.msra.mxu0 0
        %2422 = vmatprep.subr.bf16.mxu0 0
        %2423 = vmatpush1.bf16.xpose.msra.mxu0 0
        %2424 = vmatprep.subr.bf16.mxu0 0
        %2425 = vmatpush1.bf16.xpose.msra.mxu0 0
        %2426 = vmatprep.subr.bf16.mxu0 0
        %2427 = vmatpush1.bf16.xpose.msra.mxu0 0
        %2428 = vmatprep.subr.bf16.mxu0 0
        %2429 = vmatpush1.bf16.xpose.msra.mxu0 0
        %2430 = vmatprep.subr.bf16.mxu0 0
        %2431 = vmatpush1.bf16.xpose.msra.mxu0 0
        %2432 = vmatprep.subr.bf16.mxu0 0
        %2433 = vmatpush1.bf16.xpose.msra.mxu0 0
        %2434 = vmatprep.subr.bf16.mxu0 0
        %2435 = vmatpush1.bf16.xpose.msra.mxu0 0
        %2436 = vmatprep.subr.bf16.mxu0 0
        %2437 = vmatpush1.bf16.xpose.msra.mxu0 0
        %2438 = vmatprep.subr.bf16.mxu0 0
        %2439 = vmatpush1.bf16.xpose.msra.mxu0 0
        %2440 = vmatprep.subr.bf16.mxu0 0
        %2441 = vmatpush1.bf16.xpose.msra.mxu0 0
        %2442 = vmatprep.mubr.bf16.mxu0 0
        %2443 = vmatmul.mubr.bf16.gmra.mrb[0].mxu0 %v2405
        %v2444 = vpop.f32.mrb[0].mxu0
        %v2445 = vadd.f32 0.0, %v2444
        %v2446 = vpop.f32.mrb[0].mxu0
        %v2447 = vpop.f32.mrb[0].mxu0
        %v2448 = vpop.f32.mrb[0].mxu0
        %2449 = vdwg.mxu0
        %v2451 = vsel %vm1050, %v1023, 0
        %v2454 = vsel %vm1050, %v2209, 0
        %2456 = vmatprep.subr.bf16.mxu0 0
        %2457 = vmatpush1.bf16.xpose.msra.mxu0 %v2454
        %2458 = vmatprep.subr.bf16.mxu0 0
        %2459 = vmatpush1.bf16.xpose.msra.mxu0 0
        %2460 = vmatprep.subr.bf16.mxu0 0
        %2461 = vmatpush1.bf16.xpose.msra.mxu0 0
        %2462 = vmatprep.subr.bf16.mxu0 0
        %2463 = vmatpush1.bf16.xpose.msra.mxu0 0
        %2464 = vmatprep.subr.bf16.mxu0 0
        %2465 = vmatpush1.bf16.xpose.msra.mxu0 0
        %2466 = vmatprep.subr.bf16.mxu0 0
        %2467 = vmatpush1.bf16.xpose.msra.mxu0 0
        %2468 = vmatprep.subr.bf16.mxu0 0
        %2469 = vmatpush1.bf16.xpose.msra.mxu0 0
        %2470 = vmatprep.subr.bf16.mxu0 0
        %2471 = vmatpush1.bf16.xpose.msra.mxu0 0
        %2472 = vmatprep.subr.bf16.mxu0 0
        %2473 = vmatpush1.bf16.xpose.msra.mxu0 0
        %2474 = vmatprep.subr.bf16.mxu0 0
        %2475 = vmatpush1.bf16.xpose.msra.mxu0 0
        %2476 = vmatprep.subr.bf16.mxu0 0
        %2477 = vmatpush1.bf16.xpose.msra.mxu0 0
        %2478 = vmatprep.subr.bf16.mxu0 0
        %2479 = vmatpush1.bf16.xpose.msra.mxu0 0
        %2480 = vmatprep.subr.bf16.mxu0 0
        %2481 = vmatpush1.bf16.xpose.msra.mxu0 0
        %2482 = vmatprep.subr.bf16.mxu0 0
        %2483 = vmatpush1.bf16.xpose.msra.mxu0 0
        %2484 = vmatprep.subr.bf16.mxu0 0
        %2485 = vmatpush1.bf16.xpose.msra.mxu0 0
        %2486 = vmatprep.subr.bf16.mxu0 0
        %2487 = vmatpush1.bf16.xpose.msra.mxu0 0
        %2488 = vmatprep.mubr.bf16.mxu0 0
        %2489 = vmatmul.mubr.bf16.gmra.mrb[0].mxu0 %v2451
        %v2490 = vpop.f32.mrb[0].mxu0
        %v2491 = vadd.f32 0.0, %v2490
        %v2492 = vpop.f32.mrb[0].mxu0
        %v2493 = vpop.f32.mrb[0].mxu0
        %v2494 = vpop.f32.mrb[0].mxu0
        %2495 = vdwg.mxu0
        %v2497 = vsel %vm1050, %v1024, 0
        %v2500 = vsel %vm1050, %v2210, 0
        %2502 = vmatprep.subr.bf16.mxu0 0
        %2503 = vmatpush1.bf16.xpose.msra.mxu0 %v2500
        %2504 = vmatprep.subr.bf16.mxu0 0
        %2505 = vmatpush1.bf16.xpose.msra.mxu0 0
        %2506 = vmatprep.subr.bf16.mxu0 0
        %2507 = vmatpush1.bf16.xpose.msra.mxu0 0
        %2508 = vmatprep.subr.bf16.mxu0 0
        %2509 = vmatpush1.bf16.xpose.msra.mxu0 0
        %2510 = vmatprep.subr.bf16.mxu0 0
        %2511 = vmatpush1.bf16.xpose.msra.mxu0 0
        %2512 = vmatprep.subr.bf16.mxu0 0
        %2513 = vmatpush1.bf16.xpose.msra.mxu0 0
        %2514 = vmatprep.subr.bf16.mxu0 0
        %2515 = vmatpush1.bf16.xpose.msra.mxu0 0
        %2516 = vmatprep.subr.bf16.mxu0 0
        %2517 = vmatpush1.bf16.xpose.msra.mxu0 0
        %2518 = vmatprep.subr.bf16.mxu0 0
        %2519 = vmatpush1.bf16.xpose.msra.mxu0 0
        %2520 = vmatprep.subr.bf16.mxu0 0
        %2521 = vmatpush1.bf16.xpose.msra.mxu0 0
        %2522 = vmatprep.subr.bf16.mxu0 0
        %2523 = vmatpush1.bf16.xpose.msra.mxu0 0
        %2524 = vmatprep.subr.bf16.mxu0 0
        %2525 = vmatpush1.bf16.xpose.msra.mxu0 0
        %2526 = vmatprep.subr.bf16.mxu0 0
        %2527 = vmatpush1.bf16.xpose.msra.mxu0 0
        %2528 = vmatprep.subr.bf16.mxu0 0
        %2529 = vmatpush1.bf16.xpose.msra.mxu0 0
        %2530 = vmatprep.subr.bf16.mxu0 0
        %2531 = vmatpush1.bf16.xpose.msra.mxu0 0
        %2532 = vmatprep.subr.bf16.mxu0 0
        %2533 = vmatpush1.bf16.xpose.msra.mxu0 0
        %2534 = vmatprep.mubr.bf16.mxu0 0
        %2535 = vmatmul.mubr.bf16.gmra.mrb[0].mxu0 %v2497
        %v2536 = vpop.f32.mrb[0].mxu0
        %v2537 = vadd.f32 0.0, %v2536
        %v2538 = vpop.f32.mrb[0].mxu0
        %v2539 = vpop.f32.mrb[0].mxu0
        %v2540 = vpop.f32.mrb[0].mxu0
        %2541 = vdwg.mxu0
        %v2543 = vsel %vm1050, %v1025, 0
        %v2546 = vsel %vm1050, %v2211, 0
        %2548 = vmatprep.subr.bf16.mxu0 0
        %2549 = vmatpush1.bf16.xpose.msra.mxu0 %v2546
        %2550 = vmatprep.subr.bf16.mxu0 0
        %2551 = vmatpush1.bf16.xpose.msra.mxu0 0
        %2552 = vmatprep.subr.bf16.mxu0 0
        %2553 = vmatpush1.bf16.xpose.msra.mxu0 0
        %2554 = vmatprep.subr.bf16.mxu0 0
        %2555 = vmatpush1.bf16.xpose.msra.mxu0 0
        %2556 = vmatprep.subr.bf16.mxu0 0
        %2557 = vmatpush1.bf16.xpose.msra.mxu0 0
        %2558 = vmatprep.subr.bf16.mxu0 0
        %2559 = vmatpush1.bf16.xpose.msra.mxu0 0
        %2560 = vmatprep.subr.bf16.mxu0 0
        %2561 = vmatpush1.bf16.xpose.msra.mxu0 0
        %2562 = vmatprep.subr.bf16.mxu0 0
        %2563 = vmatpush1.bf16.xpose.msra.mxu0 0
        %2564 = vmatprep.subr.bf16.mxu0 0
        %2565 = vmatpush1.bf16.xpose.msra.mxu0 0
        %2566 = vmatprep.subr.bf16.mxu0 0
        %2567 = vmatpush1.bf16.xpose.msra.mxu0 0
        %2568 = vmatprep.subr.bf16.mxu0 0
        %2569 = vmatpush1.bf16.xpose.msra.mxu0 0
        %2570 = vmatprep.subr.bf16.mxu0 0
        %2571 = vmatpush1.bf16.xpose.msra.mxu0 0
        %2572 = vmatprep.subr.bf16.mxu0 0
        %2573 = vmatpush1.bf16.xpose.msra.mxu0 0
        %2574 = vmatprep.subr.bf16.mxu0 0
        %2575 = vmatpush1.bf16.xpose.msra.mxu0 0
        %2576 = vmatprep.subr.bf16.mxu0 0
        %2577 = vmatpush1.bf16.xpose.msra.mxu0 0
        %2578 = vmatprep.subr.bf16.mxu0 0
        %2579 = vmatpush1.bf16.xpose.msra.mxu0 0
        %2580 = vmatprep.mubr.bf16.mxu0 0
        %2581 = vmatmul.mubr.bf16.gmra.mrb[0].mxu0 %v2543
        %v2582 = vpop.f32.mrb[0].mxu0
        %v2583 = vadd.f32 0.0, %v2582
        %v2584 = vpop.f32.mrb[0].mxu0
        %v2585 = vpop.f32.mrb[0].mxu0
        %v2586 = vpop.f32.mrb[0].mxu0
        %2587 = vdwg.mxu0
        %v2589 = vsel %vm1050, %v1026, 0
        %v2592 = vsel %vm1050, %v2212, 0
        %2594 = vmatprep.subr.bf16.mxu0 0
        %2595 = vmatpush1.bf16.xpose.msra.mxu0 %v2592
        %2596 = vmatprep.subr.bf16.mxu0 0
        %2597 = vmatpush1.bf16.xpose.msra.mxu0 0
        %2598 = vmatprep.subr.bf16.mxu0 0
        %2599 = vmatpush1.bf16.xpose.msra.mxu0 0
        %2600 = vmatprep.subr.bf16.mxu0 0
        %2601 = vmatpush1.bf16.xpose.msra.mxu0 0
        %2602 = vmatprep.subr.bf16.mxu0 0
        %2603 = vmatpush1.bf16.xpose.msra.mxu0 0
        %2604 = vmatprep.subr.bf16.mxu0 0
        %2605 = vmatpush1.bf16.xpose.msra.mxu0 0
        %2606 = vmatprep.subr.bf16.mxu0 0
        %2607 = vmatpush1.bf16.xpose.msra.mxu0 0
        %2608 = vmatprep.subr.bf16.mxu0 0
        %2609 = vmatpush1.bf16.xpose.msra.mxu0 0
        %2610 = vmatprep.subr.bf16.mxu0 0
        %2611 = vmatpush1.bf16.xpose.msra.mxu0 0
        %2612 = vmatprep.subr.bf16.mxu0 0
        %2613 = vmatpush1.bf16.xpose.msra.mxu0 0
        %2614 = vmatprep.subr.bf16.mxu0 0
        %2615 = vmatpush1.bf16.xpose.msra.mxu0 0
        %2616 = vmatprep.subr.bf16.mxu0 0
        %2617 = vmatpush1.bf16.xpose.msra.mxu0 0
        %2618 = vmatprep.subr.bf16.mxu0 0
        %2619 = vmatpush1.bf16.xpose.msra.mxu0 0
        %2620 = vmatprep.subr.bf16.mxu0 0
        %2621 = vmatpush1.bf16.xpose.msra.mxu0 0
        %2622 = vmatprep.subr.bf16.mxu0 0
        %2623 = vmatpush1.bf16.xpose.msra.mxu0 0
        %2624 = vmatprep.subr.bf16.mxu0 0
        %2625 = vmatpush1.bf16.xpose.msra.mxu0 0
        %2626 = vmatprep.mubr.bf16.mxu0 0
        %2627 = vmatmul.mubr.bf16.gmra.mrb[0].mxu0 %v2589
        %v2628 = vpop.f32.mrb[0].mxu0
        %v2629 = vadd.f32 0.0, %v2628
        %v2630 = vpop.f32.mrb[0].mxu0
        %v2631 = vpop.f32.mrb[0].mxu0
        %v2632 = vpop.f32.mrb[0].mxu0
        %2633 = vdwg.mxu0
        %v2635 = vsel %vm1050, %v1027, 0
        %v2638 = vsel %vm1050, %v2213, 0
        %2640 = vmatprep.subr.bf16.mxu0 0
        %2641 = vmatpush1.bf16.xpose.msra.mxu0 %v2638
        %2642 = vmatprep.subr.bf16.mxu0 0
        %2643 = vmatpush1.bf16.xpose.msra.mxu0 0
        %2644 = vmatprep.subr.bf16.mxu0 0
        %2645 = vmatpush1.bf16.xpose.msra.mxu0 0
        %2646 = vmatprep.subr.bf16.mxu0 0
        %2647 = vmatpush1.bf16.xpose.msra.mxu0 0
        %2648 = vmatprep.subr.bf16.mxu0 0
        %2649 = vmatpush1.bf16.xpose.msra.mxu0 0
        %2650 = vmatprep.subr.bf16.mxu0 0
        %2651 = vmatpush1.bf16.xpose.msra.mxu0 0
        %2652 = vmatprep.subr.bf16.mxu0 0
        %2653 = vmatpush1.bf16.xpose.msra.mxu0 0
        %2654 = vmatprep.subr.bf16.mxu0 0
        %2655 = vmatpush1.bf16.xpose.msra.mxu0 0
        %2656 = vmatprep.subr.bf16.mxu0 0
        %2657 = vmatpush1.bf16.xpose.msra.mxu0 0
        %2658 = vmatprep.subr.bf16.mxu0 0
        %2659 = vmatpush1.bf16.xpose.msra.mxu0 0
        %2660 = vmatprep.subr.bf16.mxu0 0
        %2661 = vmatpush1.bf16.xpose.msra.mxu0 0
        %2662 = vmatprep.subr.bf16.mxu0 0
        %2663 = vmatpush1.bf16.xpose.msra.mxu0 0
        %2664 = vmatprep.subr.bf16.mxu0 0
        %2665 = vmatpush1.bf16.xpose.msra.mxu0 0
        %2666 = vmatprep.subr.bf16.mxu0 0
        %2667 = vmatpush1.bf16.xpose.msra.mxu0 0
        %2668 = vmatprep.subr.bf16.mxu0 0
        %2669 = vmatpush1.bf16.xpose.msra.mxu0 0
        %2670 = vmatprep.subr.bf16.mxu0 0
        %2671 = vmatpush1.bf16.xpose.msra.mxu0 0
        %2672 = vmatprep.mubr.bf16.mxu0 0
        %2673 = vmatmul.mubr.bf16.gmra.mrb[0].mxu0 %v2635
        %v2674 = vpop.f32.mrb[0].mxu0
        %v2675 = vadd.f32 0.0, %v2674
        %v2676 = vpop.f32.mrb[0].mxu0
        %v2677 = vpop.f32.mrb[0].mxu0
        %v2678 = vpop.f32.mrb[0].mxu0
        %2679 = vdwg.mxu0
        %v2681 = vsel %vm1050, %v1028, 0
        %v2684 = vsel %vm1050, %v2214, 0
        %2686 = vmatprep.subr.bf16.mxu0 0
        %2687 = vmatpush1.bf16.xpose.msra.mxu0 %v2684
        %2688 = vmatprep.subr.bf16.mxu0 0
        %2689 = vmatpush1.bf16.xpose.msra.mxu0 0
        %2690 = vmatprep.subr.bf16.mxu0 0
        %2691 = vmatpush1.bf16.xpose.msra.mxu0 0
        %2692 = vmatprep.subr.bf16.mxu0 0
        %2693 = vmatpush1.bf16.xpose.msra.mxu0 0
        %2694 = vmatprep.subr.bf16.mxu0 0
        %2695 = vmatpush1.bf16.xpose.msra.mxu0 0
        %2696 = vmatprep.subr.bf16.mxu0 0
        %2697 = vmatpush1.bf16.xpose.msra.mxu0 0
        %2698 = vmatprep.subr.bf16.mxu0 0
        %2699 = vmatpush1.bf16.xpose.msra.mxu0 0
        %2700 = vmatprep.subr.bf16.mxu0 0
        %2701 = vmatpush1.bf16.xpose.msra.mxu0 0
        %2702 = vmatprep.subr.bf16.mxu0 0
        %2703 = vmatpush1.bf16.xpose.msra.mxu0 0
        %2704 = vmatprep.subr.bf16.mxu0 0
        %2705 = vmatpush1.bf16.xpose.msra.mxu0 0
        %2706 = vmatprep.subr.bf16.mxu0 0
        %2707 = vmatpush1.bf16.xpose.msra.mxu0 0
        %2708 = vmatprep.subr.bf16.mxu0 0
        %2709 = vmatpush1.bf16.xpose.msra.mxu0 0
        %2710 = vmatprep.subr.bf16.mxu0 0
        %2711 = vmatpush1.bf16.xpose.msra.mxu0 0
        %2712 = vmatprep.subr.bf16.mxu0 0
        %2713 = vmatpush1.bf16.xpose.msra.mxu0 0
        %2714 = vmatprep.subr.bf16.mxu0 0
        %2715 = vmatpush1.bf16.xpose.msra.mxu0 0
        %2716 = vmatprep.subr.bf16.mxu0 0
        %2717 = vmatpush1.bf16.xpose.msra.mxu0 0
        %2718 = vmatprep.mubr.bf16.mxu0 0
        %2719 = vmatmul.mubr.bf16.gmra.mrb[0].mxu0 %v2681
        %v2720 = vpop.f32.mrb[0].mxu0
        %v2721 = vadd.f32 0.0, %v2720
        %v2722 = vpop.f32.mrb[0].mxu0
        %v2723 = vpop.f32.mrb[0].mxu0
        %v2724 = vpop.f32.mrb[0].mxu0
        %2725 = vdwg.mxu0
        %v2727 = vsel %vm1050, %v1029, 0
        %v2730 = vsel %vm1050, %v2215, 0
        %2732 = vmatprep.subr.bf16.mxu0 0
        %2733 = vmatpush1.bf16.xpose.msra.mxu0 %v2730
        %2734 = vmatprep.subr.bf16.mxu0 0
        %2735 = vmatpush1.bf16.xpose.msra.mxu0 0
        %2736 = vmatprep.subr.bf16.mxu0 0
        %2737 = vmatpush1.bf16.xpose.msra.mxu0 0
        %2738 = vmatprep.subr.bf16.mxu0 0
        %2739 = vmatpush1.bf16.xpose.msra.mxu0 0
        %2740 = vmatprep.subr.bf16.mxu0 0
        %2741 = vmatpush1.bf16.xpose.msra.mxu0 0
        %2742 = vmatprep.subr.bf16.mxu0 0
        %2743 = vmatpush1.bf16.xpose.msra.mxu0 0
        %2744 = vmatprep.subr.bf16.mxu0 0
        %2745 = vmatpush1.bf16.xpose.msra.mxu0 0
        %2746 = vmatprep.subr.bf16.mxu0 0
        %2747 = vmatpush1.bf16.xpose.msra.mxu0 0
        %2748 = vmatprep.subr.bf16.mxu0 0
        %2749 = vmatpush1.bf16.xpose.msra.mxu0 0
        %2750 = vmatprep.subr.bf16.mxu0 0
        %2751 = vmatpush1.bf16.xpose.msra.mxu0 0
        %2752 = vmatprep.subr.bf16.mxu0 0
        %2753 = vmatpush1.bf16.xpose.msra.mxu0 0
        %2754 = vmatprep.subr.bf16.mxu0 0
        %2755 = vmatpush1.bf16.xpose.msra.mxu0 0
        %2756 = vmatprep.subr.bf16.mxu0 0
        %2757 = vmatpush1.bf16.xpose.msra.mxu0 0
        %2758 = vmatprep.subr.bf16.mxu0 0
        %2759 = vmatpush1.bf16.xpose.msra.mxu0 0
        %2760 = vmatprep.subr.bf16.mxu0 0
        %2761 = vmatpush1.bf16.xpose.msra.mxu0 0
        %2762 = vmatprep.subr.bf16.mxu0 0
        %2763 = vmatpush1.bf16.xpose.msra.mxu0 0
        %2764 = vmatprep.mubr.bf16.mxu0 0
        %2765 = vmatmul.mubr.bf16.gmra.mrb[0].mxu0 %v2727
        %v2766 = vpop.f32.mrb[0].mxu0
        %v2767 = vadd.f32 0.0, %v2766
        %v2768 = vpop.f32.mrb[0].mxu0
        %v2769 = vpop.f32.mrb[0].mxu0
        %v2770 = vpop.f32.mrb[0].mxu0
        %2771 = vdwg.mxu0
        %v2773 = vsel %vm1050, %v1030, 0
        %v2776 = vsel %vm1050, %v2216, 0
        %2778 = vmatprep.subr.bf16.mxu0 0
        %2779 = vmatpush1.bf16.xpose.msra.mxu0 %v2776
        %2780 = vmatprep.subr.bf16.mxu0 0
        %2781 = vmatpush1.bf16.xpose.msra.mxu0 0
        %2782 = vmatprep.subr.bf16.mxu0 0
        %2783 = vmatpush1.bf16.xpose.msra.mxu0 0
        %2784 = vmatprep.subr.bf16.mxu0 0
        %2785 = vmatpush1.bf16.xpose.msra.mxu0 0
        %2786 = vmatprep.subr.bf16.mxu0 0
        %2787 = vmatpush1.bf16.xpose.msra.mxu0 0
        %2788 = vmatprep.subr.bf16.mxu0 0
        %2789 = vmatpush1.bf16.xpose.msra.mxu0 0
        %2790 = vmatprep.subr.bf16.mxu0 0
        %2791 = vmatpush1.bf16.xpose.msra.mxu0 0
        %2792 = vmatprep.subr.bf16.mxu0 0
        %2793 = vmatpush1.bf16.xpose.msra.mxu0 0
        %2794 = vmatprep.subr.bf16.mxu0 0
        %2795 = vmatpush1.bf16.xpose.msra.mxu0 0
        %2796 = vmatprep.subr.bf16.mxu0 0
        %2797 = vmatpush1.bf16.xpose.msra.mxu0 0
        %2798 = vmatprep.subr.bf16.mxu0 0
        %2799 = vmatpush1.bf16.xpose.msra.mxu0 0
        %2800 = vmatprep.subr.bf16.mxu0 0
        %2801 = vmatpush1.bf16.xpose.msra.mxu0 0
        %2802 = vmatprep.subr.bf16.mxu0 0
        %2803 = vmatpush1.bf16.xpose.msra.mxu0 0
        %2804 = vmatprep.subr.bf16.mxu0 0
        %2805 = vmatpush1.bf16.xpose.msra.mxu0 0
        %2806 = vmatprep.subr.bf16.mxu0 0
        %2807 = vmatpush1.bf16.xpose.msra.mxu0 0
        %2808 = vmatprep.subr.bf16.mxu0 0
        %2809 = vmatpush1.bf16.xpose.msra.mxu0 0
        %2810 = vmatprep.mubr.bf16.mxu0 0
        %2811 = vmatmul.mubr.bf16.gmra.mrb[0].mxu0 %v2773
        %v2812 = vpop.f32.mrb[0].mxu0
        %v2813 = vadd.f32 0.0, %v2812
        %v2814 = vpop.f32.mrb[0].mxu0
        %v2815 = vpop.f32.mrb[0].mxu0
        %v2816 = vpop.f32.mrb[0].mxu0
        %2817 = vdwg.mxu0
        %v2819 = vsel %vm1050, %v1031, 0
        %v2822 = vsel %vm1050, %v2217, 0
        %2824 = vmatprep.subr.bf16.mxu0 0
        %2825 = vmatpush1.bf16.xpose.msra.mxu0 %v2822
        %2826 = vmatprep.subr.bf16.mxu0 0
        %2827 = vmatpush1.bf16.xpose.msra.mxu0 0
        %2828 = vmatprep.subr.bf16.mxu0 0
        %2829 = vmatpush1.bf16.xpose.msra.mxu0 0
        %2830 = vmatprep.subr.bf16.mxu0 0
        %2831 = vmatpush1.bf16.xpose.msra.mxu0 0
        %2832 = vmatprep.subr.bf16.mxu0 0
        %2833 = vmatpush1.bf16.xpose.msra.mxu0 0
        %2834 = vmatprep.subr.bf16.mxu0 0
        %2835 = vmatpush1.bf16.xpose.msra.mxu0 0
        %2836 = vmatprep.subr.bf16.mxu0 0
        %2837 = vmatpush1.bf16.xpose.msra.mxu0 0
        %2838 = vmatprep.subr.bf16.mxu0 0
        %2839 = vmatpush1.bf16.xpose.msra.mxu0 0
        %2840 = vmatprep.subr.bf16.mxu0 0
        %2841 = vmatpush1.bf16.xpose.msra.mxu0 0
        %2842 = vmatprep.subr.bf16.mxu0 0
        %2843 = vmatpush1.bf16.xpose.msra.mxu0 0
        %2844 = vmatprep.subr.bf16.mxu0 0
        %2845 = vmatpush1.bf16.xpose.msra.mxu0 0
        %2846 = vmatprep.subr.bf16.mxu0 0
        %2847 = vmatpush1.bf16.xpose.msra.mxu0 0
        %2848 = vmatprep.subr.bf16.mxu0 0
        %2849 = vmatpush1.bf16.xpose.msra.mxu0 0
        %2850 = vmatprep.subr.bf16.mxu0 0
        %2851 = vmatpush1.bf16.xpose.msra.mxu0 0
        %2852 = vmatprep.subr.bf16.mxu0 0
        %2853 = vmatpush1.bf16.xpose.msra.mxu0 0
        %2854 = vmatprep.subr.bf16.mxu0 0
        %2855 = vmatpush1.bf16.xpose.msra.mxu0 0
        %2856 = vmatprep.mubr.bf16.mxu0 0
        %2857 = vmatmul.mubr.bf16.gmra.mrb[0].mxu0 %v2819
        %v2858 = vpop.f32.mrb[0].mxu0
        %v2859 = vadd.f32 0.0, %v2858
        %v2860 = vpop.f32.mrb[0].mxu0
        %v2861 = vpop.f32.mrb[0].mxu0
        %v2862 = vpop.f32.mrb[0].mxu0
        %2863 = vdwg.mxu0
        %v2865 = vsel %vm1050, %v1032, 0
        %v2868 = vsel %vm1050, %v2218, 0
        %2870 = vmatprep.subr.bf16.mxu0 0
        %2871 = vmatpush1.bf16.xpose.msra.mxu0 %v2868
        %2872 = vmatprep.subr.bf16.mxu0 0
        %2873 = vmatpush1.bf16.xpose.msra.mxu0 0
        %2874 = vmatprep.subr.bf16.mxu0 0
        %2875 = vmatpush1.bf16.xpose.msra.mxu0 0
        %2876 = vmatprep.subr.bf16.mxu0 0
        %2877 = vmatpush1.bf16.xpose.msra.mxu0 0
        %2878 = vmatprep.subr.bf16.mxu0 0
        %2879 = vmatpush1.bf16.xpose.msra.mxu0 0
        %2880 = vmatprep.subr.bf16.mxu0 0
        %2881 = vmatpush1.bf16.xpose.msra.mxu0 0
        %2882 = vmatprep.subr.bf16.mxu0 0
        %2883 = vmatpush1.bf16.xpose.msra.mxu0 0
        %2884 = vmatprep.subr.bf16.mxu0 0
        %2885 = vmatpush1.bf16.xpose.msra.mxu0 0
        %2886 = vmatprep.subr.bf16.mxu0 0
        %2887 = vmatpush1.bf16.xpose.msra.mxu0 0
        %2888 = vmatprep.subr.bf16.mxu0 0
        %2889 = vmatpush1.bf16.xpose.msra.mxu0 0
        %2890 = vmatprep.subr.bf16.mxu0 0
        %2891 = vmatpush1.bf16.xpose.msra.mxu0 0
        %2892 = vmatprep.subr.bf16.mxu0 0
        %2893 = vmatpush1.bf16.xpose.msra.mxu0 0
        %2894 = vmatprep.subr.bf16.mxu0 0
        %2895 = vmatpush1.bf16.xpose.msra.mxu0 0
        %2896 = vmatprep.subr.bf16.mxu0 0
        %2897 = vmatpush1.bf16.xpose.msra.mxu0 0
        %2898 = vmatprep.subr.bf16.mxu0 0
        %2899 = vmatpush1.bf16.xpose.msra.mxu0 0
        %2900 = vmatprep.subr.bf16.mxu0 0
        %2901 = vmatpush1.bf16.xpose.msra.mxu0 0
        %2902 = vmatprep.mubr.bf16.mxu0 0
        %2903 = vmatmul.mubr.bf16.gmra.mrb[0].mxu0 %v2865
        %v2904 = vpop.f32.mrb[0].mxu0
        %v2905 = vadd.f32 0.0, %v2904
        %v2906 = vpop.f32.mrb[0].mxu0
        %v2907 = vpop.f32.mrb[0].mxu0
        %v2908 = vpop.f32.mrb[0].mxu0
        %2909 = vdwg.mxu0
        %v2911 = vsel %vm1050, %v1033, 0
        %v2914 = vsel %vm1050, %v2219, 0
        %2916 = vmatprep.subr.bf16.mxu0 0
        %2917 = vmatpush1.bf16.xpose.msra.mxu0 %v2914
        %2918 = vmatprep.subr.bf16.mxu0 0
        %2919 = vmatpush1.bf16.xpose.msra.mxu0 0
        %2920 = vmatprep.subr.bf16.mxu0 0
        %2921 = vmatpush1.bf16.xpose.msra.mxu0 0
        %2922 = vmatprep.subr.bf16.mxu0 0
        %2923 = vmatpush1.bf16.xpose.msra.mxu0 0
        %2924 = vmatprep.subr.bf16.mxu0 0
        %2925 = vmatpush1.bf16.xpose.msra.mxu0 0
        %2926 = vmatprep.subr.bf16.mxu0 0
        %2927 = vmatpush1.bf16.xpose.msra.mxu0 0
        %2928 = vmatprep.subr.bf16.mxu0 0
        %2929 = vmatpush1.bf16.xpose.msra.mxu0 0
        %2930 = vmatprep.subr.bf16.mxu0 0
        %2931 = vmatpush1.bf16.xpose.msra.mxu0 0
        %2932 = vmatprep.subr.bf16.mxu0 0
        %2933 = vmatpush1.bf16.xpose.msra.mxu0 0
        %2934 = vmatprep.subr.bf16.mxu0 0
        %2935 = vmatpush1.bf16.xpose.msra.mxu0 0
        %2936 = vmatprep.subr.bf16.mxu0 0
        %2937 = vmatpush1.bf16.xpose.msra.mxu0 0
        %2938 = vmatprep.subr.bf16.mxu0 0
        %2939 = vmatpush1.bf16.xpose.msra.mxu0 0
        %2940 = vmatprep.subr.bf16.mxu0 0
        %2941 = vmatpush1.bf16.xpose.msra.mxu0 0
        %2942 = vmatprep.subr.bf16.mxu0 0
        %2943 = vmatpush1.bf16.xpose.msra.mxu0 0
        %2944 = vmatprep.subr.bf16.mxu0 0
        %2945 = vmatpush1.bf16.xpose.msra.mxu0 0
        %2946 = vmatprep.subr.bf16.mxu0 0
        %2947 = vmatpush1.bf16.xpose.msra.mxu0 0
        %2948 = vmatprep.mubr.bf16.mxu0 0
        %2949 = vmatmul.mubr.bf16.gmra.mrb[0].mxu0 %v2911
        %v2950 = vpop.f32.mrb[0].mxu0
        %v2951 = vadd.f32 0.0, %v2950
        %v2952 = vpop.f32.mrb[0].mxu0
        %v2953 = vpop.f32.mrb[0].mxu0
        %v2954 = vpop.f32.mrb[0].mxu0
        %2955 = vdwg.mxu0
        %2956 = vxpose.xlu0.b32.start [1/16] %v2261, 128
        %2957 = vxpose.xlu0.b32.cont [2/16] %v2307, 128
        %2958 = vxpose.xlu0.b32.cont [3/16] %v2353, 128
        %2959 = vxpose.xlu0.b32.cont [4/16] %v2399, 128
        %2960 = vxpose.xlu0.b32.cont [5/16] %v2445, 128
        %2961 = vxpose.xlu0.b32.cont [6/16] %v2491, 128
        %2962 = vxpose.xlu0.b32.cont [7/16] %v2537, 128
        %2963 = vxpose.xlu0.b32.cont [8/16] %v2583, 128
        %2964 = vxpose.xlu0.b32.cont [9/16] %v2629, 128
        %2965 = vxpose.xlu0.b32.cont [10/16] %v2675, 128
        %2966 = vxpose.xlu0.b32.cont [11/16] %v2721, 128
        %2967 = vxpose.xlu0.b32.cont [12/16] %v2767, 128
        %2968 = vxpose.xlu0.b32.cont [13/16] %v2813, 128
        %2969 = vxpose.xlu0.b32.cont [14/16] %v2859, 128
        %2970 = vxpose.xlu0.b32.cont [15/16] %v2905, 128
        %2971 = vxpose.xlu0.b32.end [16/16] %v2951, 128
        %v2972 = vpop.trf.xlu0
        %v2973 = vpop.trf.xlu0
        %v2974 = vpop.trf.xlu0
        %v2975 = vpop.trf.xlu0
        %v2976 = vpop.trf.xlu0
        %v2977 = vpop.trf.xlu0
        %v2978 = vpop.trf.xlu0
        %v2979 = vpop.trf.xlu0
        %v2980 = vpop.trf.xlu0
        %v2981 = vpop.trf.xlu0
        %v2982 = vpop.trf.xlu0
        %v2983 = vpop.trf.xlu0
        %v2984 = vpop.trf.xlu0
        %v2985 = vpop.trf.xlu0
        %v2986 = vpop.trf.xlu0
        %v2987 = vpop.trf.xlu0
        %v2988 = vpack.c.bf16 %v2972, %v2972
        %v2989 = vld [vmem:[#allocation10] sm:$0xf]
        %v2990 = vld [vmem:[#allocation10 + $0x4] sm:$0xf]
        %v2991 = vld [vmem:[#allocation10 + $0x8] sm:$0xf]
        %v2992 = vld [vmem:[#allocation10 + $0xc] sm:$0xf]
        %v2993 = vld [vmem:[#allocation10 + $0x10] sm:$0xf]
        %v2994 = vld [vmem:[#allocation10 + $0x14] sm:$0xf]
        %v2995 = vld [vmem:[#allocation10 + $0x18] sm:$0xf]
        %v2996 = vld [vmem:[#allocation10 + $0x1c] sm:$0xf]
        %v2997 = vld [vmem:[#allocation10 + $0x20] sm:$0xf]
        %v2998 = vld [vmem:[#allocation10 + $0x24] sm:$0xf]
        %v2999 = vld [vmem:[#allocation10 + $0x28] sm:$0xf]
        %v3000 = vld [vmem:[#allocation10 + $0x2c] sm:$0xf]
        %v3001 = vld [vmem:[#allocation10 + $0x30] sm:$0xf]
        %v3002 = vld [vmem:[#allocation10 + $0x34] sm:$0xf]
        %v3003 = vld [vmem:[#allocation10 + $0x38] sm:$0xf]
        %v3004 = vld [vmem:[#allocation10 + $0x3c] sm:$0xf]
        %v3005 = vld [vmem:[%s5] sm:$0x1]
        %v3007 = vlaneseq
        %v3008 = vshrl.u32 %v3007, 7
        %v3009 = vsub.s32 0, %v3008
        %v3010 = vrot.slane %v3005, %v3009
        %v3028 = vunpack.c.l.b16 %v2989
        %v3029 = vunpack.c.l.b16 %v2990
        %v3030 = vunpack.c.l.b16 %v2991
        %v3031 = vunpack.c.l.b16 %v2992
        %v3032 = vunpack.c.l.b16 %v2993
        %v3033 = vunpack.c.l.b16 %v2994
        %v3034 = vunpack.c.l.b16 %v2995
        %v3035 = vunpack.c.l.b16 %v2996
        %v3036 = vunpack.c.l.b16 %v2997
        %v3037 = vunpack.c.l.b16 %v2998
        %v3038 = vunpack.c.l.b16 %v2999
        %v3039 = vunpack.c.l.b16 %v3000
        %v3040 = vunpack.c.l.b16 %v3001
        %v3041 = vunpack.c.l.b16 %v3002
        %v3042 = vunpack.c.l.b16 %v3003
        %v3043 = vunpack.c.l.b16 %v3004
        %v3044 = vpack.c.b16 %v3029, %v3028
        %v3045 = vpack.c.b16 %v3031, %v3030
        %v3046 = vpack.c.b16 %v3033, %v3032
        %v3047 = vpack.c.b16 %v3035, %v3034
        %v3048 = vpack.c.b16 %v3037, %v3036
        %v3049 = vpack.c.b16 %v3039, %v3038
        %v3050 = vpack.c.b16 %v3041, %v3040
        %v3051 = vpack.c.b16 %v3043, %v3042
        %3060 = vmatprep.subr.bf16.mxu0 0
        %3061 = vmatpush1.bf16.msra.mxu0 %v3044
        %3062 = vmatprep.subr.bf16.mxu0 0
        %3063 = vmatpush1.bf16.msra.mxu0 %v3045
        %3064 = vmatprep.subr.bf16.mxu0 0
        %3065 = vmatpush1.bf16.msra.mxu0 %v3046
        %3066 = vmatprep.subr.bf16.mxu0 0
        %3067 = vmatpush1.bf16.msra.mxu0 %v3047
        %3068 = vmatprep.subr.bf16.mxu0 0
        %3069 = vmatpush1.bf16.msra.mxu0 %v3048
        %3070 = vmatprep.subr.bf16.mxu0 0
        %3071 = vmatpush1.bf16.msra.mxu0 %v3049
        %3072 = vmatprep.subr.bf16.mxu0 0
        %3073 = vmatpush1.bf16.msra.mxu0 %v3050
        %3074 = vmatprep.subr.bf16.mxu0 0
        %3075 = vmatpush1.bf16.msra.mxu0 %v3051
        %3076 = vmatprep.subr.bf16.mxu0 0
        %3077 = vmatpush1.bf16.msra.mxu0 0
        %3078 = vmatprep.subr.bf16.mxu0 0
        %3079 = vmatpush1.bf16.msra.mxu0 0
        %3080 = vmatprep.subr.bf16.mxu0 0
        %3081 = vmatpush1.bf16.msra.mxu0 0
        %3082 = vmatprep.subr.bf16.mxu0 0
        %3083 = vmatpush1.bf16.msra.mxu0 0
        %3084 = vmatprep.subr.bf16.mxu0 0
        %3085 = vmatpush1.bf16.msra.mxu0 0
        %3086 = vmatprep.subr.bf16.mxu0 0
        %3087 = vmatpush1.bf16.msra.mxu0 0
        %3088 = vmatprep.subr.bf16.mxu0 0
        %3089 = vmatpush1.bf16.msra.mxu0 0
        %3090 = vmatprep.subr.bf16.mxu0 0
        %3091 = vmatpush1.bf16.msra.mxu0 0
        %3092 = vmatprep.mubr.bf16.mxu0 0
        %3093 = vmatmul.mubr.bf16.gmra.mrb[0].mxu0 %v2988
        %v3094 = vpop.f32.mrb[0].mxu0
        %v3095 = vadd.f32 %v3010, %v3094
        %v3096 = vpop.f32.mrb[0].mxu0
        %v3097 = vpop.f32.mrb[0].mxu0
        %v3098 = vpop.f32.mrb[0].mxu0
        %3099 = vdwg.mxu0
        %v3100 = vadd.f32 %v3095, %v571
        %v3101 = vld [vmem:[%s6] sm:$0x1]
        %v3102 = vld [vmem:[%s7] sm:$0x1]
        %v3103 = vmul.f32 %v3100, %v577
        %3104 = vadd.xlane.f32.xlu0 %v3103
        %v3105 = vpop.xlane.xlu0 %3104
        %v3106 = vmul.f32 %v3105, 0.020833334
        %v3107 = vsub.f32 %v3103, %v3106
        %v3108 = vmul.f32 %v3107, %v577
        %v3109 = vmul.f32 %v3108, %v3108
        %3110 = vadd.xlane.f32.xlu0 %v3109
        %v3111 = vpop.xlane.xlu0 %3110
        %v3112 = vmul.f32 %v3111, 0.020833334
        %v3113 = vadd.f32 %v3112, 1e-05
        %v3114 = vrsqrt.pop %v3113
        %v3115 = vmul.f32 %v3108, %v3114
        %v3117 = vlaneseq
        %v3118 = vshrl.u32 %v3117, 7
        %v3119 = vsub.s32 0, %v3118
        %v3120 = vrot.slane %v3101, %v3119
        %v3122 = vmul.f32 %v3115, %v3120
        %v3124 = vlaneseq
        %v3125 = vshrl.u32 %v3124, 7
        %v3126 = vsub.s32 0, %v3125
        %v3127 = vrot.slane %v3102, %v3126
        %v3129 = vadd.f32 %v3122, %v3127
        %v3130 = vpack.c.bf16 %v3129, %v3129
        %v3131 = vld [vmem:[#allocation11] sm:$0xff]
        %v3132 = vld [vmem:[#allocation11 + $0x8] sm:$0xff]
        %v3133 = vld [vmem:[#allocation11 + $0x10] sm:$0xff]
        %v3134 = vld [vmem:[#allocation11 + $0x18] sm:$0xff]
        %v3135 = vld [vmem:[#allocation11 + $0x20] sm:$0xff]
        %v3136 = vld [vmem:[#allocation11 + $0x28] sm:$0xff]
        %v3137 = vld [vmem:[#allocation11 + $0x30] sm:$0xff]
        %v3138 = vld [vmem:[#allocation11 + $0x38] sm:$0xff]
        %v3139 = vld [vmem:[#allocation11 + $0x40] sm:$0xff]
        %v3140 = vld [vmem:[#allocation11 + $0x48] sm:$0xff]
        %v3141 = vld [vmem:[#allocation11 + $0x50] sm:$0xff]
        %v3142 = vld [vmem:[#allocation11 + $0x58] sm:$0xff]
        %v3143 = vld [vmem:[#allocation11 + $0x60] sm:$0xff]
        %v3144 = vld [vmem:[#allocation11 + $0x68] sm:$0xff]
        %v3145 = vld [vmem:[#allocation11 + $0x70] sm:$0xff]
        %v3146 = vld [vmem:[#allocation11 + $0x78] sm:$0xff]
        %v3147 = vld [vmem:[%s9] sm:$0x3]
        %v3149 = vlaneseq
        %v3150 = vshrl.u32 %v3149, 7
        %v3151 = vsub.s32 0, %v3150
        %v3152 = vrot.slane %v3147, %v3151
        %v3153 = vlaneseq
        %v3154 = vshrl.u32 %v3153, 7
        %v3155 = vsub.s32 1, %v3154
        %v3156 = vrot.slane %v3147, %v3155
        %v3175 = vunpack.c.l.b16 %v3131
        %v3176 = vunpack.c.h.b16 %v3131
        %v3177 = vunpack.c.l.b16 %v3132
        %v3178 = vunpack.c.h.b16 %v3132
        %v3179 = vunpack.c.l.b16 %v3133
        %v3180 = vunpack.c.h.b16 %v3133
        %v3181 = vunpack.c.l.b16 %v3134
        %v3182 = vunpack.c.h.b16 %v3134
        %v3183 = vunpack.c.l.b16 %v3135
        %v3184 = vunpack.c.h.b16 %v3135
        %v3185 = vunpack.c.l.b16 %v3136
        %v3186 = vunpack.c.h.b16 %v3136
        %v3187 = vunpack.c.l.b16 %v3137
        %v3188 = vunpack.c.h.b16 %v3137
        %v3189 = vunpack.c.l.b16 %v3138
        %v3190 = vunpack.c.h.b16 %v3138
        %v3191 = vunpack.c.l.b16 %v3139
        %v3192 = vunpack.c.h.b16 %v3139
        %v3193 = vunpack.c.l.b16 %v3140
        %v3194 = vunpack.c.h.b16 %v3140
        %v3195 = vunpack.c.l.b16 %v3141
        %v3196 = vunpack.c.h.b16 %v3141
        %v3197 = vunpack.c.l.b16 %v3142
        %v3198 = vunpack.c.h.b16 %v3142
        %v3199 = vunpack.c.l.b16 %v3143
        %v3200 = vunpack.c.h.b16 %v3143
        %v3201 = vunpack.c.l.b16 %v3144
        %v3202 = vunpack.c.h.b16 %v3144
        %v3203 = vunpack.c.l.b16 %v3145
        %v3204 = vunpack.c.h.b16 %v3145
        %v3205 = vunpack.c.l.b16 %v3146
        %v3206 = vunpack.c.h.b16 %v3146
        %v3207 = vpack.c.b16 %v3177, %v3175
        %v3208 = vpack.c.b16 %v3178, %v3176
        %v3209 = vpack.c.b16 %v3181, %v3179
        %v3210 = vpack.c.b16 %v3182, %v3180
        %v3211 = vpack.c.b16 %v3185, %v3183
        %v3212 = vpack.c.b16 %v3186, %v3184
        %v3213 = vpack.c.b16 %v3189, %v3187
        %v3214 = vpack.c.b16 %v3190, %v3188
        %v3215 = vpack.c.b16 %v3193, %v3191
        %v3216 = vpack.c.b16 %v3194, %v3192
        %v3217 = vpack.c.b16 %v3197, %v3195
        %v3218 = vpack.c.b16 %v3198, %v3196
        %v3219 = vpack.c.b16 %v3201, %v3199
        %v3220 = vpack.c.b16 %v3202, %v3200
        %v3221 = vpack.c.b16 %v3205, %v3203
        %v3222 = vpack.c.b16 %v3206, %v3204
        %3239 = vmatprep.subr.bf16.mxu0 %v3208
        %3240 = vmatpush1.bf16.msra.mxu0 %v3207
        %3241 = vmatprep.subr.bf16.mxu0 %v3210
        %3242 = vmatpush1.bf16.msra.mxu0 %v3209
        %3243 = vmatprep.subr.bf16.mxu0 %v3212
        %3244 = vmatpush1.bf16.msra.mxu0 %v3211
        %3245 = vmatprep.subr.bf16.mxu0 %v3214
        %3246 = vmatpush1.bf16.msra.mxu0 %v3213
        %3247 = vmatprep.subr.bf16.mxu0 %v3216
        %3248 = vmatpush1.bf16.msra.mxu0 %v3215
        %3249 = vmatprep.subr.bf16.mxu0 %v3218
        %3250 = vmatpush1.bf16.msra.mxu0 %v3217
        %3251 = vmatprep.subr.bf16.mxu0 %v3220
        %3252 = vmatpush1.bf16.msra.mxu0 %v3219
        %3253 = vmatprep.subr.bf16.mxu0 %v3222
        %3254 = vmatpush1.bf16.msra.mxu0 %v3221
        %3255 = vmatprep.subr.bf16.mxu0 0
        %3256 = vmatpush1.bf16.msra.mxu0 0
        %3257 = vmatprep.subr.bf16.mxu0 0
        %3258 = vmatpush1.bf16.msra.mxu0 0
        %3259 = vmatprep.subr.bf16.mxu0 0
        %3260 = vmatpush1.bf16.msra.mxu0 0
        %3261 = vmatprep.subr.bf16.mxu0 0
        %3262 = vmatpush1.bf16.msra.mxu0 0
        %3263 = vmatprep.subr.bf16.mxu0 0
        %3264 = vmatpush1.bf16.msra.mxu0 0
        %3265 = vmatprep.subr.bf16.mxu0 0
        %3266 = vmatpush1.bf16.msra.mxu0 0
        %3267 = vmatprep.subr.bf16.mxu0 0
        %3268 = vmatpush1.bf16.msra.mxu0 0
        %3269 = vmatprep.subr.bf16.mxu0 0
        %3270 = vmatpush1.bf16.msra.mxu0 0
        %3271 = vmatprep.mubr.bf16.mxu0 0
        %3272 = vmatmul.mubr.bf16.gmra.mrb[0].mxu0 %v3130
        %v3273 = vpop.f32.mrb[0].mxu0
        %v3274 = vadd.f32 %v3152, %v3273
        %v3275 = vpop.f32.mrb[0].mxu0
        %v3276 = vadd.f32 %v3156, %v3275
        %v3277 = vpop.f32.mrb[0].mxu0
        %v3278 = vpop.f32.mrb[0].mxu0
        %3279 = vdwg.mxu0
        %v3280 = vmax.f32 %v3274, 0.0
        %v3281 = vmax.f32 %v3276, 0.0
        %v3282 = vpack.c.bf16 %v3280, %v3280
        %v3283 = vpack.c.bf16 %v3281, %v3281
        %v3284 = vld [vmem:[#allocation13] sm:$0xf]
        %v3285 = vld [vmem:[#allocation13 + $0x4] sm:$0xf]
        %v3286 = vld [vmem:[#allocation13 + $0x8] sm:$0xf]
        %v3287 = vld [vmem:[#allocation13 + $0xc] sm:$0xf]
        %v3288 = vld [vmem:[#allocation13 + $0x10] sm:$0xf]
        %v3289 = vld [vmem:[#allocation13 + $0x14] sm:$0xf]
        %v3290 = vld [vmem:[#allocation13 + $0x18] sm:$0xf]
        %v3291 = vld [vmem:[#allocation13 + $0x1c] sm:$0xf]
        %v3292 = vld [vmem:[#allocation13 + $0x20] sm:$0xf]
        %v3293 = vld [vmem:[#allocation13 + $0x24] sm:$0xf]
        %v3294 = vld [vmem:[#allocation13 + $0x28] sm:$0xf]
        %v3295 = vld [vmem:[#allocation13 + $0x2c] sm:$0xf]
        %v3296 = vld [vmem:[#allocation13 + $0x30] sm:$0xf]
        %v3297 = vld [vmem:[#allocation13 + $0x34] sm:$0xf]
        %v3298 = vld [vmem:[#allocation13 + $0x38] sm:$0xf]
        %v3299 = vld [vmem:[#allocation13 + $0x3c] sm:$0xf]
        %v3300 = vld [vmem:[#allocation13 + $0x40] sm:$0xf]
        %v3301 = vld [vmem:[#allocation13 + $0x44] sm:$0xf]
        %v3302 = vld [vmem:[#allocation13 + $0x48] sm:$0xf]
        %v3303 = vld [vmem:[#allocation13 + $0x4c] sm:$0xf]
        %v3304 = vld [vmem:[#allocation13 + $0x50] sm:$0xf]
        %v3305 = vld [vmem:[#allocation13 + $0x54] sm:$0xf]
        %v3306 = vld [vmem:[#allocation13 + $0x58] sm:$0xf]
        %v3307 = vld [vmem:[#allocation13 + $0x5c] sm:$0xf]
        %v3308 = vld [vmem:[#allocation13 + $0x60] sm:$0xf]
        %v3309 = vld [vmem:[#allocation13 + $0x64] sm:$0xf]
        %v3310 = vld [vmem:[#allocation13 + $0x68] sm:$0xf]
        %v3311 = vld [vmem:[#allocation13 + $0x6c] sm:$0xf]
        %v3312 = vld [vmem:[#allocation13 + $0x70] sm:$0xf]
        %v3313 = vld [vmem:[#allocation13 + $0x74] sm:$0xf]
        %v3314 = vld [vmem:[#allocation13 + $0x78] sm:$0xf]
        %v3315 = vld [vmem:[#allocation13 + $0x7c] sm:$0xf]
        %v3316 = vld [vmem:[%s11] sm:$0x1]
        %v3318 = vlaneseq
        %v3319 = vshrl.u32 %v3318, 7
        %v3320 = vsub.s32 0, %v3319
        %v3321 = vrot.slane %v3316, %v3320
        %v3355 = vunpack.c.l.b16 %v3284
        %v3356 = vunpack.c.l.b16 %v3285
        %v3357 = vunpack.c.l.b16 %v3286
        %v3358 = vunpack.c.l.b16 %v3287
        %v3359 = vunpack.c.l.b16 %v3288
        %v3360 = vunpack.c.l.b16 %v3289
        %v3361 = vunpack.c.l.b16 %v3290
        %v3362 = vunpack.c.l.b16 %v3291
        %v3363 = vunpack.c.l.b16 %v3292
        %v3364 = vunpack.c.l.b16 %v3293
        %v3365 = vunpack.c.l.b16 %v3294
        %v3366 = vunpack.c.l.b16 %v3295
        %v3367 = vunpack.c.l.b16 %v3296
        %v3368 = vunpack.c.l.b16 %v3297
        %v3369 = vunpack.c.l.b16 %v3298
        %v3370 = vunpack.c.l.b16 %v3299
        %v3371 = vunpack.c.l.b16 %v3300
        %v3372 = vunpack.c.l.b16 %v3301
        %v3373 = vunpack.c.l.b16 %v3302
        %v3374 = vunpack.c.l.b16 %v3303
        %v3375 = vunpack.c.l.b16 %v3304
        %v3376 = vunpack.c.l.b16 %v3305
        %v3377 = vunpack.c.l.b16 %v3306
        %v3378 = vunpack.c.l.b16 %v3307
        %v3379 = vunpack.c.l.b16 %v3308
        %v3380 = vunpack.c.l.b16 %v3309
        %v3381 = vunpack.c.l.b16 %v3310
        %v3382 = vunpack.c.l.b16 %v3311
        %v3383 = vunpack.c.l.b16 %v3312
        %v3384 = vunpack.c.l.b16 %v3313
        %v3385 = vunpack.c.l.b16 %v3314
        %v3386 = vunpack.c.l.b16 %v3315
        %v3387 = vpack.c.b16 %v3356, %v3355
        %v3388 = vpack.c.b16 %v3358, %v3357
        %v3389 = vpack.c.b16 %v3360, %v3359
        %v3390 = vpack.c.b16 %v3362, %v3361
        %v3391 = vpack.c.b16 %v3364, %v3363
        %v3392 = vpack.c.b16 %v3366, %v3365
        %v3393 = vpack.c.b16 %v3368, %v3367
        %v3394 = vpack.c.b16 %v3370, %v3369
        %v3395 = vpack.c.b16 %v3372, %v3371
        %v3396 = vpack.c.b16 %v3374, %v3373
        %v3397 = vpack.c.b16 %v3376, %v3375
        %v3398 = vpack.c.b16 %v3378, %v3377
        %v3399 = vpack.c.b16 %v3380, %v3379
        %v3400 = vpack.c.b16 %v3382, %v3381
        %v3401 = vpack.c.b16 %v3384, %v3383
        %v3402 = vpack.c.b16 %v3386, %v3385
        %3419 = vmatprep.subr.bf16.mxu0 0
        %3420 = vmatpush1.bf16.msra.mxu0 %v3387
        %3421 = vmatprep.subr.bf16.mxu0 0
        %3422 = vmatpush1.bf16.msra.mxu0 %v3388
        %3423 = vmatprep.subr.bf16.mxu0 0
        %3424 = vmatpush1.bf16.msra.mxu0 %v3389
        %3425 = vmatprep.subr.bf16.mxu0 0
        %3426 = vmatpush1.bf16.msra.mxu0 %v3390
        %3427 = vmatprep.subr.bf16.mxu0 0
        %3428 = vmatpush1.bf16.msra.mxu0 %v3391
        %3429 = vmatprep.subr.bf16.mxu0 0
        %3430 = vmatpush1.bf16.msra.mxu0 %v3392
        %3431 = vmatprep.subr.bf16.mxu0 0
        %3432 = vmatpush1.bf16.msra.mxu0 %v3393
        %3433 = vmatprep.subr.bf16.mxu0 0
        %3434 = vmatpush1.bf16.msra.mxu0 %v3394
        %3435 = vmatprep.subr.bf16.mxu0 0
        %3436 = vmatpush1.bf16.msra.mxu0 %v3395
        %3437 = vmatprep.subr.bf16.mxu0 0
        %3438 = vmatpush1.bf16.msra.mxu0 %v3396
        %3439 = vmatprep.subr.bf16.mxu0 0
        %3440 = vmatpush1.bf16.msra.mxu0 %v3397
        %3441 = vmatprep.subr.bf16.mxu0 0
        %3442 = vmatpush1.bf16.msra.mxu0 %v3398
        %3443 = vmatprep.subr.bf16.mxu0 0
        %3444 = vmatpush1.bf16.msra.mxu0 %v3399
        %3445 = vmatprep.subr.bf16.mxu0 0
        %3446 = vmatpush1.bf16.msra.mxu0 %v3400
        %3447 = vmatprep.subr.bf16.mxu0 0
        %3448 = vmatpush1.bf16.msra.mxu0 %v3401
        %3449 = vmatprep.subr.bf16.mxu0 0
        %3450 = vmatpush1.bf16.msra.mxu0 %v3402
        %3451 = vmatprep.mubr.bf16.mxu0 %v3283
        %3452 = vmatmul.mubr.bf16.gmra.mrb[0].mxu0 %v3282
        %v3453 = vpop.f32.mrb[0].mxu0
        %v3454 = vadd.f32 %v3321, %v3453
        %v3455 = vpop.f32.mrb[0].mxu0
        %v3456 = vpop.f32.mrb[0].mxu0
        %v3457 = vpop.f32.mrb[0].mxu0
        %3458 = vdwg.mxu0
        %v3459 = vadd.f32 %v3454, %v3129
        %v3460 = vld [vmem:[%s12] sm:$0x1]
        %v3461 = vld [vmem:[%s13] sm:$0x1]
        %v3462 = vmul.f32 %v3459, %v577
        %3463 = vadd.xlane.f32.xlu0 %v3462
        %v3464 = vpop.xlane.xlu0 %3463
        %v3465 = vmul.f32 %v3464, 0.020833334
        %v3466 = vsub.f32 %v3462, %v3465
        %v3467 = vmul.f32 %v3466, %v577
        %v3468 = vmul.f32 %v3467, %v3467
        %3469 = vadd.xlane.f32.xlu0 %v3468
        %v3470 = vpop.xlane.xlu0 %3469
        %v3471 = vmul.f32 %v3470, 0.020833334
        %v3472 = vadd.f32 %v3471, 1e-05
        %v3473 = vrsqrt.pop %v3472
        %v3474 = vmul.f32 %v3467, %v3473
        %v3476 = vlaneseq
        %v3477 = vshrl.u32 %v3476, 7
        %v3478 = vsub.s32 0, %v3477
        %v3479 = vrot.slane %v3460, %v3478
        %v3481 = vmul.f32 %v3474, %v3479
        %v3483 = vlaneseq
        %v3484 = vshrl.u32 %v3483, 7
        %v3485 = vsub.s32 0, %v3484
        %v3486 = vrot.slane %v3461, %v3485
        %v3488 = vadd.f32 %v3481, %v3486
        %3489 = vst [vmem:[%s569] sm:$0xff] %v3488
        %s3490 = sand.u32 %s341, 1
        %s3491 = scalar_lea.sflag [#allocation4], %s3490
        %s3492 = sand.u32 %s341, 1
        %s3493 = smul.addr %s3492, 8
        %s3494 = scalar_lea.vmem [#allocation14], %s3493
        // Predicated region
        $region105: #{tpu_custom_call.1} parent=75 // pred_check
          %p3495 = pneg %p351
        $region106: #{tpu_custom_call.1} parent=75 // pred_check_branch
          %3497 = sbr.rel (%p3495) target = $region108
        $region107: #{tpu_custom_call.1} parent=75 // pred_region
          %s3499 = ssub.s32 128, 128
          %3500 = vsyncadd %s3491, %s3499
          %s3501 = smul.addr %s34, 128
          %s3502 = scalar_lea.hbm %s14, %s3501
          %s3504 = sshll.u32 %s3494, 4
          %s3505 = int_to_ptr.vmem [resolvable:$true] %s3504
          %3507 = dma.vmem_to_hbm [thread:$0]  %s3505, 128, %s3502, %s3491
        $region108: #{tpu_custom_call.1} parent=75 // pred_fallthru
          _
      $region76: #{tpu_custom_call.1} parent=5 // pred_fallthru
        _
      %p3508 = scmp.le.s32.totalorder 2, %s29
      // Predicated region
      $region109: #{tpu_custom_call.1} parent=5 // pred_check
        %p3509 = pneg %p3508
      $region110: #{tpu_custom_call.1} parent=5 // pred_check_branch
        %3511 = sbr.rel (%p3509) target = $region112
      $region111: #{tpu_custom_call.1} parent=5 // pred_region
        %s3512 = ssub.s32 %s29, 2
        // Predicated region
        $region113: #{tpu_custom_call.1} parent=111 // pred_check
          %p3513 = pneg %p357
        $region114: #{tpu_custom_call.1} parent=111 // pred_check_branch
          %3515 = sbr.rel (%p3513) target = $region116
        $region115: #{tpu_custom_call.1} parent=111 // pred_region
          %s3516 = sand.u32 %s342, 1
          %s3517 = scalar_lea.sflag [#allocation4], %s3516
          %s3518 = sand.u32 %s342, 1
          %s3519 = smul.addr %s3518, 8
          %s3520 = scalar_lea.vmem [#allocation14], %s3519
          %3521 = dma.done %s3517, 128
        $region116: #{tpu_custom_call.1} parent=111 // pred_fallthru
          _
      $region112: #{tpu_custom_call.1} parent=5 // pred_fallthru
        _
    $region6: #{tpu_custom_call.1} parent=1 // loop_footer
      %s33 = sadd.s32 1, %s29
    $region7: #{tpu_custom_call.1} parent=1 // loop_footer_branch
      %28 = sbr.rel target = $region3
    $region8: #{tpu_custom_call.1} parent=1 // loop_exit
      _
    %3522 = vsyncpa [#allocation3], 1
    %s3523 = scalar_lea.sflag [#allocation3], 1
    %3524 = vsyncpa %s3523, 1
    %3525 = vsyncpa [#allocation6], 1
    %3526 = vsyncpa [#allocation9], 1
    %3527 = vsyncpa [#allocation12], 1
    %3528 = vsyncpa [#allocation4], 1
    %s3529 = scalar_lea.sflag [#allocation4], 1
    %3530 = vsyncpa %s3529, 1

</llo_original>
